<compile_context>
chip_gen: v7x
topology: tpu7x:2x2x1
jax: 0.10.0
libtpu: 0.0.40
codegen_flags: <defaults>
</compile_context>

<pallas_src>
import functools
import math

import jax
import jax.numpy as jnp
from jax.experimental import pallas as pl
from jax.experimental.pallas import tpu as pltpu

LN_EPS = 1e-5


def _layernorm(x, gamma, beta):
    # x: (L, D) f32; gamma/beta: (1, D) f32
    mu = jnp.mean(x, axis=-1, keepdims=True)
    var = jnp.mean((x - mu) ** 2, axis=-1, keepdims=True)
    return (x - mu) * jax.lax.rsqrt(var + LN_EPS) * gamma + beta


def _residual_block_kernel(
    x_ref,                                   # (L, D)      f32
    ln1_g_ref, ln1_b_ref,                    # (1, D)      f32
    wqkv_ref, bqkv_ref,                      # (D, 3D) bf16 / (1, 3D) f32
    wo_ref, bo_ref,                          # (D, D)  bf16 / (1, D)  f32
    ln2_g_ref, ln2_b_ref,                    # (1, D)      f32
    wfc_ref, bfc_ref,                        # (D, 4D) bf16 / (1, 4D) f32
    wpr_ref, bpr_ref,                        # (4D, D) bf16 / (1, D)  f32
    o_ref,                                   # (L, D)      f32
    *, n_head: int, gelu_bf16: bool,
):
    x = x_ref[...].astype(jnp.float32)                        # (L, D)
    L, D = x.shape
    hd = D // n_head
    scale = 1.0 / math.sqrt(hd)

    # ---- attention branch: LN1 -> fused full-width QKV -> per-head SDPA -> out proj
    y = _layernorm(x, ln1_g_ref[...], ln1_b_ref[...]).astype(jnp.bfloat16)

    # Single full-width matmul; [Q | K | V] blocks are each D lanes wide.
    qkv = jnp.dot(y, wqkv_ref[...], preferred_element_type=jnp.float32)
    qkv = qkv + bqkv_ref[...]                                  # (L, 3D) f32

    # D-aligned Q/K/V slices (128-lane aligned at real model sizes).
    q = (qkv[:, :D] * scale).astype(jnp.bfloat16)
    k = qkv[:, D:2 * D].astype(jnp.bfloat16)
    v = qkv[:, 2 * D:].astype(jnp.bfloat16)

    # Per-head attention (static unrolled loop of small 2-D MXU matmuls).
    # Head outputs are concatenated once into an (L, D) slab so the output
    # projection is a single full-width contraction (no (H, L, D) f32 temp).
    av_heads = []
    for h in range(n_head):
        lo, hi = h * hd, (h + 1) * hd
        qh, kh, vh = q[:, lo:hi], k[:, lo:hi], v[:, lo:hi]
        s = jnp.dot(qh, kh.T, preferred_element_type=jnp.float32)   # (L, L)
        s = s - jnp.max(s, axis=-1, keepdims=True)
        p = jnp.exp(s)
        p = p * pl.reciprocal(jnp.sum(p, axis=-1, keepdims=True), approx=True)
        av_heads.append(jnp.dot(p.astype(jnp.bfloat16), vh,
                                preferred_element_type=jnp.float32))  # (L, hd)
    a = jnp.concatenate(av_heads, axis=-1).astype(jnp.bfloat16)      # (L, D)

    attn = jnp.dot(a, wo_ref[...], preferred_element_type=jnp.float32) + bo_ref[...]
    x1 = x + attn

    # ---- MLP branch: LN2 -> c_fc -> QuickGELU -> c_proj
    z = _layernorm(x1, ln2_g_ref[...], ln2_b_ref[...]).astype(jnp.bfloat16)
    h_act = jnp.dot(z, wfc_ref[...], preferred_element_type=jnp.float32) + bfc_ref[...]
    if gelu_bf16:
        # v6e/v7x only: bf16 VPU/EUP halves the (L, 4D) slab traffic.
        hb = h_act.astype(jnp.bfloat16)
        hb = hb * jax.nn.sigmoid(1.702 * hb)
    else:
        # v5e-safe f32 elementwise path (default).
        hb = (h_act * jax.nn.sigmoid(1.702 * h_act)).astype(jnp.bfloat16)
    m = jnp.dot(hb, wpr_ref[...], preferred_element_type=jnp.float32) + bpr_ref[...]

    o_ref[...] = (x1 + m).astype(o_ref.dtype)


def _vmem_limit_bytes():
    """Generation-aware VMEM budget: ~3/4 of physical, capped, with headroom."""
    cap = 128 * 1024 * 1024
    try:
        info = pltpu.get_tpu_info()
        cap = int(getattr(info, "vmem_capacity_bytes", cap))
    except Exception:
        pass
    return max(32 * 1024 * 1024, min(cap * 3 // 4, 100 * 1024 * 1024))


def _weight_spec(a, single_buffer):
    idx = lambda b: (0,) * a.ndim
    if single_buffer:
        # Constant index map -> revisited every step; one buffer is enough.
        return pl.BlockSpec(a.shape, idx, pipeline_mode=pl.Buffered(1))
    return pl.BlockSpec(a.shape, idx)


def _run_block(x_nld, prepared, n_head, *, single_buffer_weights, gelu_bf16):
    N, L, D = x_nld.shape
    (ln1_g, ln1_b, wqkv, bqkv, wo, bo,
     ln2_g, ln2_b, wfc, bfc, wpr, bpr) = prepared
    ws = lambda arr: _weight_spec(arr, single_buffer_weights)

    return pl.pallas_call(
        functools.partial(_residual_block_kernel, n_head=n_head,
                          gelu_bf16=gelu_bf16),
        out_shape=jax.ShapeDtypeStruct((N, L, D), x_nld.dtype),
        grid_spec=pltpu.PrefetchScalarGridSpec(
            num_scalar_prefetch=0,
            grid=(N,),
            in_specs=[
                pl.BlockSpec((None, L, D), lambda b: (b, 0, 0)),   # x (squeezed)
                ws(ln1_g), ws(ln1_b),
                ws(wqkv), ws(bqkv),
                ws(wo), ws(bo),
                ws(ln2_g), ws(ln2_b),
                ws(wfc), ws(bfc),
                ws(wpr), ws(bpr),
            ],
            out_specs=pl.BlockSpec((None, L, D), lambda b: (b, 0, 0)),
        ),
        compiler_params=pltpu.CompilerParams(
            dimension_semantics=("parallel",),
            vmem_limit_bytes=_vmem_limit_bytes(),
        ),
    )(x_nld, ln1_g, ln1_b, wqkv, bqkv, wo, bo, ln2_g, ln2_b, wfc, bfc, wpr, bpr)


def residual_attention_block(x_lnd, prepared, n_head, *, gelu_bf16=False):
    """x_lnd: (L, N, D) like PyTorch's MultiheadAttention input.

    `prepared` must come from prepare_params() (one-time weight repack)."""
    x = jnp.transpose(x_lnd, (1, 0, 2))        # (N, L, D) batch-major for the grid
    try:
        out = _run_block(x, prepared, n_head,
                         single_buffer_weights=True, gelu_bf16=gelu_bf16)
    except Exception:
        # Fallback for JAX versions that reject pl.Buffered(1) on pallas_call
        # block specs: identical math, default (double) buffering of weights.
        out = _run_block(x, prepared, n_head,
                         single_buffer_weights=False, gelu_bf16=gelu_bf16)
    return jnp.transpose(out, (1, 0, 2))       # back to (L, N, D)


def prepare_params(params):
    """One-time repack of module parameters into the kernel's fused bf16 layout.

    Call once at parameter-load time, NOT per forward step — this is where the
    f32->bf16 casts and the [Q|K|V] concatenation happen."""
    (ln1_g, ln1_b, wq, wk, wv, bq, bk, bv, wo, bo,
     ln2_g, ln2_b, wfc, bfc, wpr, bpr) = params
    wqkv = jnp.concatenate([wq, wk, wv], axis=-1).astype(jnp.bfloat16)   # (D, 3D)
    bqkv = jnp.concatenate([bq, bk, bv], axis=-1).astype(jnp.float32)    # (1, 3D)
    return (ln1_g.astype(jnp.float32), ln1_b.astype(jnp.float32),
            wqkv, bqkv,
            wo.astype(jnp.bfloat16), bo.astype(jnp.float32),
            ln2_g.astype(jnp.float32), ln2_b.astype(jnp.float32),
            wfc.astype(jnp.bfloat16), bfc.astype(jnp.float32),
            wpr.astype(jnp.bfloat16), bpr.astype(jnp.float32))


def make_params(key, d_model):
    """Deterministic synthetic parameters mirroring the module's shapes.

    PyTorch stores in_proj_weight (3D, D), out_proj/c_fc/c_proj weights as
    (out, in); we pre-transpose so math is y @ W.
    """
    ks = jax.random.split(key, 8)
    D = d_model
    s = 1.0 / math.sqrt(D)
    s4 = 1.0 / math.sqrt(4 * D)

    ln1_g = jnp.ones((1, D), jnp.float32)
    ln1_b = jnp.zeros((1, D), jnp.float32)
    ln2_g = jnp.ones((1, D), jnp.float32)
    ln2_b = jnp.zeros((1, D), jnp.float32)

    in_proj_w = jax.random.uniform(ks[0], (3 * D, D), jnp.float32, -s, s)
    in_proj_b = jax.random.uniform(ks[1], (3 * D,), jnp.float32, -s, s)
    wq = in_proj_w[:D].T
    wk = in_proj_w[D:2 * D].T
    wv = in_proj_w[2 * D:].T
    bq = in_proj_b[:D].reshape(1, D)
    bk = in_proj_b[D:2 * D].reshape(1, D)
    bv = in_proj_b[2 * D:].reshape(1, D)

    wo = jax.random.uniform(ks[2], (D, D), jnp.float32, -s, s).T
    bo = jax.random.uniform(ks[3], (D,), jnp.float32, -s, s).reshape(1, D)

    wfc = jax.random.uniform(ks[4], (4 * D, D), jnp.float32, -s, s).T       # (D, 4D)
    bfc = jax.random.uniform(ks[5], (4 * D,), jnp.float32, -s, s).reshape(1, 4 * D)
    wpr = jax.random.uniform(ks[6], (D, 4 * D), jnp.float32, -s4, s4).T     # (4D, D)
    bpr = jax.random.uniform(ks[7], (D,), jnp.float32, -s4, s4).reshape(1, D)

    return (ln1_g, ln1_b, wq, wk, wv, bq, bk, bv, wo, bo,
            ln2_g, ln2_b, wfc, bfc, wpr, bpr)


def reference_jax(x_lnd, params, n_head):
    """Pure-JAX f32 reference of the PyTorch forward (sanity check)."""
    (ln1_g, ln1_b, wq, wk, wv, bq, bk, bv, wo, bo,
     ln2_g, ln2_b, wfc, bfc, wpr, bpr) = params
    L, N, D = x_lnd.shape
    hd = D // n_head

    def ln(x, g, b):
        mu = x.mean(-1, keepdims=True)
        var = ((x - mu) ** 2).mean(-1, keepdims=True)
        return (x - mu) / jnp.sqrt(var + LN_EPS) * g.reshape(-1) + b.reshape(-1)

    x = jnp.transpose(x_lnd, (1, 0, 2))                       # (N, L, D)
    y = ln(x, ln1_g, ln1_b)
    q = y @ wq + bq
    k = y @ wk + bk
    v = y @ wv + bv
    q = q.reshape(N, L, n_head, hd).transpose(0, 2, 1, 3) / math.sqrt(hd)
    k = k.reshape(N, L, n_head, hd).transpose(0, 2, 1, 3)
    v = v.reshape(N, L, n_head, hd).transpose(0, 2, 1, 3)
    s = jnp.einsum("nhqd,nhkd->nhqk", q, k)
    p = jax.nn.softmax(s, axis=-1)
    a = jnp.einsum("nhqk,nhkd->nhqd", p, v).transpose(0, 2, 1, 3).reshape(N, L, D)
    x = x + (a @ wo + bo)
    z = ln(x, ln2_g, ln2_b)
    h = z @ wfc + bfc
    h = h * jax.nn.sigmoid(1.702 * h)
    x = x + (h @ wpr + bpr)
    return jnp.transpose(x, (1, 0, 2))


if __name__ == "__main__":
    L, N, D, H = 8, 2, 32, 4                                  # seq, batch, d_model, heads
    key = jax.random.PRNGKey(0)
    kx, kp = jax.random.split(key)
    x = jax.random.normal(kx, (L, N, D), jnp.float32)
    params = make_params(kp, D)
    prepared = prepare_params(params)      # one-time weight repack (hoisted out of fwd)

    out = residual_attention_block(x, prepared, H)
    out = jax.block_until_ready(out)

    ref = reference_jax(x, params, H)
    assert out.shape == (L, N, D)
    # bf16 matmul inputs + approx reciprocal => relaxed tolerance vs f32 reference
    assert jnp.allclose(out, ref, atol=2e-2, rtol=2e-2), (
        f"max err {jnp.max(jnp.abs(out - ref))}")
    print("KERNEL_OK")
</pallas_src>

<mosaic_0001>
module attributes {stable_mosaic.version = 11 : i64} {
  func.func @_residual_block_kernel(%arg0: i32, %arg1: memref<1x8x32xf32, #tpu.memory_space<vmem>>, %arg2: memref<1x32xf32, #tpu.memory_space<vmem>>, %arg3: memref<1x32xf32, #tpu.memory_space<vmem>>, %arg4: memref<32x96xbf16, #tpu.memory_space<vmem>>, %arg5: memref<1x96xf32, #tpu.memory_space<vmem>>, %arg6: memref<32x32xbf16, #tpu.memory_space<vmem>>, %arg7: memref<1x32xf32, #tpu.memory_space<vmem>>, %arg8: memref<1x32xf32, #tpu.memory_space<vmem>>, %arg9: memref<1x32xf32, #tpu.memory_space<vmem>>, %arg10: memref<32x128xbf16, #tpu.memory_space<vmem>>, %arg11: memref<1x128xf32, #tpu.memory_space<vmem>>, %arg12: memref<128x32xbf16, #tpu.memory_space<vmem>>, %arg13: memref<1x32xf32, #tpu.memory_space<vmem>>, %arg14: memref<1x8x32xf32, #tpu.memory_space<vmem>>) attributes {dimension_semantics = [#tpu.dimension_semantics<parallel>], iteration_bounds = array<i64: 2>, scalar_prefetch = 0 : i64, scratch_operands = 0 : i64, tpu.core_type = #tpu.core_type<tc>, window_params = [{transform_indices = @transform_0, window_bounds = array<i64: 1, 8, 32>}, {pipeline_mode = #tpu.pipeline_mode<synchronous>, transform_indices = @transform_1, window_bounds = array<i64: 1, 32>}, {pipeline_mode = #tpu.pipeline_mode<synchronous>, transform_indices = @transform_2, window_bounds = array<i64: 1, 32>}, {pipeline_mode = #tpu.pipeline_mode<synchronous>, transform_indices = @transform_3, window_bounds = array<i64: 32, 96>}, {pipeline_mode = #tpu.pipeline_mode<synchronous>, transform_indices = @transform_4, window_bounds = array<i64: 1, 96>}, {pipeline_mode = #tpu.pipeline_mode<synchronous>, transform_indices = @transform_5, window_bounds = array<i64: 32, 32>}, {pipeline_mode = #tpu.pipeline_mode<synchronous>, transform_indices = @transform_6, window_bounds = array<i64: 1, 32>}, {pipeline_mode = #tpu.pipeline_mode<synchronous>, transform_indices = @transform_7, window_bounds = array<i64: 1, 32>}, {pipeline_mode = #tpu.pipeline_mode<synchronous>, transform_indices = @transform_8, window_bounds = array<i64: 1, 32>}, {pipeline_mode = #tpu.pipeline_mode<synchronous>, transform_indices = @transform_9, window_bounds = array<i64: 32, 128>}, {pipeline_mode = #tpu.pipeline_mode<synchronous>, transform_indices = @transform_10, window_bounds = array<i64: 1, 128>}, {pipeline_mode = #tpu.pipeline_mode<synchronous>, transform_indices = @transform_11, window_bounds = array<i64: 128, 32>}, {pipeline_mode = #tpu.pipeline_mode<synchronous>, transform_indices = @transform_12, window_bounds = array<i64: 1, 32>}, {transform_indices = @transform_13, window_bounds = array<i64: 1, 8, 32>}]} {
    %c0 = arith.constant 0 : index
    %c0_0 = arith.constant 0 : index
    %c0_1 = arith.constant 0 : index
    %0 = vector.load %arg1[%c0, %c0_0, %c0_1] : memref<1x8x32xf32, #tpu.memory_space<vmem>>, vector<1x8x32xf32>
    %1 = vector.shape_cast %0 : vector<1x8x32xf32> to vector<8x32xf32>
    %c0_2 = arith.constant 0 : index
    %c0_3 = arith.constant 0 : index
    %2 = vector.load %arg2[%c0_2, %c0_3] : memref<1x32xf32, #tpu.memory_space<vmem>>, vector<1x32xf32>
    %c0_4 = arith.constant 0 : index
    %c0_5 = arith.constant 0 : index
    %3 = vector.load %arg3[%c0_4, %c0_5] : memref<1x32xf32, #tpu.memory_space<vmem>>, vector<1x32xf32>
    %cst = arith.constant dense<0.000000e+00> : vector<8xf32>
    %4 = vector.multi_reduction <add>, %1, %cst [1] : vector<8x32xf32> to vector<8xf32>
    %5 = vector.shape_cast %4 : vector<8xf32> to vector<8x1xf32>
    %cst_6 = arith.constant 3.200000e+01 : f32
    %6 = vector.broadcast %cst_6 : f32 to vector<8x1xf32>
    %7 = arith.divf %5, %6 : vector<8x1xf32>
    %8 = vector.broadcast %7 : vector<8x1xf32> to vector<8x32xf32>
    %9 = arith.subf %1, %8 : vector<8x32xf32>
    %10 = arith.mulf %9, %9 : vector<8x32xf32>
    %cst_7 = arith.constant dense<0.000000e+00> : vector<8xf32>
    %11 = vector.multi_reduction <add>, %10, %cst_7 [1] : vector<8x32xf32> to vector<8xf32>
    %12 = vector.shape_cast %11 : vector<8xf32> to vector<8x1xf32>
    %cst_8 = arith.constant 3.200000e+01 : f32
    %13 = vector.broadcast %cst_8 : f32 to vector<8x1xf32>
    %14 = arith.divf %12, %13 : vector<8x1xf32>
    %15 = vector.broadcast %7 : vector<8x1xf32> to vector<8x32xf32>
    %16 = arith.subf %1, %15 : vector<8x32xf32>
    %cst_9 = arith.constant 9.99999974E-6 : f32
    %17 = vector.broadcast %cst_9 : f32 to vector<8x1xf32>
    %18 = arith.addf %14, %17 : vector<8x1xf32>
    %19 = math.rsqrt %18 : vector<8x1xf32>
    %20 = vector.broadcast %19 : vector<8x1xf32> to vector<8x32xf32>
    %21 = arith.mulf %16, %20 : vector<8x32xf32>
    %22 = vector.broadcast %2 : vector<1x32xf32> to vector<8x32xf32>
    %23 = arith.mulf %21, %22 : vector<8x32xf32>
    %24 = vector.broadcast %3 : vector<1x32xf32> to vector<8x32xf32>
    %25 = arith.addf %23, %24 : vector<8x32xf32>
    %26 = arith.truncf %25 : vector<8x32xf32> to vector<8x32xbf16>
    %c0_10 = arith.constant 0 : index
    %c0_11 = arith.constant 0 : index
    %27 = vector.load %arg4[%c0_10, %c0_11] : memref<32x96xbf16, #tpu.memory_space<vmem>>, vector<32x96xbf16>
    %cst_12 = arith.constant dense<0.000000e+00> : vector<8x96xf32>
    %28 = tpu.matmul %26, %27, %cst_12 {dimension_numbers = #tpu.dot_dimension_numbers<[1], [0], [0], [1], [0, 0, 1, 1], [], []>} : vector<8x32xbf16>, vector<32x96xbf16>, vector<8x96xf32> -> vector<8x96xf32>
    %c0_13 = arith.constant 0 : index
    %c0_14 = arith.constant 0 : index
    %29 = vector.load %arg5[%c0_13, %c0_14] : memref<1x96xf32, #tpu.memory_space<vmem>>, vector<1x96xf32>
    %30 = vector.broadcast %29 : vector<1x96xf32> to vector<8x96xf32>
    %31 = arith.addf %28, %30 : vector<8x96xf32>
    %32 = vector.extract_strided_slice %31 {offsets = [0, 0], sizes = [8, 32], strides = [1, 1]} : vector<8x96xf32> to vector<8x32xf32>
    %cst_15 = arith.constant 0.353553385 : f32
    %33 = vector.broadcast %cst_15 : f32 to vector<8x32xf32>
    %34 = arith.mulf %32, %33 : vector<8x32xf32>
    %35 = arith.truncf %34 : vector<8x32xf32> to vector<8x32xbf16>
    %36 = vector.extract_strided_slice %31 {offsets = [0, 32], sizes = [8, 32], strides = [1, 1]} : vector<8x96xf32> to vector<8x32xf32>
    %37 = arith.truncf %36 : vector<8x32xf32> to vector<8x32xbf16>
    %38 = vector.extract_strided_slice %31 {offsets = [0, 64], sizes = [8, 32], strides = [1, 1]} : vector<8x96xf32> to vector<8x32xf32>
    %39 = arith.truncf %38 : vector<8x32xf32> to vector<8x32xbf16>
    %40 = vector.extract_strided_slice %35 {offsets = [0, 0], sizes = [8, 8], strides = [1, 1]} : vector<8x32xbf16> to vector<8x8xbf16>
    %41 = vector.extract_strided_slice %37 {offsets = [0, 0], sizes = [8, 8], strides = [1, 1]} : vector<8x32xbf16> to vector<8x8xbf16>
    %42 = vector.extract_strided_slice %39 {offsets = [0, 0], sizes = [8, 8], strides = [1, 1]} : vector<8x32xbf16> to vector<8x8xbf16>
    %43 = tpu.transpose %41, [1, 0] : vector<8x8xbf16> -> vector<8x8xbf16>
    %cst_16 = arith.constant dense<0.000000e+00> : vector<8x8xf32>
    %44 = tpu.matmul %40, %43, %cst_16 {dimension_numbers = #tpu.dot_dimension_numbers<[1], [0], [0], [1], [0, 0, 1, 1], [], []>} : vector<8x8xbf16>, vector<8x8xbf16>, vector<8x8xf32> -> vector<8x8xf32>
    %cst_17 = arith.constant dense<0xFF800000> : vector<8xf32>
    %45 = vector.multi_reduction <maximumf>, %44, %cst_17 [1] : vector<8x8xf32> to vector<8xf32>
    %46 = vector.shape_cast %45 : vector<8xf32> to vector<8x1xf32>
    %47 = vector.broadcast %46 : vector<8x1xf32> to vector<8x8xf32>
    %48 = arith.subf %44, %47 : vector<8x8xf32>
    %49 = math.exp %48 : vector<8x8xf32>
    %cst_18 = arith.constant dense<0.000000e+00> : vector<8xf32>
    %50 = vector.multi_reduction <add>, %49, %cst_18 [1] : vector<8x8xf32> to vector<8xf32>
    %51 = vector.shape_cast %50 : vector<8xf32> to vector<8x1xf32>
    %52 = tpu.reciprocal %51 {approx = true} : vector<8x1xf32> -> vector<8x1xf32>
    %53 = vector.broadcast %52 : vector<8x1xf32> to vector<8x8xf32>
    %54 = arith.mulf %49, %53 : vector<8x8xf32>
    %55 = arith.truncf %54 : vector<8x8xf32> to vector<8x8xbf16>
    %cst_19 = arith.constant dense<0.000000e+00> : vector<8x8xf32>
    %56 = tpu.matmul %55, %42, %cst_19 {dimension_numbers = #tpu.dot_dimension_numbers<[1], [0], [0], [1], [0, 0, 1, 1], [], []>} : vector<8x8xbf16>, vector<8x8xbf16>, vector<8x8xf32> -> vector<8x8xf32>
    %57 = vector.extract_strided_slice %35 {offsets = [0, 8], sizes = [8, 8], strides = [1, 1]} : vector<8x32xbf16> to vector<8x8xbf16>
    %58 = vector.extract_strided_slice %37 {offsets = [0, 8], sizes = [8, 8], strides = [1, 1]} : vector<8x32xbf16> to vector<8x8xbf16>
    %59 = vector.extract_strided_slice %39 {offsets = [0, 8], sizes = [8, 8], strides = [1, 1]} : vector<8x32xbf16> to vector<8x8xbf16>
    %60 = tpu.transpose %58, [1, 0] : vector<8x8xbf16> -> vector<8x8xbf16>
    %cst_20 = arith.constant dense<0.000000e+00> : vector<8x8xf32>
    %61 = tpu.matmul %57, %60, %cst_20 {dimension_numbers = #tpu.dot_dimension_numbers<[1], [0], [0], [1], [0, 0, 1, 1], [], []>} : vector<8x8xbf16>, vector<8x8xbf16>, vector<8x8xf32> -> vector<8x8xf32>
    %cst_21 = arith.constant dense<0xFF800000> : vector<8xf32>
    %62 = vector.multi_reduction <maximumf>, %61, %cst_21 [1] : vector<8x8xf32> to vector<8xf32>
    %63 = vector.shape_cast %62 : vector<8xf32> to vector<8x1xf32>
    %64 = vector.broadcast %63 : vector<8x1xf32> to vector<8x8xf32>
    %65 = arith.subf %61, %64 : vector<8x8xf32>
    %66 = math.exp %65 : vector<8x8xf32>
    %cst_22 = arith.constant dense<0.000000e+00> : vector<8xf32>
    %67 = vector.multi_reduction <add>, %66, %cst_22 [1] : vector<8x8xf32> to vector<8xf32>
    %68 = vector.shape_cast %67 : vector<8xf32> to vector<8x1xf32>
    %69 = tpu.reciprocal %68 {approx = true} : vector<8x1xf32> -> vector<8x1xf32>
    %70 = vector.broadcast %69 : vector<8x1xf32> to vector<8x8xf32>
    %71 = arith.mulf %66, %70 : vector<8x8xf32>
    %72 = arith.truncf %71 : vector<8x8xf32> to vector<8x8xbf16>
    %cst_23 = arith.constant dense<0.000000e+00> : vector<8x8xf32>
    %73 = tpu.matmul %72, %59, %cst_23 {dimension_numbers = #tpu.dot_dimension_numbers<[1], [0], [0], [1], [0, 0, 1, 1], [], []>} : vector<8x8xbf16>, vector<8x8xbf16>, vector<8x8xf32> -> vector<8x8xf32>
    %74 = vector.extract_strided_slice %35 {offsets = [0, 16], sizes = [8, 8], strides = [1, 1]} : vector<8x32xbf16> to vector<8x8xbf16>
    %75 = vector.extract_strided_slice %37 {offsets = [0, 16], sizes = [8, 8], strides = [1, 1]} : vector<8x32xbf16> to vector<8x8xbf16>
    %76 = vector.extract_strided_slice %39 {offsets = [0, 16], sizes = [8, 8], strides = [1, 1]} : vector<8x32xbf16> to vector<8x8xbf16>
    %77 = tpu.transpose %75, [1, 0] : vector<8x8xbf16> -> vector<8x8xbf16>
    %cst_24 = arith.constant dense<0.000000e+00> : vector<8x8xf32>
    %78 = tpu.matmul %74, %77, %cst_24 {dimension_numbers = #tpu.dot_dimension_numbers<[1], [0], [0], [1], [0, 0, 1, 1], [], []>} : vector<8x8xbf16>, vector<8x8xbf16>, vector<8x8xf32> -> vector<8x8xf32>
    %cst_25 = arith.constant dense<0xFF800000> : vector<8xf32>
    %79 = vector.multi_reduction <maximumf>, %78, %cst_25 [1] : vector<8x8xf32> to vector<8xf32>
    %80 = vector.shape_cast %79 : vector<8xf32> to vector<8x1xf32>
    %81 = vector.broadcast %80 : vector<8x1xf32> to vector<8x8xf32>
    %82 = arith.subf %78, %81 : vector<8x8xf32>
    %83 = math.exp %82 : vector<8x8xf32>
    %cst_26 = arith.constant dense<0.000000e+00> : vector<8xf32>
    %84 = vector.multi_reduction <add>, %83, %cst_26 [1] : vector<8x8xf32> to vector<8xf32>
    %85 = vector.shape_cast %84 : vector<8xf32> to vector<8x1xf32>
    %86 = tpu.reciprocal %85 {approx = true} : vector<8x1xf32> -> vector<8x1xf32>
    %87 = vector.broadcast %86 : vector<8x1xf32> to vector<8x8xf32>
    %88 = arith.mulf %83, %87 : vector<8x8xf32>
    %89 = arith.truncf %88 : vector<8x8xf32> to vector<8x8xbf16>
    %cst_27 = arith.constant dense<0.000000e+00> : vector<8x8xf32>
    %90 = tpu.matmul %89, %76, %cst_27 {dimension_numbers = #tpu.dot_dimension_numbers<[1], [0], [0], [1], [0, 0, 1, 1], [], []>} : vector<8x8xbf16>, vector<8x8xbf16>, vector<8x8xf32> -> vector<8x8xf32>
    %91 = vector.extract_strided_slice %35 {offsets = [0, 24], sizes = [8, 8], strides = [1, 1]} : vector<8x32xbf16> to vector<8x8xbf16>
    %92 = vector.extract_strided_slice %37 {offsets = [0, 24], sizes = [8, 8], strides = [1, 1]} : vector<8x32xbf16> to vector<8x8xbf16>
    %93 = vector.extract_strided_slice %39 {offsets = [0, 24], sizes = [8, 8], strides = [1, 1]} : vector<8x32xbf16> to vector<8x8xbf16>
    %94 = tpu.transpose %92, [1, 0] : vector<8x8xbf16> -> vector<8x8xbf16>
    %cst_28 = arith.constant dense<0.000000e+00> : vector<8x8xf32>
    %95 = tpu.matmul %91, %94, %cst_28 {dimension_numbers = #tpu.dot_dimension_numbers<[1], [0], [0], [1], [0, 0, 1, 1], [], []>} : vector<8x8xbf16>, vector<8x8xbf16>, vector<8x8xf32> -> vector<8x8xf32>
    %cst_29 = arith.constant dense<0xFF800000> : vector<8xf32>
    %96 = vector.multi_reduction <maximumf>, %95, %cst_29 [1] : vector<8x8xf32> to vector<8xf32>
    %97 = vector.shape_cast %96 : vector<8xf32> to vector<8x1xf32>
    %98 = vector.broadcast %97 : vector<8x1xf32> to vector<8x8xf32>
    %99 = arith.subf %95, %98 : vector<8x8xf32>
    %100 = math.exp %99 : vector<8x8xf32>
    %cst_30 = arith.constant dense<0.000000e+00> : vector<8xf32>
    %101 = vector.multi_reduction <add>, %100, %cst_30 [1] : vector<8x8xf32> to vector<8xf32>
    %102 = vector.shape_cast %101 : vector<8xf32> to vector<8x1xf32>
    %103 = tpu.reciprocal %102 {approx = true} : vector<8x1xf32> -> vector<8x1xf32>
    %104 = vector.broadcast %103 : vector<8x1xf32> to vector<8x8xf32>
    %105 = arith.mulf %100, %104 : vector<8x8xf32>
    %106 = arith.truncf %105 : vector<8x8xf32> to vector<8x8xbf16>
    %cst_31 = arith.constant dense<0.000000e+00> : vector<8x8xf32>
    %107 = tpu.matmul %106, %93, %cst_31 {dimension_numbers = #tpu.dot_dimension_numbers<[1], [0], [0], [1], [0, 0, 1, 1], [], []>} : vector<8x8xbf16>, vector<8x8xbf16>, vector<8x8xf32> -> vector<8x8xf32>
    %108 = tpu.concatenate %56, %73, %90, %107 in 1 : vector<8x8xf32>, vector<8x8xf32>, vector<8x8xf32>, vector<8x8xf32> -> vector<8x32xf32>
    %109 = arith.truncf %108 : vector<8x32xf32> to vector<8x32xbf16>
    %c0_32 = arith.constant 0 : index
    %c0_33 = arith.constant 0 : index
    %110 = vector.load %arg6[%c0_32, %c0_33] : memref<32x32xbf16, #tpu.memory_space<vmem>>, vector<32x32xbf16>
    %cst_34 = arith.constant dense<0.000000e+00> : vector<8x32xf32>
    %111 = tpu.matmul %109, %110, %cst_34 {dimension_numbers = #tpu.dot_dimension_numbers<[1], [0], [0], [1], [0, 0, 1, 1], [], []>} : vector<8x32xbf16>, vector<32x32xbf16>, vector<8x32xf32> -> vector<8x32xf32>
    %c0_35 = arith.constant 0 : index
    %c0_36 = arith.constant 0 : index
    %112 = vector.load %arg7[%c0_35, %c0_36] : memref<1x32xf32, #tpu.memory_space<vmem>>, vector<1x32xf32>
    %113 = vector.broadcast %112 : vector<1x32xf32> to vector<8x32xf32>
    %114 = arith.addf %111, %113 : vector<8x32xf32>
    %115 = arith.addf %1, %114 : vector<8x32xf32>
    %c0_37 = arith.constant 0 : index
    %c0_38 = arith.constant 0 : index
    %116 = vector.load %arg8[%c0_37, %c0_38] : memref<1x32xf32, #tpu.memory_space<vmem>>, vector<1x32xf32>
    %c0_39 = arith.constant 0 : index
    %c0_40 = arith.constant 0 : index
    %117 = vector.load %arg9[%c0_39, %c0_40] : memref<1x32xf32, #tpu.memory_space<vmem>>, vector<1x32xf32>
    %cst_41 = arith.constant dense<0.000000e+00> : vector<8xf32>
    %118 = vector.multi_reduction <add>, %115, %cst_41 [1] : vector<8x32xf32> to vector<8xf32>
    %119 = vector.shape_cast %118 : vector<8xf32> to vector<8x1xf32>
    %cst_42 = arith.constant 3.200000e+01 : f32
    %120 = vector.broadcast %cst_42 : f32 to vector<8x1xf32>
    %121 = arith.divf %119, %120 : vector<8x1xf32>
    %122 = vector.broadcast %121 : vector<8x1xf32> to vector<8x32xf32>
    %123 = arith.subf %115, %122 : vector<8x32xf32>
    %124 = arith.mulf %123, %123 : vector<8x32xf32>
    %cst_43 = arith.constant dense<0.000000e+00> : vector<8xf32>
    %125 = vector.multi_reduction <add>, %124, %cst_43 [1] : vector<8x32xf32> to vector<8xf32>
    %126 = vector.shape_cast %125 : vector<8xf32> to vector<8x1xf32>
    %cst_44 = arith.constant 3.200000e+01 : f32
    %127 = vector.broadcast %cst_44 : f32 to vector<8x1xf32>
    %128 = arith.divf %126, %127 : vector<8x1xf32>
    %129 = vector.broadcast %121 : vector<8x1xf32> to vector<8x32xf32>
    %130 = arith.subf %115, %129 : vector<8x32xf32>
    %cst_45 = arith.constant 9.99999974E-6 : f32
    %131 = vector.broadcast %cst_45 : f32 to vector<8x1xf32>
    %132 = arith.addf %128, %131 : vector<8x1xf32>
    %133 = math.rsqrt %132 : vector<8x1xf32>
    %134 = vector.broadcast %133 : vector<8x1xf32> to vector<8x32xf32>
    %135 = arith.mulf %130, %134 : vector<8x32xf32>
    %136 = vector.broadcast %116 : vector<1x32xf32> to vector<8x32xf32>
    %137 = arith.mulf %135, %136 : vector<8x32xf32>
    %138 = vector.broadcast %117 : vector<1x32xf32> to vector<8x32xf32>
    %139 = arith.addf %137, %138 : vector<8x32xf32>
    %140 = arith.truncf %139 : vector<8x32xf32> to vector<8x32xbf16>
    %c0_46 = arith.constant 0 : index
    %c0_47 = arith.constant 0 : index
    %141 = vector.load %arg10[%c0_46, %c0_47] : memref<32x128xbf16, #tpu.memory_space<vmem>>, vector<32x128xbf16>
    %cst_48 = arith.constant dense<0.000000e+00> : vector<8x128xf32>
    %142 = tpu.matmul %140, %141, %cst_48 {dimension_numbers = #tpu.dot_dimension_numbers<[1], [0], [0], [1], [0, 0, 1, 1], [], []>} : vector<8x32xbf16>, vector<32x128xbf16>, vector<8x128xf32> -> vector<8x128xf32>
    %c0_49 = arith.constant 0 : index
    %c0_50 = arith.constant 0 : index
    %143 = vector.load %arg11[%c0_49, %c0_50] : memref<1x128xf32, #tpu.memory_space<vmem>>, vector<1x128xf32>
    %144 = vector.broadcast %143 : vector<1x128xf32> to vector<8x128xf32>
    %145 = arith.addf %142, %144 : vector<8x128xf32>
    %cst_51 = arith.constant 1.702000e+00 : f32
    %146 = vector.broadcast %cst_51 : f32 to vector<8x128xf32>
    %147 = arith.mulf %146, %145 : vector<8x128xf32>
    %148 = arith.negf %147 : vector<8x128xf32>
    %149 = math.exp %148 : vector<8x128xf32>
    %cst_52 = arith.constant 1.000000e+00 : f32
    %150 = vector.broadcast %cst_52 : f32 to vector<8x128xf32>
    %151 = arith.addf %150, %149 : vector<8x128xf32>
    %152 = arith.divf %150, %151 : vector<8x128xf32>
    %153 = arith.mulf %145, %152 : vector<8x128xf32>
    %154 = arith.truncf %153 : vector<8x128xf32> to vector<8x128xbf16>
    %c0_53 = arith.constant 0 : index
    %c0_54 = arith.constant 0 : index
    %155 = vector.load %arg12[%c0_53, %c0_54] : memref<128x32xbf16, #tpu.memory_space<vmem>>, vector<128x32xbf16>
    %cst_55 = arith.constant dense<0.000000e+00> : vector<8x32xf32>
    %156 = tpu.matmul %154, %155, %cst_55 {dimension_numbers = #tpu.dot_dimension_numbers<[1], [0], [0], [1], [0, 0, 1, 1], [], []>} : vector<8x128xbf16>, vector<128x32xbf16>, vector<8x32xf32> -> vector<8x32xf32>
    %c0_56 = arith.constant 0 : index
    %c0_57 = arith.constant 0 : index
    %157 = vector.load %arg13[%c0_56, %c0_57] : memref<1x32xf32, #tpu.memory_space<vmem>>, vector<1x32xf32>
    %158 = vector.broadcast %157 : vector<1x32xf32> to vector<8x32xf32>
    %159 = arith.addf %156, %158 : vector<8x32xf32>
    %160 = arith.addf %115, %159 : vector<8x32xf32>
    %c0_58 = arith.constant 0 : index
    %c0_59 = arith.constant 0 : index
    %c0_60 = arith.constant 0 : index
    %161 = vector.load %arg14[%c0_58, %c0_59, %c0_60] : memref<1x8x32xf32, #tpu.memory_space<vmem>>, vector<1x8x32xf32>
    %162 = vector.shape_cast %161 : vector<1x8x32xf32> to vector<8x32xf32>
    %163 = vector.shape_cast %160 : vector<8x32xf32> to vector<1x8x32xf32>
    tpu.vector_store %arg14[%c0_58, %c0_59, %c0_60], %163 {strides = array<i32>} : memref<1x8x32xf32, #tpu.memory_space<vmem>>, vector<1x8x32xf32>,
    return
  }
  func.func @transform_0(%arg0: i32) -> (i32, i32, i32) {
    %c0_i32 = arith.constant 0 : i32
    %c0_i32_0 = arith.constant 0 : i32
    %c0_i32_1 = arith.constant 0 : i32
    return %arg0, %c0_i32, %c0_i32_0 : i32, i32, i32
  }
  func.func @transform_1(%arg0: i32) -> (i32, i32) {
    %c0_i32 = arith.constant 0 : i32
    %c0_i32_0 = arith.constant 0 : i32
    %c0_i32_1 = arith.constant 0 : i32
    return %c0_i32, %c0_i32_0 : i32, i32
  }
  func.func @transform_2(%arg0: i32) -> (i32, i32) {
    %c0_i32 = arith.constant 0 : i32
    %c0_i32_0 = arith.constant 0 : i32
    %c0_i32_1 = arith.constant 0 : i32
    return %c0_i32, %c0_i32_0 : i32, i32
  }
  func.func @transform_3(%arg0: i32) -> (i32, i32) {
    %c0_i32 = arith.constant 0 : i32
    %c0_i32_0 = arith.constant 0 : i32
    %c0_i32_1 = arith.constant 0 : i32
    return %c0_i32, %c0_i32_0 : i32, i32
  }
  func.func @transform_4(%arg0: i32) -> (i32, i32) {
    %c0_i32 = arith.constant 0 : i32
    %c0_i32_0 = arith.constant 0 : i32
    %c0_i32_1 = arith.constant 0 : i32
    return %c0_i32, %c0_i32_0 : i32, i32
  }
  func.func @transform_5(%arg0: i32) -> (i32, i32) {
    %c0_i32 = arith.constant 0 : i32
    %c0_i32_0 = arith.constant 0 : i32
    %c0_i32_1 = arith.constant 0 : i32
    return %c0_i32, %c0_i32_0 : i32, i32
  }
  func.func @transform_6(%arg0: i32) -> (i32, i32) {
    %c0_i32 = arith.constant 0 : i32
    %c0_i32_0 = arith.constant 0 : i32
    %c0_i32_1 = arith.constant 0 : i32
    return %c0_i32, %c0_i32_0 : i32, i32
  }
  func.func @transform_7(%arg0: i32) -> (i32, i32) {
    %c0_i32 = arith.constant 0 : i32
    %c0_i32_0 = arith.constant 0 : i32
    %c0_i32_1 = arith.constant 0 : i32
    return %c0_i32, %c0_i32_0 : i32, i32
  }
  func.func @transform_8(%arg0: i32) -> (i32, i32) {
    %c0_i32 = arith.constant 0 : i32
    %c0_i32_0 = arith.constant 0 : i32
    %c0_i32_1 = arith.constant 0 : i32
    return %c0_i32, %c0_i32_0 : i32, i32
  }
  func.func @transform_9(%arg0: i32) -> (i32, i32) {
    %c0_i32 = arith.constant 0 : i32
    %c0_i32_0 = arith.constant 0 : i32
    %c0_i32_1 = arith.constant 0 : i32
    return %c0_i32, %c0_i32_0 : i32, i32
  }
  func.func @transform_10(%arg0: i32) -> (i32, i32) {
    %c0_i32 = arith.constant 0 : i32
    %c0_i32_0 = arith.constant 0 : i32
    %c0_i32_1 = arith.constant 0 : i32
    return %c0_i32, %c0_i32_0 : i32, i32
  }
  func.func @transform_11(%arg0: i32) -> (i32, i32) {
    %c0_i32 = arith.constant 0 : i32
    %c0_i32_0 = arith.constant 0 : i32
    %c0_i32_1 = arith.constant 0 : i32
    return %c0_i32, %c0_i32_0 : i32, i32
  }
  func.func @transform_12(%arg0: i32) -> (i32, i32) {
    %c0_i32 = arith.constant 0 : i32
    %c0_i32_0 = arith.constant 0 : i32
    %c0_i32_1 = arith.constant 0 : i32
    return %c0_i32, %c0_i32_0 : i32, i32
  }
  func.func @transform_13(%arg0: i32) -> (i32, i32, i32) {
    %c0_i32 = arith.constant 0 : i32
    %c0_i32_0 = arith.constant 0 : i32
    %c0_i32_1 = arith.constant 0 : i32
    return %arg0, %c0_i32, %c0_i32_0 : i32, i32, i32
  }
}

module attributes {stable_mosaic.version = 11 : i64} {
  func.func @_residual_block_kernel(%arg0: i32, %arg1: memref<1x8x32xf32, #tpu.memory_space<vmem>>, %arg2: memref<1x32xf32, #tpu.memory_space<vmem>>, %arg3: memref<1x32xf32, #tpu.memory_space<vmem>>, %arg4: memref<32x96xbf16, #tpu.memory_space<vmem>>, %arg5: memref<1x96xf32, #tpu.memory_space<vmem>>, %arg6: memref<32x32xbf16, #tpu.memory_space<vmem>>, %arg7: memref<1x32xf32, #tpu.memory_space<vmem>>, %arg8: memref<1x32xf32, #tpu.memory_space<vmem>>, %arg9: memref<1x32xf32, #tpu.memory_space<vmem>>, %arg10: memref<32x128xbf16, #tpu.memory_space<vmem>>, %arg11: memref<1x128xf32, #tpu.memory_space<vmem>>, %arg12: memref<128x32xbf16, #tpu.memory_space<vmem>>, %arg13: memref<1x32xf32, #tpu.memory_space<vmem>>, %arg14: memref<1x8x32xf32, #tpu.memory_space<vmem>>) attributes {dimension_semantics = [#tpu.dimension_semantics<parallel>], iteration_bounds = array<i64: 2>, scalar_prefetch = 0 : i64, scratch_operands = 0 : i64, tpu.core_type = #tpu.core_type<tc>, window_params = [{transform_indices = @transform_0, window_bounds = array<i64: 1, 8, 32>}, {pipeline_mode = #tpu.pipeline_mode<synchronous>, transform_indices = @transform_1, window_bounds = array<i64: 1, 32>}, {pipeline_mode = #tpu.pipeline_mode<synchronous>, transform_indices = @transform_2, window_bounds = array<i64: 1, 32>}, {pipeline_mode = #tpu.pipeline_mode<synchronous>, transform_indices = @transform_3, window_bounds = array<i64: 32, 96>}, {pipeline_mode = #tpu.pipeline_mode<synchronous>, transform_indices = @transform_4, window_bounds = array<i64: 1, 96>}, {pipeline_mode = #tpu.pipeline_mode<synchronous>, transform_indices = @transform_5, window_bounds = array<i64: 32, 32>}, {pipeline_mode = #tpu.pipeline_mode<synchronous>, transform_indices = @transform_6, window_bounds = array<i64: 1, 32>}, {pipeline_mode = #tpu.pipeline_mode<synchronous>, transform_indices = @transform_7, window_bounds = array<i64: 1, 32>}, {pipeline_mode = #tpu.pipeline_mode<synchronous>, transform_indices = @transform_8, window_bounds = array<i64: 1, 32>}, {pipeline_mode = #tpu.pipeline_mode<synchronous>, transform_indices = @transform_9, window_bounds = array<i64: 32, 128>}, {pipeline_mode = #tpu.pipeline_mode<synchronous>, transform_indices = @transform_10, window_bounds = array<i64: 1, 128>}, {pipeline_mode = #tpu.pipeline_mode<synchronous>, transform_indices = @transform_11, window_bounds = array<i64: 128, 32>}, {pipeline_mode = #tpu.pipeline_mode<synchronous>, transform_indices = @transform_12, window_bounds = array<i64: 1, 32>}, {transform_indices = @transform_13, window_bounds = array<i64: 1, 8, 32>}]} {
    %c0 = arith.constant 0 : index
    %c0_0 = arith.constant 0 : index
    %c0_1 = arith.constant 0 : index
    %0 = vector.load %arg1[%c0, %c0_0, %c0_1] : memref<1x8x32xf32, #tpu.memory_space<vmem>>, vector<1x8x32xf32>
    %1 = vector.shape_cast %0 : vector<1x8x32xf32> to vector<8x32xf32>
    %c0_2 = arith.constant 0 : index
    %c0_3 = arith.constant 0 : index
    %2 = vector.load %arg2[%c0_2, %c0_3] : memref<1x32xf32, #tpu.memory_space<vmem>>, vector<1x32xf32>
    %c0_4 = arith.constant 0 : index
    %c0_5 = arith.constant 0 : index
    %3 = vector.load %arg3[%c0_4, %c0_5] : memref<1x32xf32, #tpu.memory_space<vmem>>, vector<1x32xf32>
    %cst = arith.constant dense<0.000000e+00> : vector<8xf32>
    %4 = vector.multi_reduction <add>, %1, %cst [1] : vector<8x32xf32> to vector<8xf32>
    %5 = vector.shape_cast %4 : vector<8xf32> to vector<8x1xf32>
    %cst_6 = arith.constant 3.200000e+01 : f32
    %6 = vector.broadcast %cst_6 : f32 to vector<8x1xf32>
    %7 = arith.divf %5, %6 : vector<8x1xf32>
    %8 = vector.broadcast %7 : vector<8x1xf32> to vector<8x32xf32>
    %9 = arith.subf %1, %8 : vector<8x32xf32>
    %10 = arith.mulf %9, %9 : vector<8x32xf32>
    %cst_7 = arith.constant dense<0.000000e+00> : vector<8xf32>
    %11 = vector.multi_reduction <add>, %10, %cst_7 [1] : vector<8x32xf32> to vector<8xf32>
    %12 = vector.shape_cast %11 : vector<8xf32> to vector<8x1xf32>
    %cst_8 = arith.constant 3.200000e+01 : f32
    %13 = vector.broadcast %cst_8 : f32 to vector<8x1xf32>
    %14 = arith.divf %12, %13 : vector<8x1xf32>
    %15 = vector.broadcast %7 : vector<8x1xf32> to vector<8x32xf32>
    %16 = arith.subf %1, %15 : vector<8x32xf32>
    %cst_9 = arith.constant 9.99999974E-6 : f32
    %17 = vector.broadcast %cst_9 : f32 to vector<8x1xf32>
    %18 = arith.addf %14, %17 : vector<8x1xf32>
    %19 = math.rsqrt %18 : vector<8x1xf32>
    %20 = vector.broadcast %19 : vector<8x1xf32> to vector<8x32xf32>
    %21 = arith.mulf %16, %20 : vector<8x32xf32>
    %22 = vector.broadcast %2 : vector<1x32xf32> to vector<8x32xf32>
    %23 = arith.mulf %21, %22 : vector<8x32xf32>
    %24 = vector.broadcast %3 : vector<1x32xf32> to vector<8x32xf32>
    %25 = arith.addf %23, %24 : vector<8x32xf32>
    %26 = arith.truncf %25 : vector<8x32xf32> to vector<8x32xbf16>
    %c0_10 = arith.constant 0 : index
    %c0_11 = arith.constant 0 : index
    %27 = vector.load %arg4[%c0_10, %c0_11] : memref<32x96xbf16, #tpu.memory_space<vmem>>, vector<32x96xbf16>
    %cst_12 = arith.constant dense<0.000000e+00> : vector<8x96xf32>
    %28 = tpu.matmul %26, %27, %cst_12 {dimension_numbers = #tpu.dot_dimension_numbers<[1], [0], [0], [1], [0, 0, 1, 1], [], []>} : vector<8x32xbf16>, vector<32x96xbf16>, vector<8x96xf32> -> vector<8x96xf32>
    %c0_13 = arith.constant 0 : index
    %c0_14 = arith.constant 0 : index
    %29 = vector.load %arg5[%c0_13, %c0_14] : memref<1x96xf32, #tpu.memory_space<vmem>>, vector<1x96xf32>
    %30 = vector.broadcast %29 : vector<1x96xf32> to vector<8x96xf32>
    %31 = arith.addf %28, %30 : vector<8x96xf32>
    %32 = vector.extract_strided_slice %31 {offsets = [0, 0], sizes = [8, 32], strides = [1, 1]} : vector<8x96xf32> to vector<8x32xf32>
    %cst_15 = arith.constant 0.353553385 : f32
    %33 = vector.broadcast %cst_15 : f32 to vector<8x32xf32>
    %34 = arith.mulf %32, %33 : vector<8x32xf32>
    %35 = arith.truncf %34 : vector<8x32xf32> to vector<8x32xbf16>
    %36 = vector.extract_strided_slice %31 {offsets = [0, 32], sizes = [8, 32], strides = [1, 1]} : vector<8x96xf32> to vector<8x32xf32>
    %37 = arith.truncf %36 : vector<8x32xf32> to vector<8x32xbf16>
    %38 = vector.extract_strided_slice %31 {offsets = [0, 64], sizes = [8, 32], strides = [1, 1]} : vector<8x96xf32> to vector<8x32xf32>
    %39 = arith.truncf %38 : vector<8x32xf32> to vector<8x32xbf16>
    %40 = vector.extract_strided_slice %35 {offsets = [0, 0], sizes = [8, 8], strides = [1, 1]} : vector<8x32xbf16> to vector<8x8xbf16>
    %41 = vector.extract_strided_slice %37 {offsets = [0, 0], sizes = [8, 8], strides = [1, 1]} : vector<8x32xbf16> to vector<8x8xbf16>
    %42 = vector.extract_strided_slice %39 {offsets = [0, 0], sizes = [8, 8], strides = [1, 1]} : vector<8x32xbf16> to vector<8x8xbf16>
    %43 = tpu.transpose %41, [1, 0] : vector<8x8xbf16> -> vector<8x8xbf16>
    %cst_16 = arith.constant dense<0.000000e+00> : vector<8x8xf32>
    %44 = tpu.matmul %40, %43, %cst_16 {dimension_numbers = #tpu.dot_dimension_numbers<[1], [0], [0], [1], [0, 0, 1, 1], [], []>} : vector<8x8xbf16>, vector<8x8xbf16>, vector<8x8xf32> -> vector<8x8xf32>
    %cst_17 = arith.constant dense<0xFF800000> : vector<8xf32>
    %45 = vector.multi_reduction <maximumf>, %44, %cst_17 [1] : vector<8x8xf32> to vector<8xf32>
    %46 = vector.shape_cast %45 : vector<8xf32> to vector<8x1xf32>
    %47 = vector.broadcast %46 : vector<8x1xf32> to vector<8x8xf32>
    %48 = arith.subf %44, %47 : vector<8x8xf32>
    %49 = math.exp %48 : vector<8x8xf32>
    %cst_18 = arith.constant dense<0.000000e+00> : vector<8xf32>
    %50 = vector.multi_reduction <add>, %49, %cst_18 [1] : vector<8x8xf32> to vector<8xf32>
    %51 = vector.shape_cast %50 : vector<8xf32> to vector<8x1xf32>
    %52 = tpu.reciprocal %51 {approx = true} : vector<8x1xf32> -> vector<8x1xf32>
    %53 = vector.broadcast %52 : vector<8x1xf32> to vector<8x8xf32>
    %54 = arith.mulf %49, %53 : vector<8x8xf32>
    %55 = arith.truncf %54 : vector<8x8xf32> to vector<8x8xbf16>
    %cst_19 = arith.constant dense<0.000000e+00> : vector<8x8xf32>
    %56 = tpu.matmul %55, %42, %cst_19 {dimension_numbers = #tpu.dot_dimension_numbers<[1], [0], [0], [1], [0, 0, 1, 1], [], []>} : vector<8x8xbf16>, vector<8x8xbf16>, vector<8x8xf32> -> vector<8x8xf32>
    %57 = vector.extract_strided_slice %35 {offsets = [0, 8], sizes = [8, 8], strides = [1, 1]} : vector<8x32xbf16> to vector<8x8xbf16>
    %58 = vector.extract_strided_slice %37 {offsets = [0, 8], sizes = [8, 8], strides = [1, 1]} : vector<8x32xbf16> to vector<8x8xbf16>
    %59 = vector.extract_strided_slice %39 {offsets = [0, 8], sizes = [8, 8], strides = [1, 1]} : vector<8x32xbf16> to vector<8x8xbf16>
    %60 = tpu.transpose %58, [1, 0] : vector<8x8xbf16> -> vector<8x8xbf16>
    %cst_20 = arith.constant dense<0.000000e+00> : vector<8x8xf32>
    %61 = tpu.matmul %57, %60, %cst_20 {dimension_numbers = #tpu.dot_dimension_numbers<[1], [0], [0], [1], [0, 0, 1, 1], [], []>} : vector<8x8xbf16>, vector<8x8xbf16>, vector<8x8xf32> -> vector<8x8xf32>
    %cst_21 = arith.constant dense<0xFF800000> : vector<8xf32>
    %62 = vector.multi_reduction <maximumf>, %61, %cst_21 [1] : vector<8x8xf32> to vector<8xf32>
    %63 = vector.shape_cast %62 : vector<8xf32> to vector<8x1xf32>
    %64 = vector.broadcast %63 : vector<8x1xf32> to vector<8x8xf32>
    %65 = arith.subf %61, %64 : vector<8x8xf32>
    %66 = math.exp %65 : vector<8x8xf32>
    %cst_22 = arith.constant dense<0.000000e+00> : vector<8xf32>
    %67 = vector.multi_reduction <add>, %66, %cst_22 [1] : vector<8x8xf32> to vector<8xf32>
    %68 = vector.shape_cast %67 : vector<8xf32> to vector<8x1xf32>
    %69 = tpu.reciprocal %68 {approx = true} : vector<8x1xf32> -> vector<8x1xf32>
    %70 = vector.broadcast %69 : vector<8x1xf32> to vector<8x8xf32>
    %71 = arith.mulf %66, %70 : vector<8x8xf32>
    %72 = arith.truncf %71 : vector<8x8xf32> to vector<8x8xbf16>
    %cst_23 = arith.constant dense<0.000000e+00> : vector<8x8xf32>
    %73 = tpu.matmul %72, %59, %cst_23 {dimension_numbers = #tpu.dot_dimension_numbers<[1], [0], [0], [1], [0, 0, 1, 1], [], []>} : vector<8x8xbf16>, vector<8x8xbf16>, vector<8x8xf32> -> vector<8x8xf32>
    %74 = vector.extract_strided_slice %35 {offsets = [0, 16], sizes = [8, 8], strides = [1, 1]} : vector<8x32xbf16> to vector<8x8xbf16>
    %75 = vector.extract_strided_slice %37 {offsets = [0, 16], sizes = [8, 8], strides = [1, 1]} : vector<8x32xbf16> to vector<8x8xbf16>
    %76 = vector.extract_strided_slice %39 {offsets = [0, 16], sizes = [8, 8], strides = [1, 1]} : vector<8x32xbf16> to vector<8x8xbf16>
    %77 = tpu.transpose %75, [1, 0] : vector<8x8xbf16> -> vector<8x8xbf16>
    %cst_24 = arith.constant dense<0.000000e+00> : vector<8x8xf32>
    %78 = tpu.matmul %74, %77, %cst_24 {dimension_numbers = #tpu.dot_dimension_numbers<[1], [0], [0], [1], [0, 0, 1, 1], [], []>} : vector<8x8xbf16>, vector<8x8xbf16>, vector<8x8xf32> -> vector<8x8xf32>
    %cst_25 = arith.constant dense<0xFF800000> : vector<8xf32>
    %79 = vector.multi_reduction <maximumf>, %78, %cst_25 [1] : vector<8x8xf32> to vector<8xf32>
    %80 = vector.shape_cast %79 : vector<8xf32> to vector<8x1xf32>
    %81 = vector.broadcast %80 : vector<8x1xf32> to vector<8x8xf32>
    %82 = arith.subf %78, %81 : vector<8x8xf32>
    %83 = math.exp %82 : vector<8x8xf32>
    %cst_26 = arith.constant dense<0.000000e+00> : vector<8xf32>
    %84 = vector.multi_reduction <add>, %83, %cst_26 [1] : vector<8x8xf32> to vector<8xf32>
    %85 = vector.shape_cast %84 : vector<8xf32> to vector<8x1xf32>
    %86 = tpu.reciprocal %85 {approx = true} : vector<8x1xf32> -> vector<8x1xf32>
    %87 = vector.broadcast %86 : vector<8x1xf32> to vector<8x8xf32>
    %88 = arith.mulf %83, %87 : vector<8x8xf32>
    %89 = arith.truncf %88 : vector<8x8xf32> to vector<8x8xbf16>
    %cst_27 = arith.constant dense<0.000000e+00> : vector<8x8xf32>
    %90 = tpu.matmul %89, %76, %cst_27 {dimension_numbers = #tpu.dot_dimension_numbers<[1], [0], [0], [1], [0, 0, 1, 1], [], []>} : vector<8x8xbf16>, vector<8x8xbf16>, vector<8x8xf32> -> vector<8x8xf32>
    %91 = vector.extract_strided_slice %35 {offsets = [0, 24], sizes = [8, 8], strides = [1, 1]} : vector<8x32xbf16> to vector<8x8xbf16>
    %92 = vector.extract_strided_slice %37 {offsets = [0, 24], sizes = [8, 8], strides = [1, 1]} : vector<8x32xbf16> to vector<8x8xbf16>
    %93 = vector.extract_strided_slice %39 {offsets = [0, 24], sizes = [8, 8], strides = [1, 1]} : vector<8x32xbf16> to vector<8x8xbf16>
    %94 = tpu.transpose %92, [1, 0] : vector<8x8xbf16> -> vector<8x8xbf16>
    %cst_28 = arith.constant dense<0.000000e+00> : vector<8x8xf32>
    %95 = tpu.matmul %91, %94, %cst_28 {dimension_numbers = #tpu.dot_dimension_numbers<[1], [0], [0], [1], [0, 0, 1, 1], [], []>} : vector<8x8xbf16>, vector<8x8xbf16>, vector<8x8xf32> -> vector<8x8xf32>
    %cst_29 = arith.constant dense<0xFF800000> : vector<8xf32>
    %96 = vector.multi_reduction <maximumf>, %95, %cst_29 [1] : vector<8x8xf32> to vector<8xf32>
    %97 = vector.shape_cast %96 : vector<8xf32> to vector<8x1xf32>
    %98 = vector.broadcast %97 : vector<8x1xf32> to vector<8x8xf32>
    %99 = arith.subf %95, %98 : vector<8x8xf32>
    %100 = math.exp %99 : vector<8x8xf32>
    %cst_30 = arith.constant dense<0.000000e+00> : vector<8xf32>
    %101 = vector.multi_reduction <add>, %100, %cst_30 [1] : vector<8x8xf32> to vector<8xf32>
    %102 = vector.shape_cast %101 : vector<8xf32> to vector<8x1xf32>
    %103 = tpu.reciprocal %102 {approx = true} : vector<8x1xf32> -> vector<8x1xf32>
    %104 = vector.broadcast %103 : vector<8x1xf32> to vector<8x8xf32>
    %105 = arith.mulf %100, %104 : vector<8x8xf32>
    %106 = arith.truncf %105 : vector<8x8xf32> to vector<8x8xbf16>
    %cst_31 = arith.constant dense<0.000000e+00> : vector<8x8xf32>
    %107 = tpu.matmul %106, %93, %cst_31 {dimension_numbers = #tpu.dot_dimension_numbers<[1], [0], [0], [1], [0, 0, 1, 1], [], []>} : vector<8x8xbf16>, vector<8x8xbf16>, vector<8x8xf32> -> vector<8x8xf32>
    %108 = tpu.concatenate %56, %73, %90, %107 in 1 : vector<8x8xf32>, vector<8x8xf32>, vector<8x8xf32>, vector<8x8xf32> -> vector<8x32xf32>
    %109 = arith.truncf %108 : vector<8x32xf32> to vector<8x32xbf16>
    %c0_32 = arith.constant 0 : index
    %c0_33 = arith.constant 0 : index
    %110 = vector.load %arg6[%c0_32, %c0_33] : memref<32x32xbf16, #tpu.memory_space<vmem>>, vector<32x32xbf16>
    %cst_34 = arith.constant dense<0.000000e+00> : vector<8x32xf32>
    %111 = tpu.matmul %109, %110, %cst_34 {dimension_numbers = #tpu.dot_dimension_numbers<[1], [0], [0], [1], [0, 0, 1, 1], [], []>} : vector<8x32xbf16>, vector<32x32xbf16>, vector<8x32xf32> -> vector<8x32xf32>
    %c0_35 = arith.constant 0 : index
    %c0_36 = arith.constant 0 : index
    %112 = vector.load %arg7[%c0_35, %c0_36] : memref<1x32xf32, #tpu.memory_space<vmem>>, vector<1x32xf32>
    %113 = vector.broadcast %112 : vector<1x32xf32> to vector<8x32xf32>
    %114 = arith.addf %111, %113 : vector<8x32xf32>
    %115 = arith.addf %1, %114 : vector<8x32xf32>
    %c0_37 = arith.constant 0 : index
    %c0_38 = arith.constant 0 : index
    %116 = vector.load %arg8[%c0_37, %c0_38] : memref<1x32xf32, #tpu.memory_space<vmem>>, vector<1x32xf32>
    %c0_39 = arith.constant 0 : index
    %c0_40 = arith.constant 0 : index
    %117 = vector.load %arg9[%c0_39, %c0_40] : memref<1x32xf32, #tpu.memory_space<vmem>>, vector<1x32xf32>
    %cst_41 = arith.constant dense<0.000000e+00> : vector<8xf32>
    %118 = vector.multi_reduction <add>, %115, %cst_41 [1] : vector<8x32xf32> to vector<8xf32>
    %119 = vector.shape_cast %118 : vector<8xf32> to vector<8x1xf32>
    %cst_42 = arith.constant 3.200000e+01 : f32
    %120 = vector.broadcast %cst_42 : f32 to vector<8x1xf32>
    %121 = arith.divf %119, %120 : vector<8x1xf32>
    %122 = vector.broadcast %121 : vector<8x1xf32> to vector<8x32xf32>
    %123 = arith.subf %115, %122 : vector<8x32xf32>
    %124 = arith.mulf %123, %123 : vector<8x32xf32>
    %cst_43 = arith.constant dense<0.000000e+00> : vector<8xf32>
    %125 = vector.multi_reduction <add>, %124, %cst_43 [1] : vector<8x32xf32> to vector<8xf32>
    %126 = vector.shape_cast %125 : vector<8xf32> to vector<8x1xf32>
    %cst_44 = arith.constant 3.200000e+01 : f32
    %127 = vector.broadcast %cst_44 : f32 to vector<8x1xf32>
    %128 = arith.divf %126, %127 : vector<8x1xf32>
    %129 = vector.broadcast %121 : vector<8x1xf32> to vector<8x32xf32>
    %130 = arith.subf %115, %129 : vector<8x32xf32>
    %cst_45 = arith.constant 9.99999974E-6 : f32
    %131 = vector.broadcast %cst_45 : f32 to vector<8x1xf32>
    %132 = arith.addf %128, %131 : vector<8x1xf32>
    %133 = math.rsqrt %132 : vector<8x1xf32>
    %134 = vector.broadcast %133 : vector<8x1xf32> to vector<8x32xf32>
    %135 = arith.mulf %130, %134 : vector<8x32xf32>
    %136 = vector.broadcast %116 : vector<1x32xf32> to vector<8x32xf32>
    %137 = arith.mulf %135, %136 : vector<8x32xf32>
    %138 = vector.broadcast %117 : vector<1x32xf32> to vector<8x32xf32>
    %139 = arith.addf %137, %138 : vector<8x32xf32>
    %140 = arith.truncf %139 : vector<8x32xf32> to vector<8x32xbf16>
    %c0_46 = arith.constant 0 : index
    %c0_47 = arith.constant 0 : index
    %141 = vector.load %arg10[%c0_46, %c0_47] : memref<32x128xbf16, #tpu.memory_space<vmem>>, vector<32x128xbf16>
    %cst_48 = arith.constant dense<0.000000e+00> : vector<8x128xf32>
    %142 = tpu.matmul %140, %141, %cst_48 {dimension_numbers = #tpu.dot_dimension_numbers<[1], [0], [0], [1], [0, 0, 1, 1], [], []>} : vector<8x32xbf16>, vector<32x128xbf16>, vector<8x128xf32> -> vector<8x128xf32>
    %c0_49 = arith.constant 0 : index
    %c0_50 = arith.constant 0 : index
    %143 = vector.load %arg11[%c0_49, %c0_50] : memref<1x128xf32, #tpu.memory_space<vmem>>, vector<1x128xf32>
    %144 = vector.broadcast %143 : vector<1x128xf32> to vector<8x128xf32>
    %145 = arith.addf %142, %144 : vector<8x128xf32>
    %cst_51 = arith.constant 1.702000e+00 : f32
    %146 = vector.broadcast %cst_51 : f32 to vector<8x128xf32>
    %147 = arith.mulf %146, %145 : vector<8x128xf32>
    %148 = arith.negf %147 : vector<8x128xf32>
    %149 = math.exp %148 : vector<8x128xf32>
    %cst_52 = arith.constant 1.000000e+00 : f32
    %150 = vector.broadcast %cst_52 : f32 to vector<8x128xf32>
    %151 = arith.addf %150, %149 : vector<8x128xf32>
    %152 = arith.divf %150, %151 : vector<8x128xf32>
    %153 = arith.mulf %145, %152 : vector<8x128xf32>
    %154 = arith.truncf %153 : vector<8x128xf32> to vector<8x128xbf16>
    %c0_53 = arith.constant 0 : index
    %c0_54 = arith.constant 0 : index
    %155 = vector.load %arg12[%c0_53, %c0_54] : memref<128x32xbf16, #tpu.memory_space<vmem>>, vector<128x32xbf16>
    %cst_55 = arith.constant dense<0.000000e+00> : vector<8x32xf32>
    %156 = tpu.matmul %154, %155, %cst_55 {dimension_numbers = #tpu.dot_dimension_numbers<[1], [0], [0], [1], [0, 0, 1, 1], [], []>} : vector<8x128xbf16>, vector<128x32xbf16>, vector<8x32xf32> -> vector<8x32xf32>
    %c0_56 = arith.constant 0 : index
    %c0_57 = arith.constant 0 : index
    %157 = vector.load %arg13[%c0_56, %c0_57] : memref<1x32xf32, #tpu.memory_space<vmem>>, vector<1x32xf32>
    %158 = vector.broadcast %157 : vector<1x32xf32> to vector<8x32xf32>
    %159 = arith.addf %156, %158 : vector<8x32xf32>
    %160 = arith.addf %115, %159 : vector<8x32xf32>
    %c0_58 = arith.constant 0 : index
    %c0_59 = arith.constant 0 : index
    %c0_60 = arith.constant 0 : index
    %161 = vector.load %arg14[%c0_58, %c0_59, %c0_60] : memref<1x8x32xf32, #tpu.memory_space<vmem>>, vector<1x8x32xf32>
    %162 = vector.shape_cast %161 : vector<1x8x32xf32> to vector<8x32xf32>
    %163 = vector.shape_cast %160 : vector<8x32xf32> to vector<1x8x32xf32>
    tpu.vector_store %arg14[%c0_58, %c0_59, %c0_60], %163 {strides = array<i32>} : memref<1x8x32xf32, #tpu.memory_space<vmem>>, vector<1x8x32xf32>,
    return
  }
  func.func @transform_0(%arg0: i32) -> (i32, i32, i32) {
    %c0_i32 = arith.constant 0 : i32
    %c0_i32_0 = arith.constant 0 : i32
    %c0_i32_1 = arith.constant 0 : i32
    return %arg0, %c0_i32, %c0_i32_0 : i32, i32, i32
  }
  func.func @transform_1(%arg0: i32) -> (i32, i32) {
    %c0_i32 = arith.constant 0 : i32
    %c0_i32_0 = arith.constant 0 : i32
    %c0_i32_1 = arith.constant 0 : i32
    return %c0_i32, %c0_i32_0 : i32, i32
  }
  func.func @transform_2(%arg0: i32) -> (i32, i32) {
    %c0_i32 = arith.constant 0 : i32
    %c0_i32_0 = arith.constant 0 : i32
    %c0_i32_1 = arith.constant 0 : i32
    return %c0_i32, %c0_i32_0 : i32, i32
  }
  func.func @transform_3(%arg0: i32) -> (i32, i32) {
    %c0_i32 = arith.constant 0 : i32
    %c0_i32_0 = arith.constant 0 : i32
    %c0_i32_1 = arith.constant 0 : i32
    return %c0_i32, %c0_i32_0 : i32, i32
  }
  func.func @transform_4(%arg0: i32) -> (i32, i32) {
    %c0_i32 = arith.constant 0 : i32
    %c0_i32_0 = arith.constant 0 : i32
    %c0_i32_1 = arith.constant 0 : i32
    return %c0_i32, %c0_i32_0 : i32, i32
  }
  func.func @transform_5(%arg0: i32) -> (i32, i32) {
    %c0_i32 = arith.constant 0 : i32
    %c0_i32_0 = arith.constant 0 : i32
    %c0_i32_1 = arith.constant 0 : i32
    return %c0_i32, %c0_i32_0 : i32, i32
  }
  func.func @transform_6(%arg0: i32) -> (i32, i32) {
    %c0_i32 = arith.constant 0 : i32
    %c0_i32_0 = arith.constant 0 : i32
    %c0_i32_1 = arith.constant 0 : i32
    return %c0_i32, %c0_i32_0 : i32, i32
  }
  func.func @transform_7(%arg0: i32) -> (i32, i32) {
    %c0_i32 = arith.constant 0 : i32
    %c0_i32_0 = arith.constant 0 : i32
    %c0_i32_1 = arith.constant 0 : i32
    return %c0_i32, %c0_i32_0 : i32, i32
  }
  func.func @transform_8(%arg0: i32) -> (i32, i32) {
    %c0_i32 = arith.constant 0 : i32
    %c0_i32_0 = arith.constant 0 : i32
    %c0_i32_1 = arith.constant 0 : i32
    return %c0_i32, %c0_i32_0 : i32, i32
  }
  func.func @transform_9(%arg0: i32) -> (i32, i32) {
    %c0_i32 = arith.constant 0 : i32
    %c0_i32_0 = arith.constant 0 : i32
    %c0_i32_1 = arith.constant 0 : i32
    return %c0_i32, %c0_i32_0 : i32, i32
  }
  func.func @transform_10(%arg0: i32) -> (i32, i32) {
    %c0_i32 = arith.constant 0 : i32
    %c0_i32_0 = arith.constant 0 : i32
    %c0_i32_1 = arith.constant 0 : i32
    return %c0_i32, %c0_i32_0 : i32, i32
  }
  func.func @transform_11(%arg0: i32) -> (i32, i32) {
    %c0_i32 = arith.constant 0 : i32
    %c0_i32_0 = arith.constant 0 : i32
    %c0_i32_1 = arith.constant 0 : i32
    return %c0_i32, %c0_i32_0 : i32, i32
  }
  func.func @transform_12(%arg0: i32) -> (i32, i32) {
    %c0_i32 = arith.constant 0 : i32
    %c0_i32_0 = arith.constant 0 : i32
    %c0_i32_1 = arith.constant 0 : i32
    return %c0_i32, %c0_i32_0 : i32, i32
  }
  func.func @transform_13(%arg0: i32) -> (i32, i32, i32) {
    %c0_i32 = arith.constant 0 : i32
    %c0_i32_0 = arith.constant 0 : i32
    %c0_i32_1 = arith.constant 0 : i32
    return %arg0, %c0_i32, %c0_i32_0 : i32, i32, i32
  }
}

</mosaic_0001>

<llo_original>
// kernel: tpu_custom_call.1
$region0: #{tpu_custom_call.1}
  #allocation0 [shape = 'u32[]', space=smem, size = 0x4, offset = 0x4, fixed_abs, tag = 'smem constant byte address 0x4 - core index']
  #allocation1 [shape = 'u32[144,128]{1,0:T(1,128)}', space=vmem, size = 0x12000, scoped, tag = 'internal scratch']
  %s0 = inlined_call_operand.hbm [shape: f32[2,8,32], index: 0, kind: input, shape index: {}]
  %s1 = inlined_call_operand.hbm [shape: f32[1,32], index: 1, kind: input, shape index: {}]
  %s2 = inlined_call_operand.hbm [shape: f32[1,32], index: 2, kind: input, shape index: {}]
  %s3 = inlined_call_operand.hbm [shape: bf16[32,96], index: 3, kind: input, shape index: {}]
  %s4 = inlined_call_operand.hbm [shape: f32[1,96], index: 4, kind: input, shape index: {}]
  %s5 = inlined_call_operand.hbm [shape: bf16[32,32], index: 5, kind: input, shape index: {}]
  %s6 = inlined_call_operand.hbm [shape: f32[1,32], index: 6, kind: input, shape index: {}]
  %s7 = inlined_call_operand.hbm [shape: f32[1,32], index: 7, kind: input, shape index: {}]
  %s8 = inlined_call_operand.hbm [shape: f32[1,32], index: 8, kind: input, shape index: {}]
  %s9 = inlined_call_operand.hbm [shape: bf16[32,128], index: 9, kind: input, shape index: {}]
  %s10 = inlined_call_operand.hbm [shape: f32[1,128], index: 10, kind: input, shape index: {}]
  %s11 = inlined_call_operand.hbm [shape: bf16[128,32], index: 11, kind: input, shape index: {}]
  %s12 = inlined_call_operand.hbm [shape: f32[1,32], index: 12, kind: input, shape index: {}]
  %s13 = inlined_call_operand.hbm [shape: f32[2,8,32], index: 13, kind: output, shape index: {}]
  %s14 = sld [smem:[#allocation0]]
  $region137: #{tpu_custom_call.1} parent=0
    _
  %s16 = ssub.s32 1, %s14
  %s17 = scalar_select 0, %s16, %s14
  $region1: #{tpu_custom_call.1} parent=0
    #allocation2 [shape = 'u8[8192]{0}', space=vmem, size = 0x2000, scoped, tag = 'input window, operand 0']
    #allocation3 [shape = 's32[2]{0}', space=sflag, size = 0x8, scoped, tag = 'scoped memory for tpu_custom_call.1']
    #allocation4 [shape = 's32[2]{0}', space=sflag, size = 0x8, scoped, tag = 'scoped memory for tpu_custom_call.1']
    #allocation5 [shape = 'u8[512]{0}', space=vmem, size = 0x400, scoped, tag = 'input window, operand 1, single buffered']
    #allocation6 [shape = 's32[1]{0}', space=sflag, size = 0x4, scoped, tag = 'scoped memory for tpu_custom_call.1']
    #allocation7 [shape = 'u8[512]{0}', space=vmem, size = 0x400, scoped, tag = 'input window, operand 2, single buffered']
    #allocation8 [shape = 'u8[8192]{0}', space=vmem, size = 0x2000, scoped, tag = 'input window, operand 3, single buffered']
    #allocation9 [shape = 's32[1]{0}', space=sflag, size = 0x4, scoped, tag = 'scoped memory for tpu_custom_call.1']
    #allocation10 [shape = 'u8[512]{0}', space=vmem, size = 0x400, scoped, tag = 'input window, operand 4, single buffered']
    #allocation11 [shape = 'u8[8192]{0}', space=vmem, size = 0x2000, scoped, tag = 'input window, operand 5, single buffered']
    #allocation12 [shape = 's32[1]{0}', space=sflag, size = 0x4, scoped, tag = 'scoped memory for tpu_custom_call.1']
    #allocation13 [shape = 'u8[512]{0}', space=vmem, size = 0x400, scoped, tag = 'input window, operand 6, single buffered']
    #allocation14 [shape = 'u8[512]{0}', space=vmem, size = 0x400, scoped, tag = 'input window, operand 7, single buffered']
    #allocation15 [shape = 's32[1]{0}', space=sflag, size = 0x4, scoped, tag = 'scoped memory for tpu_custom_call.1']
    #allocation16 [shape = 'u8[512]{0}', space=vmem, size = 0x400, scoped, tag = 'input window, operand 8, single buffered']
    #allocation17 [shape = 'u8[8192]{0}', space=vmem, size = 0x2000, scoped, tag = 'input window, operand 9, single buffered']
    #allocation18 [shape = 's32[1]{0}', space=sflag, size = 0x4, scoped, tag = 'scoped memory for tpu_custom_call.1']
    #allocation19 [shape = 'u8[512]{0}', space=vmem, size = 0x400, scoped, tag = 'input window, operand 10, single buffered']
    #allocation20 [shape = 'u8[32768]{0}', space=vmem, size = 0x8000, scoped, tag = 'input window, operand 11, single buffered']
    #allocation21 [shape = 's32[1]{0}', space=sflag, size = 0x4, scoped, tag = 'scoped memory for tpu_custom_call.1']
    #allocation22 [shape = 'u8[512]{0}', space=vmem, size = 0x400, scoped, tag = 'input window, operand 12, single buffered']
    #allocation23 [shape = 'u8[8192]{0}', space=vmem, size = 0x2000, scoped, tag = 'output window, operand 0']
    %18 = vsyncpa [#allocation3], 0
    %s19 = scalar_lea.sflag [#allocation3], 1
    %20 = vsyncpa %s19, 0
    %21 = vsyncpa [#allocation6], 0
    %22 = vsyncpa [#allocation9], 0
    %23 = vsyncpa [#allocation12], 0
    %24 = vsyncpa [#allocation15], 0
    %25 = vsyncpa [#allocation18], 0
    %26 = vsyncpa [#allocation21], 0
    %27 = vsyncpa [#allocation4], 0
    %s28 = scalar_lea.sflag [#allocation4], 1
    %29 = vsyncpa %s28, 0
    loop: start=0, step=1, limit=4
    $region2: #{tpu_custom_call.1} parent=1 // loop_pre_header
      _
    $region3: #{tpu_custom_call.1} parent=1 // loop_header
      %s31 = sphi 0, %s35
      %p32 = scmp.ge.s32.totalorder %s31, 4
      %s41 = sphi 0, %s43
      %s44 = sphi 0, %s41
      %s45 = sphi 0, %s44
      %s61 = sphi 0, %s45
      %s65 = sphi 0, %s65
      %s67 = sphi 0, %s65
      %s68 = sphi 0, %s67
      %s82 = sphi 0, %s68
      %s86 = sphi 0, %s86
      %s88 = sphi 0, %s86
      %s89 = sphi 0, %s88
      %s103 = sphi 0, %s89
      %s107 = sphi 0, %s107
      %s109 = sphi 0, %s107
      %s110 = sphi 0, %s109
      %s124 = sphi 0, %s110
      %s128 = sphi 0, %s128
      %s130 = sphi 0, %s128
      %s131 = sphi 0, %s130
      %s145 = sphi 0, %s131
      %s149 = sphi 0, %s149
      %s151 = sphi 0, %s149
      %s152 = sphi 0, %s151
      %s166 = sphi 0, %s152
      %s170 = sphi 0, %s170
      %s172 = sphi 0, %s170
      %s173 = sphi 0, %s172
      %s187 = sphi 0, %s173
      %s191 = sphi 0, %s191
      %s193 = sphi 0, %s191
      %s194 = sphi 0, %s193
      %s208 = sphi 0, %s194
      %s212 = sphi 0, %s212
      %s214 = sphi 0, %s212
      %s215 = sphi 0, %s214
      %s229 = sphi 0, %s215
      %s233 = sphi 0, %s233
      %s235 = sphi 0, %s233
      %s236 = sphi 0, %s235
      %s250 = sphi 0, %s236
      %s254 = sphi 0, %s254
      %s256 = sphi 0, %s254
      %s257 = sphi 0, %s256
      %s271 = sphi 0, %s257
      %s275 = sphi 0, %s275
      %s277 = sphi 0, %s275
      %s278 = sphi 0, %s277
      %s292 = sphi 0, %s278
      %s296 = sphi 0, %s296
      %s298 = sphi 0, %s296
      %s299 = sphi 0, %s298
      %s313 = sphi 0, %s299
      %s319 = sphi 0, %s321
      %s322 = sphi 0, %s319
      %s323 = sphi 0, %s322
      %s339 = sphi 0, %s323
    $region4: #{tpu_custom_call.1} parent=1 // loop_header_branch
      %34 = sbr.rel (%p32) target = $region8
    $region5: #{tpu_custom_call.1} parent=1 // loop_body
      %s36 = ssub.s32 %s31, 1
      %s37 = ssub.s32 %s31, 2
      %s38 = sadd.s32 %s31, 1
      %s39 = ssub.s32 %s31, %s38
      %p40 = scmp.eq.s32.totalorder %s39, 0
      %s42 = sadd.s32 %s41, 1
      %s43 = scalar_select %p40, %s41, %s42
      %p46 = pneg %p40
      %p47 = scmp.eq.s32.totalorder %s31, 1
      %p48 = por %p46, %p47
      %p49 = scmp.ne.s32.totalorder %s41, %s44
      %p50 = scmp.eq.s32.totalorder %s31, 0
      %p51 = por %p49, %p50
      %p52 = scmp.ne.s32.totalorder %s41, %s44
      %p53 = scmp.eq.s32.totalorder %s36, 1
      %p54 = por %p52, %p53
      %p55 = scmp.ne.s32.totalorder %s44, %s45
      %p56 = scmp.eq.s32.totalorder %s36, 0
      %p57 = por %p55, %p56
      %p58 = scmp.ne.s32.totalorder %s44, %s45
      %p59 = scmp.eq.s32.totalorder %s37, 1
      %p60 = por %p58, %p59
      %p62 = scmp.ne.s32.totalorder %s45, %s61
      %p63 = scmp.eq.s32.totalorder %s37, 0
      %p64 = por %p62, %p63
      %s66 = sadd.s32 %s65, 1
      %p69 = scmp.eq.s32.totalorder %s31, 1
      %p70 = scmp.ne.s32.totalorder %s65, %s67
      %p71 = scmp.eq.s32.totalorder %s31, 0
      %p72 = por %p70, %p71
      %p73 = scmp.ne.s32.totalorder %s65, %s67
      %p74 = scmp.eq.s32.totalorder %s36, 1
      %p75 = por %p73, %p74
      %p76 = scmp.ne.s32.totalorder %s67, %s68
      %p77 = scmp.eq.s32.totalorder %s36, 0
      %p78 = por %p76, %p77
      %p79 = scmp.ne.s32.totalorder %s67, %s68
      %p80 = scmp.eq.s32.totalorder %s37, 1
      %p81 = por %p79, %p80
      %p83 = scmp.ne.s32.totalorder %s68, %s82
      %p84 = scmp.eq.s32.totalorder %s37, 0
      %p85 = por %p83, %p84
      %s87 = sadd.s32 %s86, 1
      %p90 = scmp.eq.s32.totalorder %s31, 1
      %p91 = scmp.ne.s32.totalorder %s86, %s88
      %p92 = scmp.eq.s32.totalorder %s31, 0
      %p93 = por %p91, %p92
      %p94 = scmp.ne.s32.totalorder %s86, %s88
      %p95 = scmp.eq.s32.totalorder %s36, 1
      %p96 = por %p94, %p95
      %p97 = scmp.ne.s32.totalorder %s88, %s89
      %p98 = scmp.eq.s32.totalorder %s36, 0
      %p99 = por %p97, %p98
      %p100 = scmp.ne.s32.totalorder %s88, %s89
      %p101 = scmp.eq.s32.totalorder %s37, 1
      %p102 = por %p100, %p101
      %p104 = scmp.ne.s32.totalorder %s89, %s103
      %p105 = scmp.eq.s32.totalorder %s37, 0
      %p106 = por %p104, %p105
      %s108 = sadd.s32 %s107, 1
      %p111 = scmp.eq.s32.totalorder %s31, 1
      %p112 = scmp.ne.s32.totalorder %s107, %s109
      %p113 = scmp.eq.s32.totalorder %s31, 0
      %p114 = por %p112, %p113
      %p115 = scmp.ne.s32.totalorder %s107, %s109
      %p116 = scmp.eq.s32.totalorder %s36, 1
      %p117 = por %p115, %p116
      %p118 = scmp.ne.s32.totalorder %s109, %s110
      %p119 = scmp.eq.s32.totalorder %s36, 0
      %p120 = por %p118, %p119
      %p121 = scmp.ne.s32.totalorder %s109, %s110
      %p122 = scmp.eq.s32.totalorder %s37, 1
      %p123 = por %p121, %p122
      %p125 = scmp.ne.s32.totalorder %s110, %s124
      %p126 = scmp.eq.s32.totalorder %s37, 0
      %p127 = por %p125, %p126
      %s129 = sadd.s32 %s128, 1
      %p132 = scmp.eq.s32.totalorder %s31, 1
      %p133 = scmp.ne.s32.totalorder %s128, %s130
      %p134 = scmp.eq.s32.totalorder %s31, 0
      %p135 = por %p133, %p134
      %p136 = scmp.ne.s32.totalorder %s128, %s130
      %p137 = scmp.eq.s32.totalorder %s36, 1
      %p138 = por %p136, %p137
      %p139 = scmp.ne.s32.totalorder %s130, %s131
      %p140 = scmp.eq.s32.totalorder %s36, 0
      %p141 = por %p139, %p140
      %p142 = scmp.ne.s32.totalorder %s130, %s131
      %p143 = scmp.eq.s32.totalorder %s37, 1
      %p144 = por %p142, %p143
      %p146 = scmp.ne.s32.totalorder %s131, %s145
      %p147 = scmp.eq.s32.totalorder %s37, 0
      %p148 = por %p146, %p147
      %s150 = sadd.s32 %s149, 1
      %p153 = scmp.eq.s32.totalorder %s31, 1
      %p154 = scmp.ne.s32.totalorder %s149, %s151
      %p155 = scmp.eq.s32.totalorder %s31, 0
      %p156 = por %p154, %p155
      %p157 = scmp.ne.s32.totalorder %s149, %s151
      %p158 = scmp.eq.s32.totalorder %s36, 1
      %p159 = por %p157, %p158
      %p160 = scmp.ne.s32.totalorder %s151, %s152
      %p161 = scmp.eq.s32.totalorder %s36, 0
      %p162 = por %p160, %p161
      %p163 = scmp.ne.s32.totalorder %s151, %s152
      %p164 = scmp.eq.s32.totalorder %s37, 1
      %p165 = por %p163, %p164
      %p167 = scmp.ne.s32.totalorder %s152, %s166
      %p168 = scmp.eq.s32.totalorder %s37, 0
      %p169 = por %p167, %p168
      %s171 = sadd.s32 %s170, 1
      %p174 = scmp.eq.s32.totalorder %s31, 1
      %p175 = scmp.ne.s32.totalorder %s170, %s172
      %p176 = scmp.eq.s32.totalorder %s31, 0
      %p177 = por %p175, %p176
      %p178 = scmp.ne.s32.totalorder %s170, %s172
      %p179 = scmp.eq.s32.totalorder %s36, 1
      %p180 = por %p178, %p179
      %p181 = scmp.ne.s32.totalorder %s172, %s173
      %p182 = scmp.eq.s32.totalorder %s36, 0
      %p183 = por %p181, %p182
      %p184 = scmp.ne.s32.totalorder %s172, %s173
      %p185 = scmp.eq.s32.totalorder %s37, 1
      %p186 = por %p184, %p185
      %p188 = scmp.ne.s32.totalorder %s173, %s187
      %p189 = scmp.eq.s32.totalorder %s37, 0
      %p190 = por %p188, %p189
      %s192 = sadd.s32 %s191, 1
      %p195 = scmp.eq.s32.totalorder %s31, 1
      %p196 = scmp.ne.s32.totalorder %s191, %s193
      %p197 = scmp.eq.s32.totalorder %s31, 0
      %p198 = por %p196, %p197
      %p199 = scmp.ne.s32.totalorder %s191, %s193
      %p200 = scmp.eq.s32.totalorder %s36, 1
      %p201 = por %p199, %p200
      %p202 = scmp.ne.s32.totalorder %s193, %s194
      %p203 = scmp.eq.s32.totalorder %s36, 0
      %p204 = por %p202, %p203
      %p205 = scmp.ne.s32.totalorder %s193, %s194
      %p206 = scmp.eq.s32.totalorder %s37, 1
      %p207 = por %p205, %p206
      %p209 = scmp.ne.s32.totalorder %s194, %s208
      %p210 = scmp.eq.s32.totalorder %s37, 0
      %p211 = por %p209, %p210
      %s213 = sadd.s32 %s212, 1
      %p216 = scmp.eq.s32.totalorder %s31, 1
      %p217 = scmp.ne.s32.totalorder %s212, %s214
      %p218 = scmp.eq.s32.totalorder %s31, 0
      %p219 = por %p217, %p218
      %p220 = scmp.ne.s32.totalorder %s212, %s214
      %p221 = scmp.eq.s32.totalorder %s36, 1
      %p222 = por %p220, %p221
      %p223 = scmp.ne.s32.totalorder %s214, %s215
      %p224 = scmp.eq.s32.totalorder %s36, 0
      %p225 = por %p223, %p224
      %p226 = scmp.ne.s32.totalorder %s214, %s215
      %p227 = scmp.eq.s32.totalorder %s37, 1
      %p228 = por %p226, %p227
      %p230 = scmp.ne.s32.totalorder %s215, %s229
      %p231 = scmp.eq.s32.totalorder %s37, 0
      %p232 = por %p230, %p231
      %s234 = sadd.s32 %s233, 1
      %p237 = scmp.eq.s32.totalorder %s31, 1
      %p238 = scmp.ne.s32.totalorder %s233, %s235
      %p239 = scmp.eq.s32.totalorder %s31, 0
      %p240 = por %p238, %p239
      %p241 = scmp.ne.s32.totalorder %s233, %s235
      %p242 = scmp.eq.s32.totalorder %s36, 1
      %p243 = por %p241, %p242
      %p244 = scmp.ne.s32.totalorder %s235, %s236
      %p245 = scmp.eq.s32.totalorder %s36, 0
      %p246 = por %p244, %p245
      %p247 = scmp.ne.s32.totalorder %s235, %s236
      %p248 = scmp.eq.s32.totalorder %s37, 1
      %p249 = por %p247, %p248
      %p251 = scmp.ne.s32.totalorder %s236, %s250
      %p252 = scmp.eq.s32.totalorder %s37, 0
      %p253 = por %p251, %p252
      %s255 = sadd.s32 %s254, 1
      %p258 = scmp.eq.s32.totalorder %s31, 1
      %p259 = scmp.ne.s32.totalorder %s254, %s256
      %p260 = scmp.eq.s32.totalorder %s31, 0
      %p261 = por %p259, %p260
      %p262 = scmp.ne.s32.totalorder %s254, %s256
      %p263 = scmp.eq.s32.totalorder %s36, 1
      %p264 = por %p262, %p263
      %p265 = scmp.ne.s32.totalorder %s256, %s257
      %p266 = scmp.eq.s32.totalorder %s36, 0
      %p267 = por %p265, %p266
      %p268 = scmp.ne.s32.totalorder %s256, %s257
      %p269 = scmp.eq.s32.totalorder %s37, 1
      %p270 = por %p268, %p269
      %p272 = scmp.ne.s32.totalorder %s257, %s271
      %p273 = scmp.eq.s32.totalorder %s37, 0
      %p274 = por %p272, %p273
      %s276 = sadd.s32 %s275, 1
      %p279 = scmp.eq.s32.totalorder %s31, 1
      %p280 = scmp.ne.s32.totalorder %s275, %s277
      %p281 = scmp.eq.s32.totalorder %s31, 0
      %p282 = por %p280, %p281
      %p283 = scmp.ne.s32.totalorder %s275, %s277
      %p284 = scmp.eq.s32.totalorder %s36, 1
      %p285 = por %p283, %p284
      %p286 = scmp.ne.s32.totalorder %s277, %s278
      %p287 = scmp.eq.s32.totalorder %s36, 0
      %p288 = por %p286, %p287
      %p289 = scmp.ne.s32.totalorder %s277, %s278
      %p290 = scmp.eq.s32.totalorder %s37, 1
      %p291 = por %p289, %p290
      %p293 = scmp.ne.s32.totalorder %s278, %s292
      %p294 = scmp.eq.s32.totalorder %s37, 0
      %p295 = por %p293, %p294
      %s297 = sadd.s32 %s296, 1
      %p300 = scmp.eq.s32.totalorder %s31, 1
      %p301 = scmp.ne.s32.totalorder %s296, %s298
      %p302 = scmp.eq.s32.totalorder %s31, 0
      %p303 = por %p301, %p302
      %p304 = scmp.ne.s32.totalorder %s296, %s298
      %p305 = scmp.eq.s32.totalorder %s36, 1
      %p306 = por %p304, %p305
      %p307 = scmp.ne.s32.totalorder %s298, %s299
      %p308 = scmp.eq.s32.totalorder %s36, 0
      %p309 = por %p307, %p308
      %p310 = scmp.ne.s32.totalorder %s298, %s299
      %p311 = scmp.eq.s32.totalorder %s37, 1
      %p312 = por %p310, %p311
      %p314 = scmp.ne.s32.totalorder %s299, %s313
      %p315 = scmp.eq.s32.totalorder %s37, 0
      %p316 = por %p314, %p315
      %s317 = ssub.s32 %s31, %s38
      %p318 = scmp.eq.s32.totalorder %s317, 0
      %s320 = sadd.s32 %s319, 1
      %s321 = scalar_select %p318, %s319, %s320
      %p324 = pneg %p318
      %p325 = scmp.eq.s32.totalorder %s31, 1
      %p326 = por %p324, %p325
      %p327 = scmp.ne.s32.totalorder %s319, %s322
      %p328 = scmp.eq.s32.totalorder %s31, 0
      %p329 = por %p327, %p328
      %p330 = scmp.ne.s32.totalorder %s319, %s322
      %p331 = scmp.eq.s32.totalorder %s36, 1
      %p332 = por %p330, %p331
      %p333 = scmp.ne.s32.totalorder %s322, %s323
      %p334 = scmp.eq.s32.totalorder %s36, 0
      %p335 = por %p333, %p334
      %p336 = scmp.ne.s32.totalorder %s322, %s323
      %p337 = scmp.eq.s32.totalorder %s37, 1
      %p338 = por %p336, %p337
      %p340 = scmp.ne.s32.totalorder %s323, %s339
      %p341 = scmp.eq.s32.totalorder %s37, 0
      %p342 = por %p340, %p341
      %p343 = scmp.le.s32.totalorder 1, %s31
      %p344 = scmp.lt.s32.totalorder %s31, 3
      %p345 = pnand %p343, %p344
      %p346 = pneg %p345
      // Predicated region
      $region9: #{tpu_custom_call.1} parent=5 // pred_check
        _
      $region10: #{tpu_custom_call.1} parent=5 // pred_check_branch
        %348 = sbr.rel (%p345) target = $region12
      $region11: #{tpu_custom_call.1} parent=5 // pred_region
        %s349 = ssub.s32 %s31, 1
        // Predicated region
        $region13: #{tpu_custom_call.1} parent=11 // pred_check
          %p350 = pneg %p78
        $region14: #{tpu_custom_call.1} parent=11 // pred_check_branch
          %352 = sbr.rel (%p350) target = $region16
        $region15: #{tpu_custom_call.1} parent=11 // pred_region
          %s354 = ssub.s32 16, 16
          %355 = vsyncadd [#allocation6], %s354
          %s357 = sshll.u32 [#allocation5], 4
          %s358 = int_to_ptr.vmem [resolvable:$true] %s357
          %360 = dma.hbm_to_vmem [thread:$0]  %s1, 16, %s358, [#allocation6]
        $region16: #{tpu_custom_call.1} parent=11 // pred_fallthru
          _
        // Predicated region
        $region17: #{tpu_custom_call.1} parent=11 // pred_check
          %p361 = pneg %p99
        $region18: #{tpu_custom_call.1} parent=11 // pred_check_branch
          %363 = sbr.rel (%p361) target = $region20
        $region19: #{tpu_custom_call.1} parent=11 // pred_region
          %s365 = ssub.s32 16, 16
          %366 = vsyncadd [#allocation6], %s365
          %s368 = sshll.u32 [#allocation7], 4
          %s369 = int_to_ptr.vmem [resolvable:$true] %s368
          %371 = dma.hbm_to_vmem [thread:$0]  %s2, 16, %s369, [#allocation6]
        $region20: #{tpu_custom_call.1} parent=11 // pred_fallthru
          _
        // Predicated region
        $region21: #{tpu_custom_call.1} parent=11 // pred_check
          %p372 = pneg %p120
        $region22: #{tpu_custom_call.1} parent=11 // pred_check_branch
          %374 = sbr.rel (%p372) target = $region24
        $region23: #{tpu_custom_call.1} parent=11 // pred_region
          %s376 = ssub.s32 256, 256
          %377 = vsyncadd [#allocation9], %s376
          %s378 = sshll.u32 [#allocation8], 4
          %s379 = int_to_ptr.vmem [resolvable:$true] %s378
          %384 = dma.hbm_to_vmem [thread:$0]  %s3, 256, %s379, [#allocation9], 64, 64, 4
        $region24: #{tpu_custom_call.1} parent=11 // pred_fallthru
          _
        // Predicated region
        $region25: #{tpu_custom_call.1} parent=11 // pred_check
          %p385 = pneg %p141
        $region26: #{tpu_custom_call.1} parent=11 // pred_check_branch
          %387 = sbr.rel (%p385) target = $region28
        $region27: #{tpu_custom_call.1} parent=11 // pred_region
          %s389 = ssub.s32 16, 16
          %390 = vsyncadd [#allocation9], %s389
          %s392 = sshll.u32 [#allocation10], 4
          %s393 = int_to_ptr.vmem [resolvable:$true] %s392
          %395 = dma.hbm_to_vmem [thread:$0]  %s4, 16, %s393, [#allocation9]
        $region28: #{tpu_custom_call.1} parent=11 // pred_fallthru
          _
        // Predicated region
        $region29: #{tpu_custom_call.1} parent=11 // pred_check
          %p396 = pneg %p162
        $region30: #{tpu_custom_call.1} parent=11 // pred_check_branch
          %398 = sbr.rel (%p396) target = $region32
        $region31: #{tpu_custom_call.1} parent=11 // pred_region
          %s400 = ssub.s32 256, 256
          %401 = vsyncadd [#allocation12], %s400
          %s402 = sshll.u32 [#allocation11], 4
          %s403 = int_to_ptr.vmem [resolvable:$true] %s402
          %408 = dma.hbm_to_vmem [thread:$0]  %s5, 256, %s403, [#allocation12], 64, 64, 4
        $region32: #{tpu_custom_call.1} parent=11 // pred_fallthru
          _
        // Predicated region
        $region33: #{tpu_custom_call.1} parent=11 // pred_check
          %p409 = pneg %p183
        $region34: #{tpu_custom_call.1} parent=11 // pred_check_branch
          %411 = sbr.rel (%p409) target = $region36
        $region35: #{tpu_custom_call.1} parent=11 // pred_region
          %s413 = ssub.s32 16, 16
          %414 = vsyncadd [#allocation12], %s413
          %s416 = sshll.u32 [#allocation13], 4
          %s417 = int_to_ptr.vmem [resolvable:$true] %s416
          %419 = dma.hbm_to_vmem [thread:$0]  %s6, 16, %s417, [#allocation12]
        $region36: #{tpu_custom_call.1} parent=11 // pred_fallthru
          _
        // Predicated region
        $region37: #{tpu_custom_call.1} parent=11 // pred_check
          %p420 = pneg %p204
        $region38: #{tpu_custom_call.1} parent=11 // pred_check_branch
          %422 = sbr.rel (%p420) target = $region40
        $region39: #{tpu_custom_call.1} parent=11 // pred_region
          %s424 = ssub.s32 16, 16
          %425 = vsyncadd [#allocation15], %s424
          %s427 = sshll.u32 [#allocation14], 4
          %s428 = int_to_ptr.vmem [resolvable:$true] %s427
          %430 = dma.hbm_to_vmem [thread:$0]  %s7, 16, %s428, [#allocation15]
        $region40: #{tpu_custom_call.1} parent=11 // pred_fallthru
          _
        // Predicated region
        $region41: #{tpu_custom_call.1} parent=11 // pred_check
          %p431 = pneg %p225
        $region42: #{tpu_custom_call.1} parent=11 // pred_check_branch
          %433 = sbr.rel (%p431) target = $region44
        $region43: #{tpu_custom_call.1} parent=11 // pred_region
          %s435 = ssub.s32 16, 16
          %436 = vsyncadd [#allocation15], %s435
          %s438 = sshll.u32 [#allocation16], 4
          %s439 = int_to_ptr.vmem [resolvable:$true] %s438
          %441 = dma.hbm_to_vmem [thread:$0]  %s8, 16, %s439, [#allocation15]
        $region44: #{tpu_custom_call.1} parent=11 // pred_fallthru
          _
        // Predicated region
        $region45: #{tpu_custom_call.1} parent=11 // pred_check
          %p442 = pneg %p246
        $region46: #{tpu_custom_call.1} parent=11 // pred_check_branch
          %444 = sbr.rel (%p442) target = $region48
        $region47: #{tpu_custom_call.1} parent=11 // pred_region
          %s446 = ssub.s32 256, 256
          %447 = vsyncadd [#allocation18], %s446
          %s448 = sshll.u32 [#allocation17], 4
          %s449 = int_to_ptr.vmem [resolvable:$true] %s448
          %454 = dma.hbm_to_vmem [thread:$0]  %s9, 256, %s449, [#allocation18], 64, 64, 4
        $region48: #{tpu_custom_call.1} parent=11 // pred_fallthru
          _
        // Predicated region
        $region49: #{tpu_custom_call.1} parent=11 // pred_check
          %p455 = pneg %p267
        $region50: #{tpu_custom_call.1} parent=11 // pred_check_branch
          %457 = sbr.rel (%p455) target = $region52
        $region51: #{tpu_custom_call.1} parent=11 // pred_region
          %s459 = ssub.s32 16, 16
          %460 = vsyncadd [#allocation18], %s459
          %s462 = sshll.u32 [#allocation19], 4
          %s463 = int_to_ptr.vmem [resolvable:$true] %s462
          %465 = dma.hbm_to_vmem [thread:$0]  %s10, 16, %s463, [#allocation18]
        $region52: #{tpu_custom_call.1} parent=11 // pred_fallthru
          _
        // Predicated region
        $region53: #{tpu_custom_call.1} parent=11 // pred_check
          %p466 = pneg %p288
        $region54: #{tpu_custom_call.1} parent=11 // pred_check_branch
          %468 = sbr.rel (%p466) target = $region56
        $region55: #{tpu_custom_call.1} parent=11 // pred_region
          %s470 = ssub.s32 1024, 1024
          %471 = vsyncadd [#allocation21], %s470
          %s472 = sshll.u32 [#allocation20], 4
          %s473 = int_to_ptr.vmem [resolvable:$true] %s472
          %478 = dma.hbm_to_vmem [thread:$0]  %s11, 1024, %s473, [#allocation21], 64, 64, 4
        $region56: #{tpu_custom_call.1} parent=11 // pred_fallthru
          _
        // Predicated region
        $region57: #{tpu_custom_call.1} parent=11 // pred_check
          %p479 = pneg %p309
        $region58: #{tpu_custom_call.1} parent=11 // pred_check_branch
          %481 = sbr.rel (%p479) target = $region60
        $region59: #{tpu_custom_call.1} parent=11 // pred_region
          %s483 = ssub.s32 16, 16
          %484 = vsyncadd [#allocation21], %s483
          %s486 = sshll.u32 [#allocation22], 4
          %s487 = int_to_ptr.vmem [resolvable:$true] %s486
          %489 = dma.hbm_to_vmem [thread:$0]  %s12, 16, %s487, [#allocation21]
        $region60: #{tpu_custom_call.1} parent=11 // pred_fallthru
          _
      $region12: #{tpu_custom_call.1} parent=5 // pred_fallthru
        _
      %p490 = scmp.lt.s32.totalorder %s31, 2
      // Predicated region
      $region61: #{tpu_custom_call.1} parent=5 // pred_check
        %p491 = pneg %p490
      $region62: #{tpu_custom_call.1} parent=5 // pred_check_branch
        %493 = sbr.rel (%p491) target = $region64
      $region63: #{tpu_custom_call.1} parent=5 // pred_region
        // Predicated region
        $region65: #{tpu_custom_call.1} parent=63 // pred_check
          %p494 = pneg %p51
        $region66: #{tpu_custom_call.1} parent=63 // pred_check_branch
          %496 = sbr.rel (%p494) target = $region68
        $region67: #{tpu_custom_call.1} parent=63 // pred_region
          %s497 = sand.u32 %s41, 1
          %s498 = scalar_lea.sflag [#allocation3], %s497
          %s499 = sand.u32 %s41, 1
          %s500 = smul.addr %s499, 8
          %s501 = scalar_lea.vmem [#allocation2], %s500
          %s503 = ssub.s32 128, 128
          %504 = vsyncadd %s498, %s503
          %s505 = smul.addr %s31, 128
          %s506 = scalar_lea.hbm %s0, %s505
          %s508 = sshll.u32 %s501, 4
          %s509 = int_to_ptr.vmem [resolvable:$true] %s508
          %511 = dma.hbm_to_vmem [thread:$0]  %s506, 128, %s509, %s498
        $region68: #{tpu_custom_call.1} parent=63 // pred_fallthru
          _
      $region64: #{tpu_custom_call.1} parent=5 // pred_fallthru
        _
      %p512 = scmp.le.s32.totalorder 1, %s31
      %p513 = scmp.lt.s32.totalorder %s31, 3
      %p514 = pnand %p512, %p513
      %p515 = pneg %p514
      // Predicated region
      $region69: #{tpu_custom_call.1} parent=5 // pred_check
        _
      $region70: #{tpu_custom_call.1} parent=5 // pred_check_branch
        %517 = sbr.rel (%p514) target = $region72
      $region71: #{tpu_custom_call.1} parent=5 // pred_region
        %s518 = ssub.s32 %s31, 1
        %s519 = sand.u32 %s44, 1
        %s520 = scalar_lea.sflag [#allocation3], %s519
        %s521 = sand.u32 %s44, 1
        %s522 = smul.addr %s521, 8
        %s523 = scalar_lea.vmem [#allocation2], %s522
        // Predicated region
        $region73: #{tpu_custom_call.1} parent=71 // pred_check
          %p524 = pneg %p57
        $region74: #{tpu_custom_call.1} parent=71 // pred_check_branch
          %526 = sbr.rel (%p524) target = $region76
        $region75: #{tpu_custom_call.1} parent=71 // pred_region
          %527 = dma.done %s520, 128
        $region76: #{tpu_custom_call.1} parent=71 // pred_fallthru
          _
        // Predicated region
        $region77: #{tpu_custom_call.1} parent=71 // pred_check
          %p528 = pneg %p78
        $region78: #{tpu_custom_call.1} parent=71 // pred_check_branch
          %530 = sbr.rel (%p528) target = $region80
        $region79: #{tpu_custom_call.1} parent=71 // pred_region
          %531 = dma.done [#allocation6], 16
        $region80: #{tpu_custom_call.1} parent=71 // pred_fallthru
          _
        // Predicated region
        $region81: #{tpu_custom_call.1} parent=71 // pred_check
          %p532 = pneg %p99
        $region82: #{tpu_custom_call.1} parent=71 // pred_check_branch
          %534 = sbr.rel (%p532) target = $region84
        $region83: #{tpu_custom_call.1} parent=71 // pred_region
          %535 = dma.done [#allocation6], 16
        $region84: #{tpu_custom_call.1} parent=71 // pred_fallthru
          _
        // Predicated region
        $region85: #{tpu_custom_call.1} parent=71 // pred_check
          %p536 = pneg %p120
        $region86: #{tpu_custom_call.1} parent=71 // pred_check_branch
          %538 = sbr.rel (%p536) target = $region88
        $region87: #{tpu_custom_call.1} parent=71 // pred_region
          %539 = dma.done [#allocation9], 256
        $region88: #{tpu_custom_call.1} parent=71 // pred_fallthru
          _
        // Predicated region
        $region89: #{tpu_custom_call.1} parent=71 // pred_check
          %p540 = pneg %p141
        $region90: #{tpu_custom_call.1} parent=71 // pred_check_branch
          %542 = sbr.rel (%p540) target = $region92
        $region91: #{tpu_custom_call.1} parent=71 // pred_region
          %543 = dma.done [#allocation9], 16
        $region92: #{tpu_custom_call.1} parent=71 // pred_fallthru
          _
        // Predicated region
        $region93: #{tpu_custom_call.1} parent=71 // pred_check
          %p544 = pneg %p162
        $region94: #{tpu_custom_call.1} parent=71 // pred_check_branch
          %546 = sbr.rel (%p544) target = $region96
        $region95: #{tpu_custom_call.1} parent=71 // pred_region
          %547 = dma.done [#allocation12], 256
        $region96: #{tpu_custom_call.1} parent=71 // pred_fallthru
          _
        // Predicated region
        $region97: #{tpu_custom_call.1} parent=71 // pred_check
          %p548 = pneg %p183
        $region98: #{tpu_custom_call.1} parent=71 // pred_check_branch
          %550 = sbr.rel (%p548) target = $region100
        $region99: #{tpu_custom_call.1} parent=71 // pred_region
          %551 = dma.done [#allocation12], 16
        $region100: #{tpu_custom_call.1} parent=71 // pred_fallthru
          _
        // Predicated region
        $region101: #{tpu_custom_call.1} parent=71 // pred_check
          %p552 = pneg %p204
        $region102: #{tpu_custom_call.1} parent=71 // pred_check_branch
          %554 = sbr.rel (%p552) target = $region104
        $region103: #{tpu_custom_call.1} parent=71 // pred_region
          %555 = dma.done [#allocation15], 16
        $region104: #{tpu_custom_call.1} parent=71 // pred_fallthru
          _
        // Predicated region
        $region105: #{tpu_custom_call.1} parent=71 // pred_check
          %p556 = pneg %p225
        $region106: #{tpu_custom_call.1} parent=71 // pred_check_branch
          %558 = sbr.rel (%p556) target = $region108
        $region107: #{tpu_custom_call.1} parent=71 // pred_region
          %559 = dma.done [#allocation15], 16
        $region108: #{tpu_custom_call.1} parent=71 // pred_fallthru
          _
        // Predicated region
        $region109: #{tpu_custom_call.1} parent=71 // pred_check
          %p560 = pneg %p246
        $region110: #{tpu_custom_call.1} parent=71 // pred_check_branch
          %562 = sbr.rel (%p560) target = $region112
        $region111: #{tpu_custom_call.1} parent=71 // pred_region
          %563 = dma.done [#allocation18], 256
        $region112: #{tpu_custom_call.1} parent=71 // pred_fallthru
          _
        // Predicated region
        $region113: #{tpu_custom_call.1} parent=71 // pred_check
          %p564 = pneg %p267
        $region114: #{tpu_custom_call.1} parent=71 // pred_check_branch
          %566 = sbr.rel (%p564) target = $region116
        $region115: #{tpu_custom_call.1} parent=71 // pred_region
          %567 = dma.done [#allocation18], 16
        $region116: #{tpu_custom_call.1} parent=71 // pred_fallthru
          _
        // Predicated region
        $region117: #{tpu_custom_call.1} parent=71 // pred_check
          %p568 = pneg %p288
        $region118: #{tpu_custom_call.1} parent=71 // pred_check_branch
          %570 = sbr.rel (%p568) target = $region120
        $region119: #{tpu_custom_call.1} parent=71 // pred_region
          %571 = dma.done [#allocation21], 1024
        $region120: #{tpu_custom_call.1} parent=71 // pred_fallthru
          _
        // Predicated region
        $region121: #{tpu_custom_call.1} parent=71 // pred_check
          %p572 = pneg %p309
        $region122: #{tpu_custom_call.1} parent=71 // pred_check_branch
          %574 = sbr.rel (%p572) target = $region124
        $region123: #{tpu_custom_call.1} parent=71 // pred_region
          %575 = dma.done [#allocation21], 16
        $region124: #{tpu_custom_call.1} parent=71 // pred_fallthru
          _
        %s576 = sand.u32 %s44, 1
        %s577 = scalar_lea.sflag [#allocation3], %s576
        %s578 = sand.u32 %s44, 1
        %s579 = smul.addr %s578, 8
        %s580 = scalar_lea.vmem [#allocation2], %s579
        %p581 = pneg %p57
        %p582 = pneg %p54
        %p583 = pneg %p78
        %p584 = pneg %p75
        %p585 = pneg %p99
        %p586 = pneg %p96
        %p587 = pneg %p120
        %p588 = pneg %p117
        %p589 = pneg %p141
        %p590 = pneg %p138
        %p591 = pneg %p162
        %p592 = pneg %p159
        %p593 = pneg %p183
        %p594 = pneg %p180
        %p595 = pneg %p204
        %p596 = pneg %p201
        %p597 = pneg %p225
        %p598 = pneg %p222
        %p599 = pneg %p246
        %p600 = pneg %p243
        %p601 = pneg %p267
        %p602 = pneg %p264
        %p603 = pneg %p288
        %p604 = pneg %p285
        %p605 = pneg %p309
        %p606 = pneg %p306
        %p607 = pneg %p335
        %p608 = pneg %p332
        %s609 = sand.u32 %s322, 1
        %s610 = scalar_lea.sflag [#allocation4], %s609
        %s611 = sand.u32 %s322, 1
        %s612 = smul.addr %s611, 8
        %s613 = scalar_lea.vmem [#allocation23], %s612
        %v615 = vld [vmem:[%s523] sm:$0xff]
        %v616 = vld [vmem:[#allocation5] sm:$0x1]
        %v617 = vld [vmem:[#allocation7] sm:$0x1]
        %vm618 = vcmask 261120
        %v619 = vsel %vm618, %v615, 0.0
        %620 = vadd.xlane.f32.xlu0 %v619
        %v621 = vpop.xlane.xlu0 %620
        %v622 = vrcp.pop 32.0
        %v623 = vmul.f32 %v621, %v622
        %v624 = vsub.f32 %v615, %v623
        %v625 = vmul.f32 %v624, %v624
        %v626 = vsel %vm618, %v625, 0.0
        %627 = vadd.xlane.f32.xlu0 %v626
        %v628 = vpop.xlane.xlu0 %627
        %v629 = vmul.f32 %v628, %v622
        %v630 = vadd.f32 %v629, 1e-05
        %v631 = vrsqrt.pop %v630
        %v632 = vmul.f32 %v624, %v631
        %v634 = vlaneseq
        %v635 = vshrl.u32 %v634, 7
        %v636 = vsub.s32 0, %v635
        %v637 = vrot.slane %v616, %v636
        %v639 = vmul.f32 %v632, %v637
        %v641 = vlaneseq
        %v642 = vshrl.u32 %v641, 7
        %v643 = vsub.s32 0, %v642
        %v644 = vrot.slane %v617, %v643
        %v646 = vadd.f32 %v639, %v644
        %v647 = vpack.c.bf16 %v646, %v646
        %v648 = vld [vmem:[#allocation8] sm:$0xf]
        %v649 = vld [vmem:[#allocation8 + $0x4] sm:$0xf]
        %v650 = vld [vmem:[#allocation8 + $0x8] sm:$0xf]
        %v651 = vld [vmem:[#allocation8 + $0xc] sm:$0xf]
        %v652 = vld [vmem:[#allocation10] sm:$0x1]
        %v654 = vlaneseq
        %v655 = vshrl.u32 %v654, 7
        %v656 = vsub.s32 0, %v655
        %v657 = vrot.slane %v652, %v656
        %v663 = vunpack.c.l.b16 %v648
        %v664 = vunpack.c.l.b16 %v649
        %v665 = vunpack.c.l.b16 %v650
        %v666 = vunpack.c.l.b16 %v651
        %v667 = vpack.c.b16 %v664, %v663
        %v668 = vpack.c.b16 %v666, %v665
        %v672 = vsel %vm618, %v647, 0
        %674 = vmatprep.subr.bf16.mxu0 0
        %675 = vmatpush1.bf16.msra.mxu0 %v667
        %676 = vmatprep.subr.bf16.mxu0 0
        %677 = vmatpush1.bf16.msra.mxu0 %v668
        %678 = vmatprep.subr.bf16.mxu0 0
        %679 = vmatpush1.bf16.msra.mxu0 0
        %680 = vmatprep.subr.bf16.mxu0 0
        %681 = vmatpush1.bf16.msra.mxu0 0
        %682 = vmatprep.subr.bf16.mxu0 0
        %683 = vmatpush1.bf16.msra.mxu0 0
        %684 = vmatprep.subr.bf16.mxu0 0
        %685 = vmatpush1.bf16.msra.mxu0 0
        %686 = vmatprep.subr.bf16.mxu0 0
        %687 = vmatpush1.bf16.msra.mxu0 0
        %688 = vmatprep.subr.bf16.mxu0 0
        %689 = vmatpush1.bf16.msra.mxu0 0
        %690 = vmatprep.subr.bf16.mxu0 0
        %691 = vmatpush1.bf16.msra.mxu0 0
        %692 = vmatprep.subr.bf16.mxu0 0
        %693 = vmatpush1.bf16.msra.mxu0 0
        %694 = vmatprep.subr.bf16.mxu0 0
        %695 = vmatpush1.bf16.msra.mxu0 0
        %696 = vmatprep.subr.bf16.mxu0 0
        %697 = vmatpush1.bf16.msra.mxu0 0
        %698 = vmatprep.subr.bf16.mxu0 0
        %699 = vmatpush1.bf16.msra.mxu0 0
        %700 = vmatprep.subr.bf16.mxu0 0
        %701 = vmatpush1.bf16.msra.mxu0 0
        %702 = vmatprep.subr.bf16.mxu0 0
        %703 = vmatpush1.bf16.msra.mxu0 0
        %704 = vmatprep.subr.bf16.mxu0 0
        %705 = vmatpush1.bf16.msra.mxu0 0
        %706 = vmatprep.mubr.bf16.mxu0 0
        %707 = vmatmul.mubr.bf16.gmra.mrb[0].mxu0 %v672
        %v708 = vpop.f32.mrb[0].mxu0
        %v709 = vadd.f32 %v657, %v708
        %v710 = vpop.f32.mrb[0].mxu0
        %v711 = vpop.f32.mrb[0].mxu0
        %v712 = vpop.f32.mrb[0].mxu0
        %713 = vdwg.mxu0
        %v714 = vmul.f32 %v709, 0.35355338
        %v715 = vpack.c.bf16 %v714, %v714
        %v716 = vpack.c.bf16 %v709, %v709
        %718 = vrot.lane.b32.xlu0 %v716, 96
        %v719 = vpop.permute.xlu0 %718
        %vm720 = vcmask 64512
        %v722 = vsel %vm720, %v715, 0
        %v725 = vsel %vm720, %v719, 0
        %727 = vmatprep.subr.bf16.mxu0 0
        %728 = vmatpush1.bf16.xpose.msra.mxu0 %v725
        %729 = vmatprep.subr.bf16.mxu0 0
        %730 = vmatpush1.bf16.xpose.msra.mxu0 0
        %731 = vmatprep.subr.bf16.mxu0 0
        %732 = vmatpush1.bf16.xpose.msra.mxu0 0
        %733 = vmatprep.subr.bf16.mxu0 0
        %734 = vmatpush1.bf16.xpose.msra.mxu0 0
        %735 = vmatprep.subr.bf16.mxu0 0
        %736 = vmatpush1.bf16.xpose.msra.mxu0 0
        %737 = vmatprep.subr.bf16.mxu0 0
        %738 = vmatpush1.bf16.xpose.msra.mxu0 0
        %739 = vmatprep.subr.bf16.mxu0 0
        %740 = vmatpush1.bf16.xpose.msra.mxu0 0
        %741 = vmatprep.subr.bf16.mxu0 0
        %742 = vmatpush1.bf16.xpose.msra.mxu0 0
        %743 = vmatprep.subr.bf16.mxu0 0
        %744 = vmatpush1.bf16.xpose.msra.mxu0 0
        %745 = vmatprep.subr.bf16.mxu0 0
        %746 = vmatpush1.bf16.xpose.msra.mxu0 0
        %747 = vmatprep.subr.bf16.mxu0 0
        %748 = vmatpush1.bf16.xpose.msra.mxu0 0
        %749 = vmatprep.subr.bf16.mxu0 0
        %750 = vmatpush1.bf16.xpose.msra.mxu0 0
        %751 = vmatprep.subr.bf16.mxu0 0
        %752 = vmatpush1.bf16.xpose.msra.mxu0 0
        %753 = vmatprep.subr.bf16.mxu0 0
        %754 = vmatpush1.bf16.xpose.msra.mxu0 0
        %755 = vmatprep.subr.bf16.mxu0 0
        %756 = vmatpush1.bf16.xpose.msra.mxu0 0
        %757 = vmatprep.subr.bf16.mxu0 0
        %758 = vmatpush1.bf16.xpose.msra.mxu0 0
        %759 = vmatprep.mubr.bf16.mxu0 0
        %760 = vmatmul.mubr.bf16.gmra.mrb[0].mxu0 %v722
        %v761 = vpop.f32.mrb[0].mxu0
        %v762 = vadd.f32 0.0, %v761
        %v763 = vpop.f32.mrb[0].mxu0
        %v764 = vpop.f32.mrb[0].mxu0
        %v765 = vpop.f32.mrb[0].mxu0
        %766 = vdwg.mxu0
        %v767 = vsel %vm720, %v762, -inf
        %768 = vmax.xlane.f32.xlu0 %v767
        %v769 = vpop.xlane.xlu0 %768
        %v770 = vsub.f32 %v762, %v769
        %v771 = vmul.f32 %v770, 1.442695
        %v772 = vpow.pop %v771
        %v773 = vsel %vm720, %v772, 0.0
        %774 = vadd.xlane.f32.xlu0 %v773
        %v775 = vpop.xlane.xlu0 %774
        %v776 = vrcp.pop %v775
        %v777 = vmul.f32 %v772, %v776
        %v778 = vpack.c.bf16 %v777, %v777
        %779 = vrot.lane.b32.xlu0 %v716, 64
        %v780 = vpop.permute.xlu0 %779
        %v782 = vsel %vm720, %v778, 0
        %vm784 = vcmask 1043456
        %v786 = vsel %vm784, %v780, 0
        %788 = vmatprep.subr.bf16.mxu0 0
        %789 = vmatpush1.bf16.msra.mxu0 %v786
        %790 = vmatprep.subr.bf16.mxu0 0
        %791 = vmatpush1.bf16.msra.mxu0 0
        %792 = vmatprep.subr.bf16.mxu0 0
        %793 = vmatpush1.bf16.msra.mxu0 0
        %794 = vmatprep.subr.bf16.mxu0 0
        %795 = vmatpush1.bf16.msra.mxu0 0
        %796 = vmatprep.subr.bf16.mxu0 0
        %797 = vmatpush1.bf16.msra.mxu0 0
        %798 = vmatprep.subr.bf16.mxu0 0
        %799 = vmatpush1.bf16.msra.mxu0 0
        %800 = vmatprep.subr.bf16.mxu0 0
        %801 = vmatpush1.bf16.msra.mxu0 0
        %802 = vmatprep.subr.bf16.mxu0 0
        %803 = vmatpush1.bf16.msra.mxu0 0
        %804 = vmatprep.subr.bf16.mxu0 0
        %805 = vmatpush1.bf16.msra.mxu0 0
        %806 = vmatprep.subr.bf16.mxu0 0
        %807 = vmatpush1.bf16.msra.mxu0 0
        %808 = vmatprep.subr.bf16.mxu0 0
        %809 = vmatpush1.bf16.msra.mxu0 0
        %810 = vmatprep.subr.bf16.mxu0 0
        %811 = vmatpush1.bf16.msra.mxu0 0
        %812 = vmatprep.subr.bf16.mxu0 0
        %813 = vmatpush1.bf16.msra.mxu0 0
        %814 = vmatprep.subr.bf16.mxu0 0
        %815 = vmatpush1.bf16.msra.mxu0 0
        %816 = vmatprep.subr.bf16.mxu0 0
        %817 = vmatpush1.bf16.msra.mxu0 0
        %818 = vmatprep.subr.bf16.mxu0 0
        %819 = vmatpush1.bf16.msra.mxu0 0
        %820 = vmatprep.mubr.bf16.mxu0 0
        %821 = vmatmul.mubr.bf16.gmra.mrb[0].mxu0 %v782
        %v822 = vpop.f32.mrb[0].mxu0
        %v823 = vadd.f32 0.0, %v822
        %v824 = vpop.f32.mrb[0].mxu0
        %v825 = vpop.f32.mrb[0].mxu0
        %v826 = vpop.f32.mrb[0].mxu0
        %827 = vdwg.mxu0
        %829 = vrot.lane.b32.xlu0 %v715, 120
        %v830 = vpop.permute.xlu0 %829
        %831 = vrot.lane.b32.xlu0 %v716, 88
        %v832 = vpop.permute.xlu0 %831
        %v834 = vsel %vm720, %v830, 0
        %v837 = vsel %vm720, %v832, 0
        %839 = vmatprep.subr.bf16.mxu0 0
        %840 = vmatpush1.bf16.xpose.msra.mxu0 %v837
        %841 = vmatprep.subr.bf16.mxu0 0
        %842 = vmatpush1.bf16.xpose.msra.mxu0 0
        %843 = vmatprep.subr.bf16.mxu0 0
        %844 = vmatpush1.bf16.xpose.msra.mxu0 0
        %845 = vmatprep.subr.bf16.mxu0 0
        %846 = vmatpush1.bf16.xpose.msra.mxu0 0
        %847 = vmatprep.subr.bf16.mxu0 0
        %848 = vmatpush1.bf16.xpose.msra.mxu0 0
        %849 = vmatprep.subr.bf16.mxu0 0
        %850 = vmatpush1.bf16.xpose.msra.mxu0 0
        %851 = vmatprep.subr.bf16.mxu0 0
        %852 = vmatpush1.bf16.xpose.msra.mxu0 0
        %853 = vmatprep.subr.bf16.mxu0 0
        %854 = vmatpush1.bf16.xpose.msra.mxu0 0
        %855 = vmatprep.subr.bf16.mxu0 0
        %856 = vmatpush1.bf16.xpose.msra.mxu0 0
        %857 = vmatprep.subr.bf16.mxu0 0
        %858 = vmatpush1.bf16.xpose.msra.mxu0 0
        %859 = vmatprep.subr.bf16.mxu0 0
        %860 = vmatpush1.bf16.xpose.msra.mxu0 0
        %861 = vmatprep.subr.bf16.mxu0 0
        %862 = vmatpush1.bf16.xpose.msra.mxu0 0
        %863 = vmatprep.subr.bf16.mxu0 0
        %864 = vmatpush1.bf16.xpose.msra.mxu0 0
        %865 = vmatprep.subr.bf16.mxu0 0
        %866 = vmatpush1.bf16.xpose.msra.mxu0 0
        %867 = vmatprep.subr.bf16.mxu0 0
        %868 = vmatpush1.bf16.xpose.msra.mxu0 0
        %869 = vmatprep.subr.bf16.mxu0 0
        %870 = vmatpush1.bf16.xpose.msra.mxu0 0
        %871 = vmatprep.mubr.bf16.mxu0 0
        %872 = vmatmul.mubr.bf16.gmra.mrb[0].mxu0 %v834
        %v873 = vpop.f32.mrb[0].mxu0
        %v874 = vadd.f32 0.0, %v873
        %v875 = vpop.f32.mrb[0].mxu0
        %v876 = vpop.f32.mrb[0].mxu0
        %v877 = vpop.f32.mrb[0].mxu0
        %878 = vdwg.mxu0
        %v879 = vsel %vm720, %v874, -inf
        %880 = vmax.xlane.f32.xlu0 %v879
        %v881 = vpop.xlane.xlu0 %880
        %v882 = vsub.f32 %v874, %v881
        %v883 = vmul.f32 %v882, 1.442695
        %v884 = vpow.pop %v883
        %v885 = vsel %vm720, %v884, 0.0
        %886 = vadd.xlane.f32.xlu0 %v885
        %v887 = vpop.xlane.xlu0 %886
        %v888 = vrcp.pop %v887
        %v889 = vmul.f32 %v884, %v888
        %v890 = vpack.c.bf16 %v889, %v889
        %891 = vrot.lane.b32.xlu0 %v716, 56
        %v892 = vpop.permute.xlu0 %891
        %v894 = vsel %vm720, %v890, 0
        %v897 = vsel %vm784, %v892, 0
        %899 = vmatprep.subr.bf16.mxu0 0
        %900 = vmatpush1.bf16.msra.mxu0 %v897
        %901 = vmatprep.subr.bf16.mxu0 0
        %902 = vmatpush1.bf16.msra.mxu0 0
        %903 = vmatprep.subr.bf16.mxu0 0
        %904 = vmatpush1.bf16.msra.mxu0 0
        %905 = vmatprep.subr.bf16.mxu0 0
        %906 = vmatpush1.bf16.msra.mxu0 0
        %907 = vmatprep.subr.bf16.mxu0 0
        %908 = vmatpush1.bf16.msra.mxu0 0
        %909 = vmatprep.subr.bf16.mxu0 0
        %910 = vmatpush1.bf16.msra.mxu0 0
        %911 = vmatprep.subr.bf16.mxu0 0
        %912 = vmatpush1.bf16.msra.mxu0 0
        %913 = vmatprep.subr.bf16.mxu0 0
        %914 = vmatpush1.bf16.msra.mxu0 0
        %915 = vmatprep.subr.bf16.mxu0 0
        %916 = vmatpush1.bf16.msra.mxu0 0
        %917 = vmatprep.subr.bf16.mxu0 0
        %918 = vmatpush1.bf16.msra.mxu0 0
        %919 = vmatprep.subr.bf16.mxu0 0
        %920 = vmatpush1.bf16.msra.mxu0 0
        %921 = vmatprep.subr.bf16.mxu0 0
        %922 = vmatpush1.bf16.msra.mxu0 0
        %923 = vmatprep.subr.bf16.mxu0 0
        %924 = vmatpush1.bf16.msra.mxu0 0
        %925 = vmatprep.subr.bf16.mxu0 0
        %926 = vmatpush1.bf16.msra.mxu0 0
        %927 = vmatprep.subr.bf16.mxu0 0
        %928 = vmatpush1.bf16.msra.mxu0 0
        %929 = vmatprep.subr.bf16.mxu0 0
        %930 = vmatpush1.bf16.msra.mxu0 0
        %931 = vmatprep.mubr.bf16.mxu0 0
        %932 = vmatmul.mubr.bf16.gmra.mrb[0].mxu0 %v894
        %v933 = vpop.f32.mrb[0].mxu0
        %v934 = vadd.f32 0.0, %v933
        %v935 = vpop.f32.mrb[0].mxu0
        %v936 = vpop.f32.mrb[0].mxu0
        %v937 = vpop.f32.mrb[0].mxu0
        %938 = vdwg.mxu0
        %939 = vrot.lane.b32.xlu0 %v715, 112
        %v940 = vpop.permute.xlu0 %939
        %941 = vrot.lane.b32.xlu0 %v716, 80
        %v942 = vpop.permute.xlu0 %941
        %v944 = vsel %vm720, %v940, 0
        %v947 = vsel %vm720, %v942, 0
        %949 = vmatprep.subr.bf16.mxu0 0
        %950 = vmatpush1.bf16.xpose.msra.mxu0 %v947
        %951 = vmatprep.subr.bf16.mxu0 0
        %952 = vmatpush1.bf16.xpose.msra.mxu0 0
        %953 = vmatprep.subr.bf16.mxu0 0
        %954 = vmatpush1.bf16.xpose.msra.mxu0 0
        %955 = vmatprep.subr.bf16.mxu0 0
        %956 = vmatpush1.bf16.xpose.msra.mxu0 0
        %957 = vmatprep.subr.bf16.mxu0 0
        %958 = vmatpush1.bf16.xpose.msra.mxu0 0
        %959 = vmatprep.subr.bf16.mxu0 0
        %960 = vmatpush1.bf16.xpose.msra.mxu0 0
        %961 = vmatprep.subr.bf16.mxu0 0
        %962 = vmatpush1.bf16.xpose.msra.mxu0 0
        %963 = vmatprep.subr.bf16.mxu0 0
        %964 = vmatpush1.bf16.xpose.msra.mxu0 0
        %965 = vmatprep.subr.bf16.mxu0 0
        %966 = vmatpush1.bf16.xpose.msra.mxu0 0
        %967 = vmatprep.subr.bf16.mxu0 0
        %968 = vmatpush1.bf16.xpose.msra.mxu0 0
        %969 = vmatprep.subr.bf16.mxu0 0
        %970 = vmatpush1.bf16.xpose.msra.mxu0 0
        %971 = vmatprep.subr.bf16.mxu0 0
        %972 = vmatpush1.bf16.xpose.msra.mxu0 0
        %973 = vmatprep.subr.bf16.mxu0 0
        %974 = vmatpush1.bf16.xpose.msra.mxu0 0
        %975 = vmatprep.subr.bf16.mxu0 0
        %976 = vmatpush1.bf16.xpose.msra.mxu0 0
        %977 = vmatprep.subr.bf16.mxu0 0
        %978 = vmatpush1.bf16.xpose.msra.mxu0 0
        %979 = vmatprep.subr.bf16.mxu0 0
        %980 = vmatpush1.bf16.xpose.msra.mxu0 0
        %981 = vmatprep.mubr.bf16.mxu0 0
        %982 = vmatmul.mubr.bf16.gmra.mrb[0].mxu0 %v944
        %v983 = vpop.f32.mrb[0].mxu0
        %v984 = vadd.f32 0.0, %v983
        %v985 = vpop.f32.mrb[0].mxu0
        %v986 = vpop.f32.mrb[0].mxu0
        %v987 = vpop.f32.mrb[0].mxu0
        %988 = vdwg.mxu0
        %v989 = vsel %vm720, %v984, -inf
        %990 = vmax.xlane.f32.xlu0 %v989
        %v991 = vpop.xlane.xlu0 %990
        %v992 = vsub.f32 %v984, %v991
        %v993 = vmul.f32 %v992, 1.442695
        %v994 = vpow.pop %v993
        %v995 = vsel %vm720, %v994, 0.0
        %996 = vadd.xlane.f32.xlu0 %v995
        %v997 = vpop.xlane.xlu0 %996
        %v998 = vrcp.pop %v997
        %v999 = vmul.f32 %v994, %v998
        %v1000 = vpack.c.bf16 %v999, %v999
        %1001 = vrot.lane.b32.xlu0 %v716, 48
        %v1002 = vpop.permute.xlu0 %1001
        %v1004 = vsel %vm720, %v1000, 0
        %v1007 = vsel %vm784, %v1002, 0
        %1009 = vmatprep.subr.bf16.mxu0 0
        %1010 = vmatpush1.bf16.msra.mxu0 %v1007
        %1011 = vmatprep.subr.bf16.mxu0 0
        %1012 = vmatpush1.bf16.msra.mxu0 0
        %1013 = vmatprep.subr.bf16.mxu0 0
        %1014 = vmatpush1.bf16.msra.mxu0 0
        %1015 = vmatprep.subr.bf16.mxu0 0
        %1016 = vmatpush1.bf16.msra.mxu0 0
        %1017 = vmatprep.subr.bf16.mxu0 0
        %1018 = vmatpush1.bf16.msra.mxu0 0
        %1019 = vmatprep.subr.bf16.mxu0 0
        %1020 = vmatpush1.bf16.msra.mxu0 0
        %1021 = vmatprep.subr.bf16.mxu0 0
        %1022 = vmatpush1.bf16.msra.mxu0 0
        %1023 = vmatprep.subr.bf16.mxu0 0
        %1024 = vmatpush1.bf16.msra.mxu0 0
        %1025 = vmatprep.subr.bf16.mxu0 0
        %1026 = vmatpush1.bf16.msra.mxu0 0
        %1027 = vmatprep.subr.bf16.mxu0 0
        %1028 = vmatpush1.bf16.msra.mxu0 0
        %1029 = vmatprep.subr.bf16.mxu0 0
        %1030 = vmatpush1.bf16.msra.mxu0 0
        %1031 = vmatprep.subr.bf16.mxu0 0
        %1032 = vmatpush1.bf16.msra.mxu0 0
        %1033 = vmatprep.subr.bf16.mxu0 0
        %1034 = vmatpush1.bf16.msra.mxu0 0
        %1035 = vmatprep.subr.bf16.mxu0 0
        %1036 = vmatpush1.bf16.msra.mxu0 0
        %1037 = vmatprep.subr.bf16.mxu0 0
        %1038 = vmatpush1.bf16.msra.mxu0 0
        %1039 = vmatprep.subr.bf16.mxu0 0
        %1040 = vmatpush1.bf16.msra.mxu0 0
        %1041 = vmatprep.mubr.bf16.mxu0 0
        %1042 = vmatmul.mubr.bf16.gmra.mrb[0].mxu0 %v1004
        %v1043 = vpop.f32.mrb[0].mxu0
        %v1044 = vadd.f32 0.0, %v1043
        %v1045 = vpop.f32.mrb[0].mxu0
        %v1046 = vpop.f32.mrb[0].mxu0
        %v1047 = vpop.f32.mrb[0].mxu0
        %1048 = vdwg.mxu0
        %1049 = vrot.lane.b32.xlu0 %v715, 104
        %v1050 = vpop.permute.xlu0 %1049
        %1051 = vrot.lane.b32.xlu0 %v716, 72
        %v1052 = vpop.permute.xlu0 %1051
        %v1054 = vsel %vm720, %v1050, 0
        %v1057 = vsel %vm720, %v1052, 0
        %1059 = vmatprep.subr.bf16.mxu0 0
        %1060 = vmatpush1.bf16.xpose.msra.mxu0 %v1057
        %1061 = vmatprep.subr.bf16.mxu0 0
        %1062 = vmatpush1.bf16.xpose.msra.mxu0 0
        %1063 = vmatprep.subr.bf16.mxu0 0
        %1064 = vmatpush1.bf16.xpose.msra.mxu0 0
        %1065 = vmatprep.subr.bf16.mxu0 0
        %1066 = vmatpush1.bf16.xpose.msra.mxu0 0
        %1067 = vmatprep.subr.bf16.mxu0 0
        %1068 = vmatpush1.bf16.xpose.msra.mxu0 0
        %1069 = vmatprep.subr.bf16.mxu0 0
        %1070 = vmatpush1.bf16.xpose.msra.mxu0 0
        %1071 = vmatprep.subr.bf16.mxu0 0
        %1072 = vmatpush1.bf16.xpose.msra.mxu0 0
        %1073 = vmatprep.subr.bf16.mxu0 0
        %1074 = vmatpush1.bf16.xpose.msra.mxu0 0
        %1075 = vmatprep.subr.bf16.mxu0 0
        %1076 = vmatpush1.bf16.xpose.msra.mxu0 0
        %1077 = vmatprep.subr.bf16.mxu0 0
        %1078 = vmatpush1.bf16.xpose.msra.mxu0 0
        %1079 = vmatprep.subr.bf16.mxu0 0
        %1080 = vmatpush1.bf16.xpose.msra.mxu0 0
        %1081 = vmatprep.subr.bf16.mxu0 0
        %1082 = vmatpush1.bf16.xpose.msra.mxu0 0
        %1083 = vmatprep.subr.bf16.mxu0 0
        %1084 = vmatpush1.bf16.xpose.msra.mxu0 0
        %1085 = vmatprep.subr.bf16.mxu0 0
        %1086 = vmatpush1.bf16.xpose.msra.mxu0 0
        %1087 = vmatprep.subr.bf16.mxu0 0
        %1088 = vmatpush1.bf16.xpose.msra.mxu0 0
        %1089 = vmatprep.subr.bf16.mxu0 0
        %1090 = vmatpush1.bf16.xpose.msra.mxu0 0
        %1091 = vmatprep.mubr.bf16.mxu0 0
        %1092 = vmatmul.mubr.bf16.gmra.mrb[0].mxu0 %v1054
        %v1093 = vpop.f32.mrb[0].mxu0
        %v1094 = vadd.f32 0.0, %v1093
        %v1095 = vpop.f32.mrb[0].mxu0
        %v1096 = vpop.f32.mrb[0].mxu0
        %v1097 = vpop.f32.mrb[0].mxu0
        %1098 = vdwg.mxu0
        %v1099 = vsel %vm720, %v1094, -inf
        %1100 = vmax.xlane.f32.xlu0 %v1099
        %v1101 = vpop.xlane.xlu0 %1100
        %v1102 = vsub.f32 %v1094, %v1101
        %v1103 = vmul.f32 %v1102, 1.442695
        %v1104 = vpow.pop %v1103
        %v1105 = vsel %vm720, %v1104, 0.0
        %1106 = vadd.xlane.f32.xlu0 %v1105
        %v1107 = vpop.xlane.xlu0 %1106
        %v1108 = vrcp.pop %v1107
        %v1109 = vmul.f32 %v1104, %v1108
        %v1110 = vpack.c.bf16 %v1109, %v1109
        %1111 = vrot.lane.b32.xlu0 %v716, 40
        %v1112 = vpop.permute.xlu0 %1111
        %v1114 = vsel %vm720, %v1110, 0
        %v1117 = vsel %vm784, %v1112, 0
        %1119 = vmatprep.subr.bf16.mxu0 0
        %1120 = vmatpush1.bf16.msra.mxu0 %v1117
        %1121 = vmatprep.subr.bf16.mxu0 0
        %1122 = vmatpush1.bf16.msra.mxu0 0
        %1123 = vmatprep.subr.bf16.mxu0 0
        %1124 = vmatpush1.bf16.msra.mxu0 0
        %1125 = vmatprep.subr.bf16.mxu0 0
        %1126 = vmatpush1.bf16.msra.mxu0 0
        %1127 = vmatprep.subr.bf16.mxu0 0
        %1128 = vmatpush1.bf16.msra.mxu0 0
        %1129 = vmatprep.subr.bf16.mxu0 0
        %1130 = vmatpush1.bf16.msra.mxu0 0
        %1131 = vmatprep.subr.bf16.mxu0 0
        %1132 = vmatpush1.bf16.msra.mxu0 0
        %1133 = vmatprep.subr.bf16.mxu0 0
        %1134 = vmatpush1.bf16.msra.mxu0 0
        %1135 = vmatprep.subr.bf16.mxu0 0
        %1136 = vmatpush1.bf16.msra.mxu0 0
        %1137 = vmatprep.subr.bf16.mxu0 0
        %1138 = vmatpush1.bf16.msra.mxu0 0
        %1139 = vmatprep.subr.bf16.mxu0 0
        %1140 = vmatpush1.bf16.msra.mxu0 0
        %1141 = vmatprep.subr.bf16.mxu0 0
        %1142 = vmatpush1.bf16.msra.mxu0 0
        %1143 = vmatprep.subr.bf16.mxu0 0
        %1144 = vmatpush1.bf16.msra.mxu0 0
        %1145 = vmatprep.subr.bf16.mxu0 0
        %1146 = vmatpush1.bf16.msra.mxu0 0
        %1147 = vmatprep.subr.bf16.mxu0 0
        %1148 = vmatpush1.bf16.msra.mxu0 0
        %1149 = vmatprep.subr.bf16.mxu0 0
        %1150 = vmatpush1.bf16.msra.mxu0 0
        %1151 = vmatprep.mubr.bf16.mxu0 0
        %1152 = vmatmul.mubr.bf16.gmra.mrb[0].mxu0 %v1114
        %v1153 = vpop.f32.mrb[0].mxu0
        %v1154 = vadd.f32 0.0, %v1153
        %v1155 = vpop.f32.mrb[0].mxu0
        %v1156 = vpop.f32.mrb[0].mxu0
        %v1157 = vpop.f32.mrb[0].mxu0
        %1158 = vdwg.mxu0
        %1160 = vrot.lane.b32.xlu0 %v934, 8
        %v1161 = vpop.permute.xlu0 %1160
        %1164 = vrot.lane.b32.xlu0 %v1044, 16
        %v1165 = vpop.permute.xlu0 %1164
        %1168 = vrot.lane.b32.xlu0 %v1154, 24
        %v1169 = vpop.permute.xlu0 %1168
        %v1171 = vsel %vm720, %v823, %v1161
        %vm1172 = vcmask 130048
        %v1173 = vsel %vm1172, %v1171, %v1165
        %vm1174 = vcmask 195584
        %v1175 = vsel %vm1174, %v1173, %v1169
        %v1176 = vpack.c.bf16 %v1175, %v1175
        %v1177 = vld [vmem:[#allocation11] sm:$0xf]
        %v1178 = vld [vmem:[#allocation11 + $0x4] sm:$0xf]
        %v1179 = vld [vmem:[#allocation11 + $0x8] sm:$0xf]
        %v1180 = vld [vmem:[#allocation11 + $0xc] sm:$0xf]
        %v1181 = vld [vmem:[#allocation13] sm:$0x1]
        %v1183 = vlaneseq
        %v1184 = vshrl.u32 %v1183, 7
        %v1185 = vsub.s32 0, %v1184
        %v1186 = vrot.slane %v1181, %v1185
        %v1192 = vunpack.c.l.b16 %v1177
        %v1193 = vunpack.c.l.b16 %v1178
        %v1194 = vunpack.c.l.b16 %v1179
        %v1195 = vunpack.c.l.b16 %v1180
        %v1196 = vpack.c.b16 %v1193, %v1192
        %v1197 = vpack.c.b16 %v1195, %v1194
        %v1201 = vsel %vm618, %v1176, 0
        %1203 = vmatprep.subr.bf16.mxu0 0
        %1204 = vmatpush1.bf16.msra.mxu0 %v1196
        %1205 = vmatprep.subr.bf16.mxu0 0
        %1206 = vmatpush1.bf16.msra.mxu0 %v1197
        %1207 = vmatprep.subr.bf16.mxu0 0
        %1208 = vmatpush1.bf16.msra.mxu0 0
        %1209 = vmatprep.subr.bf16.mxu0 0
        %1210 = vmatpush1.bf16.msra.mxu0 0
        %1211 = vmatprep.subr.bf16.mxu0 0
        %1212 = vmatpush1.bf16.msra.mxu0 0
        %1213 = vmatprep.subr.bf16.mxu0 0
        %1214 = vmatpush1.bf16.msra.mxu0 0
        %1215 = vmatprep.subr.bf16.mxu0 0
        %1216 = vmatpush1.bf16.msra.mxu0 0
        %1217 = vmatprep.subr.bf16.mxu0 0
        %1218 = vmatpush1.bf16.msra.mxu0 0
        %1219 = vmatprep.subr.bf16.mxu0 0
        %1220 = vmatpush1.bf16.msra.mxu0 0
        %1221 = vmatprep.subr.bf16.mxu0 0
        %1222 = vmatpush1.bf16.msra.mxu0 0
        %1223 = vmatprep.subr.bf16.mxu0 0
        %1224 = vmatpush1.bf16.msra.mxu0 0
        %1225 = vmatprep.subr.bf16.mxu0 0
        %1226 = vmatpush1.bf16.msra.mxu0 0
        %1227 = vmatprep.subr.bf16.mxu0 0
        %1228 = vmatpush1.bf16.msra.mxu0 0
        %1229 = vmatprep.subr.bf16.mxu0 0
        %1230 = vmatpush1.bf16.msra.mxu0 0
        %1231 = vmatprep.subr.bf16.mxu0 0
        %1232 = vmatpush1.bf16.msra.mxu0 0
        %1233 = vmatprep.subr.bf16.mxu0 0
        %1234 = vmatpush1.bf16.msra.mxu0 0
        %1235 = vmatprep.mubr.bf16.mxu0 0
        %1236 = vmatmul.mubr.bf16.gmra.mrb[0].mxu0 %v1201
        %v1237 = vpop.f32.mrb[0].mxu0
        %v1238 = vadd.f32 %v1186, %v1237
        %v1239 = vpop.f32.mrb[0].mxu0
        %v1240 = vpop.f32.mrb[0].mxu0
        %v1241 = vpop.f32.mrb[0].mxu0
        %1242 = vdwg.mxu0
        %v1243 = vadd.f32 %v615, %v1238
        %v1244 = vld [vmem:[#allocation14] sm:$0x1]
        %v1245 = vld [vmem:[#allocation16] sm:$0x1]
        %v1246 = vsel %vm618, %v1243, 0.0
        %1247 = vadd.xlane.f32.xlu0 %v1246
        %v1248 = vpop.xlane.xlu0 %1247
        %v1249 = vmul.f32 %v1248, %v622
        %v1250 = vsub.f32 %v1243, %v1249
        %v1251 = vmul.f32 %v1250, %v1250
        %v1252 = vsel %vm618, %v1251, 0.0
        %1253 = vadd.xlane.f32.xlu0 %v1252
        %v1254 = vpop.xlane.xlu0 %1253
        %v1255 = vmul.f32 %v1254, %v622
        %v1256 = vadd.f32 %v1255, 1e-05
        %v1257 = vrsqrt.pop %v1256
        %v1258 = vmul.f32 %v1250, %v1257
        %v1260 = vlaneseq
        %v1261 = vshrl.u32 %v1260, 7
        %v1262 = vsub.s32 0, %v1261
        %v1263 = vrot.slane %v1244, %v1262
        %v1265 = vmul.f32 %v1258, %v1263
        %v1267 = vlaneseq
        %v1268 = vshrl.u32 %v1267, 7
        %v1269 = vsub.s32 0, %v1268
        %v1270 = vrot.slane %v1245, %v1269
        %v1272 = vadd.f32 %v1265, %v1270
        %v1273 = vpack.c.bf16 %v1272, %v1272
        %v1274 = vld [vmem:[#allocation17] sm:$0xf]
        %v1275 = vld [vmem:[#allocation17 + $0x4] sm:$0xf]
        %v1276 = vld [vmem:[#allocation17 + $0x8] sm:$0xf]
        %v1277 = vld [vmem:[#allocation17 + $0xc] sm:$0xf]
        %v1278 = vld [vmem:[#allocation19] sm:$0x1]
        %v1280 = vlaneseq
        %v1281 = vshrl.u32 %v1280, 7
        %v1282 = vsub.s32 0, %v1281
        %v1283 = vrot.slane %v1278, %v1282
        %v1289 = vunpack.c.l.b16 %v1274
        %v1290 = vunpack.c.l.b16 %v1275
        %v1291 = vunpack.c.l.b16 %v1276
        %v1292 = vunpack.c.l.b16 %v1277
        %v1293 = vpack.c.b16 %v1290, %v1289
        %v1294 = vpack.c.b16 %v1292, %v1291
        %v1298 = vsel %vm618, %v1273, 0
        %1300 = vmatprep.subr.bf16.mxu0 0
        %1301 = vmatpush1.bf16.msra.mxu0 %v1293
        %1302 = vmatprep.subr.bf16.mxu0 0
        %1303 = vmatpush1.bf16.msra.mxu0 %v1294
        %1304 = vmatprep.subr.bf16.mxu0 0
        %1305 = vmatpush1.bf16.msra.mxu0 0
        %1306 = vmatprep.subr.bf16.mxu0 0
        %1307 = vmatpush1.bf16.msra.mxu0 0
        %1308 = vmatprep.subr.bf16.mxu0 0
        %1309 = vmatpush1.bf16.msra.mxu0 0
        %1310 = vmatprep.subr.bf16.mxu0 0
        %1311 = vmatpush1.bf16.msra.mxu0 0
        %1312 = vmatprep.subr.bf16.mxu0 0
        %1313 = vmatpush1.bf16.msra.mxu0 0
        %1314 = vmatprep.subr.bf16.mxu0 0
        %1315 = vmatpush1.bf16.msra.mxu0 0
        %1316 = vmatprep.subr.bf16.mxu0 0
        %1317 = vmatpush1.bf16.msra.mxu0 0
        %1318 = vmatprep.subr.bf16.mxu0 0
        %1319 = vmatpush1.bf16.msra.mxu0 0
        %1320 = vmatprep.subr.bf16.mxu0 0
        %1321 = vmatpush1.bf16.msra.mxu0 0
        %1322 = vmatprep.subr.bf16.mxu0 0
        %1323 = vmatpush1.bf16.msra.mxu0 0
        %1324 = vmatprep.subr.bf16.mxu0 0
        %1325 = vmatpush1.bf16.msra.mxu0 0
        %1326 = vmatprep.subr.bf16.mxu0 0
        %1327 = vmatpush1.bf16.msra.mxu0 0
        %1328 = vmatprep.subr.bf16.mxu0 0
        %1329 = vmatpush1.bf16.msra.mxu0 0
        %1330 = vmatprep.subr.bf16.mxu0 0
        %1331 = vmatpush1.bf16.msra.mxu0 0
        %1332 = vmatprep.mubr.bf16.mxu0 0
        %1333 = vmatmul.mubr.bf16.gmra.mrb[0].mxu0 %v1298
        %v1334 = vpop.f32.mrb[0].mxu0
        %v1335 = vadd.f32 %v1283, %v1334
        %v1336 = vpop.f32.mrb[0].mxu0
        %v1337 = vpop.f32.mrb[0].mxu0
        %v1338 = vpop.f32.mrb[0].mxu0
        %1339 = vdwg.mxu0
        %v1340 = vmul.f32 %v1335, 1.702
        %v1341 = vxor.u32 %v1340, 2147483648
        %v1342 = vmul.f32 %v1341, 1.442695
        %v1343 = vpow.pop %v1342
        %v1344 = vadd.f32 %v1343, 1.0
        %v1345 = vrcp.pop %v1344
        %v1346 = vmul.f32 1.0, %v1345
        %v1347 = vmul.f32 %v1335, %v1346
        %v1348 = vpack.c.bf16 %v1347, %v1347
        %v1349 = vld [vmem:[#allocation20] sm:$0xf]
        %v1350 = vld [vmem:[#allocation20 + $0x4] sm:$0xf]
        %v1351 = vld [vmem:[#allocation20 + $0x8] sm:$0xf]
        %v1352 = vld [vmem:[#allocation20 + $0xc] sm:$0xf]
        %v1353 = vld [vmem:[#allocation20 + $0x10] sm:$0xf]
        %v1354 = vld [vmem:[#allocation20 + $0x14] sm:$0xf]
        %v1355 = vld [vmem:[#allocation20 + $0x18] sm:$0xf]
        %v1356 = vld [vmem:[#allocation20 + $0x1c] sm:$0xf]
        %v1357 = vld [vmem:[#allocation20 + $0x20] sm:$0xf]
        %v1358 = vld [vmem:[#allocation20 + $0x24] sm:$0xf]
        %v1359 = vld [vmem:[#allocation20 + $0x28] sm:$0xf]
        %v1360 = vld [vmem:[#allocation20 + $0x2c] sm:$0xf]
        %v1361 = vld [vmem:[#allocation20 + $0x30] sm:$0xf]
        %v1362 = vld [vmem:[#allocation20 + $0x34] sm:$0xf]
        %v1363 = vld [vmem:[#allocation20 + $0x38] sm:$0xf]
        %v1364 = vld [vmem:[#allocation20 + $0x3c] sm:$0xf]
        %v1365 = vld [vmem:[#allocation22] sm:$0x1]
        %v1367 = vlaneseq
        %v1368 = vshrl.u32 %v1367, 7
        %v1369 = vsub.s32 0, %v1368
        %v1370 = vrot.slane %v1365, %v1369
        %v1388 = vunpack.c.l.b16 %v1349
        %v1389 = vunpack.c.l.b16 %v1350
        %v1390 = vunpack.c.l.b16 %v1351
        %v1391 = vunpack.c.l.b16 %v1352
        %v1392 = vunpack.c.l.b16 %v1353
        %v1393 = vunpack.c.l.b16 %v1354
        %v1394 = vunpack.c.l.b16 %v1355
        %v1395 = vunpack.c.l.b16 %v1356
        %v1396 = vunpack.c.l.b16 %v1357
        %v1397 = vunpack.c.l.b16 %v1358
        %v1398 = vunpack.c.l.b16 %v1359
        %v1399 = vunpack.c.l.b16 %v1360
        %v1400 = vunpack.c.l.b16 %v1361
        %v1401 = vunpack.c.l.b16 %v1362
        %v1402 = vunpack.c.l.b16 %v1363
        %v1403 = vunpack.c.l.b16 %v1364
        %v1404 = vpack.c.b16 %v1389, %v1388
        %v1405 = vpack.c.b16 %v1391, %v1390
        %v1406 = vpack.c.b16 %v1393, %v1392
        %v1407 = vpack.c.b16 %v1395, %v1394
        %v1408 = vpack.c.b16 %v1397, %v1396
        %v1409 = vpack.c.b16 %v1399, %v1398
        %v1410 = vpack.c.b16 %v1401, %v1400
        %v1411 = vpack.c.b16 %v1403, %v1402
        %1420 = vmatprep.subr.bf16.mxu0 0
        %1421 = vmatpush1.bf16.msra.mxu0 %v1404
        %1422 = vmatprep.subr.bf16.mxu0 0
        %1423 = vmatpush1.bf16.msra.mxu0 %v1405
        %1424 = vmatprep.subr.bf16.mxu0 0
        %1425 = vmatpush1.bf16.msra.mxu0 %v1406
        %1426 = vmatprep.subr.bf16.mxu0 0
        %1427 = vmatpush1.bf16.msra.mxu0 %v1407
        %1428 = vmatprep.subr.bf16.mxu0 0
        %1429 = vmatpush1.bf16.msra.mxu0 %v1408
        %1430 = vmatprep.subr.bf16.mxu0 0
        %1431 = vmatpush1.bf16.msra.mxu0 %v1409
        %1432 = vmatprep.subr.bf16.mxu0 0
        %1433 = vmatpush1.bf16.msra.mxu0 %v1410
        %1434 = vmatprep.subr.bf16.mxu0 0
        %1435 = vmatpush1.bf16.msra.mxu0 %v1411
        %1436 = vmatprep.subr.bf16.mxu0 0
        %1437 = vmatpush1.bf16.msra.mxu0 0
        %1438 = vmatprep.subr.bf16.mxu0 0
        %1439 = vmatpush1.bf16.msra.mxu0 0
        %1440 = vmatprep.subr.bf16.mxu0 0
        %1441 = vmatpush1.bf16.msra.mxu0 0
        %1442 = vmatprep.subr.bf16.mxu0 0
        %1443 = vmatpush1.bf16.msra.mxu0 0
        %1444 = vmatprep.subr.bf16.mxu0 0
        %1445 = vmatpush1.bf16.msra.mxu0 0
        %1446 = vmatprep.subr.bf16.mxu0 0
        %1447 = vmatpush1.bf16.msra.mxu0 0
        %1448 = vmatprep.subr.bf16.mxu0 0
        %1449 = vmatpush1.bf16.msra.mxu0 0
        %1450 = vmatprep.subr.bf16.mxu0 0
        %1451 = vmatpush1.bf16.msra.mxu0 0
        %1452 = vmatprep.mubr.bf16.mxu0 0
        %1453 = vmatmul.mubr.bf16.gmra.mrb[0].mxu0 %v1348
        %v1454 = vpop.f32.mrb[0].mxu0
        %v1455 = vadd.f32 %v1370, %v1454
        %v1456 = vpop.f32.mrb[0].mxu0
        %v1457 = vpop.f32.mrb[0].mxu0
        %v1458 = vpop.f32.mrb[0].mxu0
        %1459 = vdwg.mxu0
        %v1460 = vadd.f32 %v1243, %v1455
        %1461 = vst.msk [vmem:[%s613] sm:$0xff] %vm618, %v1460
        %s1462 = sand.u32 %s322, 1
        %s1463 = scalar_lea.sflag [#allocation4], %s1462
        %s1464 = sand.u32 %s322, 1
        %s1465 = smul.addr %s1464, 8
        %s1466 = scalar_lea.vmem [#allocation23], %s1465
        // Predicated region
        $region125: #{tpu_custom_call.1} parent=71 // pred_check
          %p1467 = pneg %p332
        $region126: #{tpu_custom_call.1} parent=71 // pred_check_branch
          %1469 = sbr.rel (%p1467) target = $region128
        $region127: #{tpu_custom_call.1} parent=71 // pred_region
          %s1471 = ssub.s32 128, 128
          %1472 = vsyncadd %s1463, %s1471
          %s1473 = smul.addr %s36, 128
          %s1474 = scalar_lea.hbm %s13, %s1473
          %s1476 = sshll.u32 %s1466, 4
          %s1477 = int_to_ptr.vmem [resolvable:$true] %s1476
          %1479 = dma.vmem_to_hbm [thread:$0]  %s1477, 128, %s1474, %s1463
        $region128: #{tpu_custom_call.1} parent=71 // pred_fallthru
          _
      $region72: #{tpu_custom_call.1} parent=5 // pred_fallthru
        _
      %p1480 = scmp.le.s32.totalorder 2, %s31
      // Predicated region
      $region129: #{tpu_custom_call.1} parent=5 // pred_check
        %p1481 = pneg %p1480
      $region130: #{tpu_custom_call.1} parent=5 // pred_check_branch
        %1483 = sbr.rel (%p1481) target = $region132
      $region131: #{tpu_custom_call.1} parent=5 // pred_region
        %s1484 = ssub.s32 %s31, 2
        // Predicated region
        $region133: #{tpu_custom_call.1} parent=131 // pred_check
          %p1485 = pneg %p338
        $region134: #{tpu_custom_call.1} parent=131 // pred_check_branch
          %1487 = sbr.rel (%p1485) target = $region136
        $region135: #{tpu_custom_call.1} parent=131 // pred_region
          %s1488 = sand.u32 %s323, 1
          %s1489 = scalar_lea.sflag [#allocation4], %s1488
          %s1490 = sand.u32 %s323, 1
          %s1491 = smul.addr %s1490, 8
          %s1492 = scalar_lea.vmem [#allocation23], %s1491
          %1493 = dma.done %s1489, 128
        $region136: #{tpu_custom_call.1} parent=131 // pred_fallthru
          _
      $region132: #{tpu_custom_call.1} parent=5 // pred_fallthru
        _
    $region6: #{tpu_custom_call.1} parent=1 // loop_footer
      %s35 = sadd.s32 1, %s31
    $region7: #{tpu_custom_call.1} parent=1 // loop_footer_branch
      %30 = sbr.rel target = $region3
    $region8: #{tpu_custom_call.1} parent=1 // loop_exit
      _
    %1494 = vsyncpa [#allocation3], 1
    %s1495 = scalar_lea.sflag [#allocation3], 1
    %1496 = vsyncpa %s1495, 1
    %1497 = vsyncpa [#allocation6], 1
    %1498 = vsyncpa [#allocation9], 1
    %1499 = vsyncpa [#allocation12], 1
    %1500 = vsyncpa [#allocation15], 1
    %1501 = vsyncpa [#allocation18], 1
    %1502 = vsyncpa [#allocation21], 1
    %1503 = vsyncpa [#allocation4], 1
    %s1504 = scalar_lea.sflag [#allocation4], 1
    %1505 = vsyncpa %s1504, 1

// kernel: tpu_custom_call.1
$region0: #{tpu_custom_call.1}
  #allocation0 [shape = 'u32[]', space=smem, size = 0x4, offset = 0x4, fixed_abs, tag = 'smem constant byte address 0x4 - core index']
  #allocation1 [shape = 'u32[144,128]{1,0:T(1,128)}', space=vmem, size = 0x12000, scoped, tag = 'internal scratch']
  %s0 = inlined_call_operand.hbm [shape: f32[2,8,32], index: 0, kind: input, shape index: {}]
  %s1 = inlined_call_operand.hbm [shape: f32[1,32], index: 1, kind: input, shape index: {}]
  %s2 = inlined_call_operand.hbm [shape: f32[1,32], index: 2, kind: input, shape index: {}]
  %s3 = inlined_call_operand.hbm [shape: bf16[32,96], index: 3, kind: input, shape index: {}]
  %s4 = inlined_call_operand.hbm [shape: f32[1,96], index: 4, kind: input, shape index: {}]
  %s5 = inlined_call_operand.hbm [shape: bf16[32,32], index: 5, kind: input, shape index: {}]
  %s6 = inlined_call_operand.hbm [shape: f32[1,32], index: 6, kind: input, shape index: {}]
  %s7 = inlined_call_operand.hbm [shape: f32[1,32], index: 7, kind: input, shape index: {}]
  %s8 = inlined_call_operand.hbm [shape: f32[1,32], index: 8, kind: input, shape index: {}]
  %s9 = inlined_call_operand.hbm [shape: bf16[32,128], index: 9, kind: input, shape index: {}]
  %s10 = inlined_call_operand.hbm [shape: f32[1,128], index: 10, kind: input, shape index: {}]
  %s11 = inlined_call_operand.hbm [shape: bf16[128,32], index: 11, kind: input, shape index: {}]
  %s12 = inlined_call_operand.hbm [shape: f32[1,32], index: 12, kind: input, shape index: {}]
  %s13 = inlined_call_operand.hbm [shape: f32[2,8,32], index: 13, kind: output, shape index: {}]
  %s14 = sld [smem:[#allocation0]]
  $region137: #{tpu_custom_call.1} parent=0
    _
  %s16 = ssub.s32 1, %s14
  %s17 = scalar_select 0, %s16, %s14
  $region1: #{tpu_custom_call.1} parent=0
    #allocation2 [shape = 'u8[8192]{0}', space=vmem, size = 0x2000, scoped, tag = 'input window, operand 0']
    #allocation3 [shape = 's32[2]{0}', space=sflag, size = 0x8, scoped, tag = 'scoped memory for tpu_custom_call.1']
    #allocation4 [shape = 's32[2]{0}', space=sflag, size = 0x8, scoped, tag = 'scoped memory for tpu_custom_call.1']
    #allocation5 [shape = 'u8[512]{0}', space=vmem, size = 0x400, scoped, tag = 'input window, operand 1, single buffered']
    #allocation6 [shape = 's32[1]{0}', space=sflag, size = 0x4, scoped, tag = 'scoped memory for tpu_custom_call.1']
    #allocation7 [shape = 'u8[512]{0}', space=vmem, size = 0x400, scoped, tag = 'input window, operand 2, single buffered']
    #allocation8 [shape = 'u8[8192]{0}', space=vmem, size = 0x2000, scoped, tag = 'input window, operand 3, single buffered']
    #allocation9 [shape = 's32[1]{0}', space=sflag, size = 0x4, scoped, tag = 'scoped memory for tpu_custom_call.1']
    #allocation10 [shape = 'u8[512]{0}', space=vmem, size = 0x400, scoped, tag = 'input window, operand 4, single buffered']
    #allocation11 [shape = 'u8[8192]{0}', space=vmem, size = 0x2000, scoped, tag = 'input window, operand 5, single buffered']
    #allocation12 [shape = 's32[1]{0}', space=sflag, size = 0x4, scoped, tag = 'scoped memory for tpu_custom_call.1']
    #allocation13 [shape = 'u8[512]{0}', space=vmem, size = 0x400, scoped, tag = 'input window, operand 6, single buffered']
    #allocation14 [shape = 'u8[512]{0}', space=vmem, size = 0x400, scoped, tag = 'input window, operand 7, single buffered']
    #allocation15 [shape = 's32[1]{0}', space=sflag, size = 0x4, scoped, tag = 'scoped memory for tpu_custom_call.1']
    #allocation16 [shape = 'u8[512]{0}', space=vmem, size = 0x400, scoped, tag = 'input window, operand 8, single buffered']
    #allocation17 [shape = 'u8[8192]{0}', space=vmem, size = 0x2000, scoped, tag = 'input window, operand 9, single buffered']
    #allocation18 [shape = 's32[1]{0}', space=sflag, size = 0x4, scoped, tag = 'scoped memory for tpu_custom_call.1']
    #allocation19 [shape = 'u8[512]{0}', space=vmem, size = 0x400, scoped, tag = 'input window, operand 10, single buffered']
    #allocation20 [shape = 'u8[32768]{0}', space=vmem, size = 0x8000, scoped, tag = 'input window, operand 11, single buffered']
    #allocation21 [shape = 's32[1]{0}', space=sflag, size = 0x4, scoped, tag = 'scoped memory for tpu_custom_call.1']
    #allocation22 [shape = 'u8[512]{0}', space=vmem, size = 0x400, scoped, tag = 'input window, operand 12, single buffered']
    #allocation23 [shape = 'u8[8192]{0}', space=vmem, size = 0x2000, scoped, tag = 'output window, operand 0']
    %18 = vsyncpa [#allocation3], 0
    %s19 = scalar_lea.sflag [#allocation3], 1
    %20 = vsyncpa %s19, 0
    %21 = vsyncpa [#allocation6], 0
    %22 = vsyncpa [#allocation9], 0
    %23 = vsyncpa [#allocation12], 0
    %24 = vsyncpa [#allocation15], 0
    %25 = vsyncpa [#allocation18], 0
    %26 = vsyncpa [#allocation21], 0
    %27 = vsyncpa [#allocation4], 0
    %s28 = scalar_lea.sflag [#allocation4], 1
    %29 = vsyncpa %s28, 0
    loop: start=0, step=1, limit=4
    $region2: #{tpu_custom_call.1} parent=1 // loop_pre_header
      _
    $region3: #{tpu_custom_call.1} parent=1 // loop_header
      %s31 = sphi 0, %s35
      %p32 = scmp.ge.s32.totalorder %s31, 4
      %s41 = sphi 0, %s43
      %s44 = sphi 0, %s41
      %s45 = sphi 0, %s44
      %s61 = sphi 0, %s45
      %s65 = sphi 0, %s65
      %s67 = sphi 0, %s65
      %s68 = sphi 0, %s67
      %s82 = sphi 0, %s68
      %s86 = sphi 0, %s86
      %s88 = sphi 0, %s86
      %s89 = sphi 0, %s88
      %s103 = sphi 0, %s89
      %s107 = sphi 0, %s107
      %s109 = sphi 0, %s107
      %s110 = sphi 0, %s109
      %s124 = sphi 0, %s110
      %s128 = sphi 0, %s128
      %s130 = sphi 0, %s128
      %s131 = sphi 0, %s130
      %s145 = sphi 0, %s131
      %s149 = sphi 0, %s149
      %s151 = sphi 0, %s149
      %s152 = sphi 0, %s151
      %s166 = sphi 0, %s152
      %s170 = sphi 0, %s170
      %s172 = sphi 0, %s170
      %s173 = sphi 0, %s172
      %s187 = sphi 0, %s173
      %s191 = sphi 0, %s191
      %s193 = sphi 0, %s191
      %s194 = sphi 0, %s193
      %s208 = sphi 0, %s194
      %s212 = sphi 0, %s212
      %s214 = sphi 0, %s212
      %s215 = sphi 0, %s214
      %s229 = sphi 0, %s215
      %s233 = sphi 0, %s233
      %s235 = sphi 0, %s233
      %s236 = sphi 0, %s235
      %s250 = sphi 0, %s236
      %s254 = sphi 0, %s254
      %s256 = sphi 0, %s254
      %s257 = sphi 0, %s256
      %s271 = sphi 0, %s257
      %s275 = sphi 0, %s275
      %s277 = sphi 0, %s275
      %s278 = sphi 0, %s277
      %s292 = sphi 0, %s278
      %s296 = sphi 0, %s296
      %s298 = sphi 0, %s296
      %s299 = sphi 0, %s298
      %s313 = sphi 0, %s299
      %s319 = sphi 0, %s321
      %s322 = sphi 0, %s319
      %s323 = sphi 0, %s322
      %s339 = sphi 0, %s323
    $region4: #{tpu_custom_call.1} parent=1 // loop_header_branch
      %34 = sbr.rel (%p32) target = $region8
    $region5: #{tpu_custom_call.1} parent=1 // loop_body
      %s36 = ssub.s32 %s31, 1
      %s37 = ssub.s32 %s31, 2
      %s38 = sadd.s32 %s31, 1
      %s39 = ssub.s32 %s31, %s38
      %p40 = scmp.eq.s32.totalorder %s39, 0
      %s42 = sadd.s32 %s41, 1
      %s43 = scalar_select %p40, %s41, %s42
      %p46 = pneg %p40
      %p47 = scmp.eq.s32.totalorder %s31, 1
      %p48 = por %p46, %p47
      %p49 = scmp.ne.s32.totalorder %s41, %s44
      %p50 = scmp.eq.s32.totalorder %s31, 0
      %p51 = por %p49, %p50
      %p52 = scmp.ne.s32.totalorder %s41, %s44
      %p53 = scmp.eq.s32.totalorder %s36, 1
      %p54 = por %p52, %p53
      %p55 = scmp.ne.s32.totalorder %s44, %s45
      %p56 = scmp.eq.s32.totalorder %s36, 0
      %p57 = por %p55, %p56
      %p58 = scmp.ne.s32.totalorder %s44, %s45
      %p59 = scmp.eq.s32.totalorder %s37, 1
      %p60 = por %p58, %p59
      %p62 = scmp.ne.s32.totalorder %s45, %s61
      %p63 = scmp.eq.s32.totalorder %s37, 0
      %p64 = por %p62, %p63
      %s66 = sadd.s32 %s65, 1
      %p69 = scmp.eq.s32.totalorder %s31, 1
      %p70 = scmp.ne.s32.totalorder %s65, %s67
      %p71 = scmp.eq.s32.totalorder %s31, 0
      %p72 = por %p70, %p71
      %p73 = scmp.ne.s32.totalorder %s65, %s67
      %p74 = scmp.eq.s32.totalorder %s36, 1
      %p75 = por %p73, %p74
      %p76 = scmp.ne.s32.totalorder %s67, %s68
      %p77 = scmp.eq.s32.totalorder %s36, 0
      %p78 = por %p76, %p77
      %p79 = scmp.ne.s32.totalorder %s67, %s68
      %p80 = scmp.eq.s32.totalorder %s37, 1
      %p81 = por %p79, %p80
      %p83 = scmp.ne.s32.totalorder %s68, %s82
      %p84 = scmp.eq.s32.totalorder %s37, 0
      %p85 = por %p83, %p84
      %s87 = sadd.s32 %s86, 1
      %p90 = scmp.eq.s32.totalorder %s31, 1
      %p91 = scmp.ne.s32.totalorder %s86, %s88
      %p92 = scmp.eq.s32.totalorder %s31, 0
      %p93 = por %p91, %p92
      %p94 = scmp.ne.s32.totalorder %s86, %s88
      %p95 = scmp.eq.s32.totalorder %s36, 1
      %p96 = por %p94, %p95
      %p97 = scmp.ne.s32.totalorder %s88, %s89
      %p98 = scmp.eq.s32.totalorder %s36, 0
      %p99 = por %p97, %p98
      %p100 = scmp.ne.s32.totalorder %s88, %s89
      %p101 = scmp.eq.s32.totalorder %s37, 1
      %p102 = por %p100, %p101
      %p104 = scmp.ne.s32.totalorder %s89, %s103
      %p105 = scmp.eq.s32.totalorder %s37, 0
      %p106 = por %p104, %p105
      %s108 = sadd.s32 %s107, 1
      %p111 = scmp.eq.s32.totalorder %s31, 1
      %p112 = scmp.ne.s32.totalorder %s107, %s109
      %p113 = scmp.eq.s32.totalorder %s31, 0
      %p114 = por %p112, %p113
      %p115 = scmp.ne.s32.totalorder %s107, %s109
      %p116 = scmp.eq.s32.totalorder %s36, 1
      %p117 = por %p115, %p116
      %p118 = scmp.ne.s32.totalorder %s109, %s110
      %p119 = scmp.eq.s32.totalorder %s36, 0
      %p120 = por %p118, %p119
      %p121 = scmp.ne.s32.totalorder %s109, %s110
      %p122 = scmp.eq.s32.totalorder %s37, 1
      %p123 = por %p121, %p122
      %p125 = scmp.ne.s32.totalorder %s110, %s124
      %p126 = scmp.eq.s32.totalorder %s37, 0
      %p127 = por %p125, %p126
      %s129 = sadd.s32 %s128, 1
      %p132 = scmp.eq.s32.totalorder %s31, 1
      %p133 = scmp.ne.s32.totalorder %s128, %s130
      %p134 = scmp.eq.s32.totalorder %s31, 0
      %p135 = por %p133, %p134
      %p136 = scmp.ne.s32.totalorder %s128, %s130
      %p137 = scmp.eq.s32.totalorder %s36, 1
      %p138 = por %p136, %p137
      %p139 = scmp.ne.s32.totalorder %s130, %s131
      %p140 = scmp.eq.s32.totalorder %s36, 0
      %p141 = por %p139, %p140
      %p142 = scmp.ne.s32.totalorder %s130, %s131
      %p143 = scmp.eq.s32.totalorder %s37, 1
      %p144 = por %p142, %p143
      %p146 = scmp.ne.s32.totalorder %s131, %s145
      %p147 = scmp.eq.s32.totalorder %s37, 0
      %p148 = por %p146, %p147
      %s150 = sadd.s32 %s149, 1
      %p153 = scmp.eq.s32.totalorder %s31, 1
      %p154 = scmp.ne.s32.totalorder %s149, %s151
      %p155 = scmp.eq.s32.totalorder %s31, 0
      %p156 = por %p154, %p155
      %p157 = scmp.ne.s32.totalorder %s149, %s151
      %p158 = scmp.eq.s32.totalorder %s36, 1
      %p159 = por %p157, %p158
      %p160 = scmp.ne.s32.totalorder %s151, %s152
      %p161 = scmp.eq.s32.totalorder %s36, 0
      %p162 = por %p160, %p161
      %p163 = scmp.ne.s32.totalorder %s151, %s152
      %p164 = scmp.eq.s32.totalorder %s37, 1
      %p165 = por %p163, %p164
      %p167 = scmp.ne.s32.totalorder %s152, %s166
      %p168 = scmp.eq.s32.totalorder %s37, 0
      %p169 = por %p167, %p168
      %s171 = sadd.s32 %s170, 1
      %p174 = scmp.eq.s32.totalorder %s31, 1
      %p175 = scmp.ne.s32.totalorder %s170, %s172
      %p176 = scmp.eq.s32.totalorder %s31, 0
      %p177 = por %p175, %p176
      %p178 = scmp.ne.s32.totalorder %s170, %s172
      %p179 = scmp.eq.s32.totalorder %s36, 1
      %p180 = por %p178, %p179
      %p181 = scmp.ne.s32.totalorder %s172, %s173
      %p182 = scmp.eq.s32.totalorder %s36, 0
      %p183 = por %p181, %p182
      %p184 = scmp.ne.s32.totalorder %s172, %s173
      %p185 = scmp.eq.s32.totalorder %s37, 1
      %p186 = por %p184, %p185
      %p188 = scmp.ne.s32.totalorder %s173, %s187
      %p189 = scmp.eq.s32.totalorder %s37, 0
      %p190 = por %p188, %p189
      %s192 = sadd.s32 %s191, 1
      %p195 = scmp.eq.s32.totalorder %s31, 1
      %p196 = scmp.ne.s32.totalorder %s191, %s193
      %p197 = scmp.eq.s32.totalorder %s31, 0
      %p198 = por %p196, %p197
      %p199 = scmp.ne.s32.totalorder %s191, %s193
      %p200 = scmp.eq.s32.totalorder %s36, 1
      %p201 = por %p199, %p200
      %p202 = scmp.ne.s32.totalorder %s193, %s194
      %p203 = scmp.eq.s32.totalorder %s36, 0
      %p204 = por %p202, %p203
      %p205 = scmp.ne.s32.totalorder %s193, %s194
      %p206 = scmp.eq.s32.totalorder %s37, 1
      %p207 = por %p205, %p206
      %p209 = scmp.ne.s32.totalorder %s194, %s208
      %p210 = scmp.eq.s32.totalorder %s37, 0
      %p211 = por %p209, %p210
      %s213 = sadd.s32 %s212, 1
      %p216 = scmp.eq.s32.totalorder %s31, 1
      %p217 = scmp.ne.s32.totalorder %s212, %s214
      %p218 = scmp.eq.s32.totalorder %s31, 0
      %p219 = por %p217, %p218
      %p220 = scmp.ne.s32.totalorder %s212, %s214
      %p221 = scmp.eq.s32.totalorder %s36, 1
      %p222 = por %p220, %p221
      %p223 = scmp.ne.s32.totalorder %s214, %s215
      %p224 = scmp.eq.s32.totalorder %s36, 0
      %p225 = por %p223, %p224
      %p226 = scmp.ne.s32.totalorder %s214, %s215
      %p227 = scmp.eq.s32.totalorder %s37, 1
      %p228 = por %p226, %p227
      %p230 = scmp.ne.s32.totalorder %s215, %s229
      %p231 = scmp.eq.s32.totalorder %s37, 0
      %p232 = por %p230, %p231
      %s234 = sadd.s32 %s233, 1
      %p237 = scmp.eq.s32.totalorder %s31, 1
      %p238 = scmp.ne.s32.totalorder %s233, %s235
      %p239 = scmp.eq.s32.totalorder %s31, 0
      %p240 = por %p238, %p239
      %p241 = scmp.ne.s32.totalorder %s233, %s235
      %p242 = scmp.eq.s32.totalorder %s36, 1
      %p243 = por %p241, %p242
      %p244 = scmp.ne.s32.totalorder %s235, %s236
      %p245 = scmp.eq.s32.totalorder %s36, 0
      %p246 = por %p244, %p245
      %p247 = scmp.ne.s32.totalorder %s235, %s236
      %p248 = scmp.eq.s32.totalorder %s37, 1
      %p249 = por %p247, %p248
      %p251 = scmp.ne.s32.totalorder %s236, %s250
      %p252 = scmp.eq.s32.totalorder %s37, 0
      %p253 = por %p251, %p252
      %s255 = sadd.s32 %s254, 1
      %p258 = scmp.eq.s32.totalorder %s31, 1
      %p259 = scmp.ne.s32.totalorder %s254, %s256
      %p260 = scmp.eq.s32.totalorder %s31, 0
      %p261 = por %p259, %p260
      %p262 = scmp.ne.s32.totalorder %s254, %s256
      %p263 = scmp.eq.s32.totalorder %s36, 1
      %p264 = por %p262, %p263
      %p265 = scmp.ne.s32.totalorder %s256, %s257
      %p266 = scmp.eq.s32.totalorder %s36, 0
      %p267 = por %p265, %p266
      %p268 = scmp.ne.s32.totalorder %s256, %s257
      %p269 = scmp.eq.s32.totalorder %s37, 1
      %p270 = por %p268, %p269
      %p272 = scmp.ne.s32.totalorder %s257, %s271
      %p273 = scmp.eq.s32.totalorder %s37, 0
      %p274 = por %p272, %p273
      %s276 = sadd.s32 %s275, 1
      %p279 = scmp.eq.s32.totalorder %s31, 1
      %p280 = scmp.ne.s32.totalorder %s275, %s277
      %p281 = scmp.eq.s32.totalorder %s31, 0
      %p282 = por %p280, %p281
      %p283 = scmp.ne.s32.totalorder %s275, %s277
      %p284 = scmp.eq.s32.totalorder %s36, 1
      %p285 = por %p283, %p284
      %p286 = scmp.ne.s32.totalorder %s277, %s278
      %p287 = scmp.eq.s32.totalorder %s36, 0
      %p288 = por %p286, %p287
      %p289 = scmp.ne.s32.totalorder %s277, %s278
      %p290 = scmp.eq.s32.totalorder %s37, 1
      %p291 = por %p289, %p290
      %p293 = scmp.ne.s32.totalorder %s278, %s292
      %p294 = scmp.eq.s32.totalorder %s37, 0
      %p295 = por %p293, %p294
      %s297 = sadd.s32 %s296, 1
      %p300 = scmp.eq.s32.totalorder %s31, 1
      %p301 = scmp.ne.s32.totalorder %s296, %s298
      %p302 = scmp.eq.s32.totalorder %s31, 0
      %p303 = por %p301, %p302
      %p304 = scmp.ne.s32.totalorder %s296, %s298
      %p305 = scmp.eq.s32.totalorder %s36, 1
      %p306 = por %p304, %p305
      %p307 = scmp.ne.s32.totalorder %s298, %s299
      %p308 = scmp.eq.s32.totalorder %s36, 0
      %p309 = por %p307, %p308
      %p310 = scmp.ne.s32.totalorder %s298, %s299
      %p311 = scmp.eq.s32.totalorder %s37, 1
      %p312 = por %p310, %p311
      %p314 = scmp.ne.s32.totalorder %s299, %s313
      %p315 = scmp.eq.s32.totalorder %s37, 0
      %p316 = por %p314, %p315
      %s317 = ssub.s32 %s31, %s38
      %p318 = scmp.eq.s32.totalorder %s317, 0
      %s320 = sadd.s32 %s319, 1
      %s321 = scalar_select %p318, %s319, %s320
      %p324 = pneg %p318
      %p325 = scmp.eq.s32.totalorder %s31, 1
      %p326 = por %p324, %p325
      %p327 = scmp.ne.s32.totalorder %s319, %s322
      %p328 = scmp.eq.s32.totalorder %s31, 0
      %p329 = por %p327, %p328
      %p330 = scmp.ne.s32.totalorder %s319, %s322
      %p331 = scmp.eq.s32.totalorder %s36, 1
      %p332 = por %p330, %p331
      %p333 = scmp.ne.s32.totalorder %s322, %s323
      %p334 = scmp.eq.s32.totalorder %s36, 0
      %p335 = por %p333, %p334
      %p336 = scmp.ne.s32.totalorder %s322, %s323
      %p337 = scmp.eq.s32.totalorder %s37, 1
      %p338 = por %p336, %p337
      %p340 = scmp.ne.s32.totalorder %s323, %s339
      %p341 = scmp.eq.s32.totalorder %s37, 0
      %p342 = por %p340, %p341
      %p343 = scmp.le.s32.totalorder 1, %s31
      %p344 = scmp.lt.s32.totalorder %s31, 3
      %p345 = pnand %p343, %p344
      %p346 = pneg %p345
      // Predicated region
      $region9: #{tpu_custom_call.1} parent=5 // pred_check
        _
      $region10: #{tpu_custom_call.1} parent=5 // pred_check_branch
        %348 = sbr.rel (%p345) target = $region12
      $region11: #{tpu_custom_call.1} parent=5 // pred_region
        %s349 = ssub.s32 %s31, 1
        // Predicated region
        $region13: #{tpu_custom_call.1} parent=11 // pred_check
          %p350 = pneg %p78
        $region14: #{tpu_custom_call.1} parent=11 // pred_check_branch
          %352 = sbr.rel (%p350) target = $region16
        $region15: #{tpu_custom_call.1} parent=11 // pred_region
          %s354 = ssub.s32 16, 16
          %355 = vsyncadd [#allocation6], %s354
          %s357 = sshll.u32 [#allocation5], 4
          %s358 = int_to_ptr.vmem [resolvable:$true] %s357
          %360 = dma.hbm_to_vmem [thread:$0]  %s1, 16, %s358, [#allocation6]
        $region16: #{tpu_custom_call.1} parent=11 // pred_fallthru
          _
        // Predicated region
        $region17: #{tpu_custom_call.1} parent=11 // pred_check
          %p361 = pneg %p99
        $region18: #{tpu_custom_call.1} parent=11 // pred_check_branch
          %363 = sbr.rel (%p361) target = $region20
        $region19: #{tpu_custom_call.1} parent=11 // pred_region
          %s365 = ssub.s32 16, 16
          %366 = vsyncadd [#allocation6], %s365
          %s368 = sshll.u32 [#allocation7], 4
          %s369 = int_to_ptr.vmem [resolvable:$true] %s368
          %371 = dma.hbm_to_vmem [thread:$0]  %s2, 16, %s369, [#allocation6]
        $region20: #{tpu_custom_call.1} parent=11 // pred_fallthru
          _
        // Predicated region
        $region21: #{tpu_custom_call.1} parent=11 // pred_check
          %p372 = pneg %p120
        $region22: #{tpu_custom_call.1} parent=11 // pred_check_branch
          %374 = sbr.rel (%p372) target = $region24
        $region23: #{tpu_custom_call.1} parent=11 // pred_region
          %s376 = ssub.s32 256, 256
          %377 = vsyncadd [#allocation9], %s376
          %s378 = sshll.u32 [#allocation8], 4
          %s379 = int_to_ptr.vmem [resolvable:$true] %s378
          %384 = dma.hbm_to_vmem [thread:$0]  %s3, 256, %s379, [#allocation9], 64, 64, 4
        $region24: #{tpu_custom_call.1} parent=11 // pred_fallthru
          _
        // Predicated region
        $region25: #{tpu_custom_call.1} parent=11 // pred_check
          %p385 = pneg %p141
        $region26: #{tpu_custom_call.1} parent=11 // pred_check_branch
          %387 = sbr.rel (%p385) target = $region28
        $region27: #{tpu_custom_call.1} parent=11 // pred_region
          %s389 = ssub.s32 16, 16
          %390 = vsyncadd [#allocation9], %s389
          %s392 = sshll.u32 [#allocation10], 4
          %s393 = int_to_ptr.vmem [resolvable:$true] %s392
          %395 = dma.hbm_to_vmem [thread:$0]  %s4, 16, %s393, [#allocation9]
        $region28: #{tpu_custom_call.1} parent=11 // pred_fallthru
          _
        // Predicated region
        $region29: #{tpu_custom_call.1} parent=11 // pred_check
          %p396 = pneg %p162
        $region30: #{tpu_custom_call.1} parent=11 // pred_check_branch
          %398 = sbr.rel (%p396) target = $region32
        $region31: #{tpu_custom_call.1} parent=11 // pred_region
          %s400 = ssub.s32 256, 256
          %401 = vsyncadd [#allocation12], %s400
          %s402 = sshll.u32 [#allocation11], 4
          %s403 = int_to_ptr.vmem [resolvable:$true] %s402
          %408 = dma.hbm_to_vmem [thread:$0]  %s5, 256, %s403, [#allocation12], 64, 64, 4
        $region32: #{tpu_custom_call.1} parent=11 // pred_fallthru
          _
        // Predicated region
        $region33: #{tpu_custom_call.1} parent=11 // pred_check
          %p409 = pneg %p183
        $region34: #{tpu_custom_call.1} parent=11 // pred_check_branch
          %411 = sbr.rel (%p409) target = $region36
        $region35: #{tpu_custom_call.1} parent=11 // pred_region
          %s413 = ssub.s32 16, 16
          %414 = vsyncadd [#allocation12], %s413
          %s416 = sshll.u32 [#allocation13], 4
          %s417 = int_to_ptr.vmem [resolvable:$true] %s416
          %419 = dma.hbm_to_vmem [thread:$0]  %s6, 16, %s417, [#allocation12]
        $region36: #{tpu_custom_call.1} parent=11 // pred_fallthru
          _
        // Predicated region
        $region37: #{tpu_custom_call.1} parent=11 // pred_check
          %p420 = pneg %p204
        $region38: #{tpu_custom_call.1} parent=11 // pred_check_branch
          %422 = sbr.rel (%p420) target = $region40
        $region39: #{tpu_custom_call.1} parent=11 // pred_region
          %s424 = ssub.s32 16, 16
          %425 = vsyncadd [#allocation15], %s424
          %s427 = sshll.u32 [#allocation14], 4
          %s428 = int_to_ptr.vmem [resolvable:$true] %s427
          %430 = dma.hbm_to_vmem [thread:$0]  %s7, 16, %s428, [#allocation15]
        $region40: #{tpu_custom_call.1} parent=11 // pred_fallthru
          _
        // Predicated region
        $region41: #{tpu_custom_call.1} parent=11 // pred_check
          %p431 = pneg %p225
        $region42: #{tpu_custom_call.1} parent=11 // pred_check_branch
          %433 = sbr.rel (%p431) target = $region44
        $region43: #{tpu_custom_call.1} parent=11 // pred_region
          %s435 = ssub.s32 16, 16
          %436 = vsyncadd [#allocation15], %s435
          %s438 = sshll.u32 [#allocation16], 4
          %s439 = int_to_ptr.vmem [resolvable:$true] %s438
          %441 = dma.hbm_to_vmem [thread:$0]  %s8, 16, %s439, [#allocation15]
        $region44: #{tpu_custom_call.1} parent=11 // pred_fallthru
          _
        // Predicated region
        $region45: #{tpu_custom_call.1} parent=11 // pred_check
          %p442 = pneg %p246
        $region46: #{tpu_custom_call.1} parent=11 // pred_check_branch
          %444 = sbr.rel (%p442) target = $region48
        $region47: #{tpu_custom_call.1} parent=11 // pred_region
          %s446 = ssub.s32 256, 256
          %447 = vsyncadd [#allocation18], %s446
          %s448 = sshll.u32 [#allocation17], 4
          %s449 = int_to_ptr.vmem [resolvable:$true] %s448
          %454 = dma.hbm_to_vmem [thread:$0]  %s9, 256, %s449, [#allocation18], 64, 64, 4
        $region48: #{tpu_custom_call.1} parent=11 // pred_fallthru
          _
        // Predicated region
        $region49: #{tpu_custom_call.1} parent=11 // pred_check
          %p455 = pneg %p267
        $region50: #{tpu_custom_call.1} parent=11 // pred_check_branch
          %457 = sbr.rel (%p455) target = $region52
        $region51: #{tpu_custom_call.1} parent=11 // pred_region
          %s459 = ssub.s32 16, 16
          %460 = vsyncadd [#allocation18], %s459
          %s462 = sshll.u32 [#allocation19], 4
          %s463 = int_to_ptr.vmem [resolvable:$true] %s462
          %465 = dma.hbm_to_vmem [thread:$0]  %s10, 16, %s463, [#allocation18]
        $region52: #{tpu_custom_call.1} parent=11 // pred_fallthru
          _
        // Predicated region
        $region53: #{tpu_custom_call.1} parent=11 // pred_check
          %p466 = pneg %p288
        $region54: #{tpu_custom_call.1} parent=11 // pred_check_branch
          %468 = sbr.rel (%p466) target = $region56
        $region55: #{tpu_custom_call.1} parent=11 // pred_region
          %s470 = ssub.s32 1024, 1024
          %471 = vsyncadd [#allocation21], %s470
          %s472 = sshll.u32 [#allocation20], 4
          %s473 = int_to_ptr.vmem [resolvable:$true] %s472
          %478 = dma.hbm_to_vmem [thread:$0]  %s11, 1024, %s473, [#allocation21], 64, 64, 4
        $region56: #{tpu_custom_call.1} parent=11 // pred_fallthru
          _
        // Predicated region
        $region57: #{tpu_custom_call.1} parent=11 // pred_check
          %p479 = pneg %p309
        $region58: #{tpu_custom_call.1} parent=11 // pred_check_branch
          %481 = sbr.rel (%p479) target = $region60
        $region59: #{tpu_custom_call.1} parent=11 // pred_region
          %s483 = ssub.s32 16, 16
          %484 = vsyncadd [#allocation21], %s483
          %s486 = sshll.u32 [#allocation22], 4
          %s487 = int_to_ptr.vmem [resolvable:$true] %s486
          %489 = dma.hbm_to_vmem [thread:$0]  %s12, 16, %s487, [#allocation21]
        $region60: #{tpu_custom_call.1} parent=11 // pred_fallthru
          _
      $region12: #{tpu_custom_call.1} parent=5 // pred_fallthru
        _
      %p490 = scmp.lt.s32.totalorder %s31, 2
      // Predicated region
      $region61: #{tpu_custom_call.1} parent=5 // pred_check
        %p491 = pneg %p490
      $region62: #{tpu_custom_call.1} parent=5 // pred_check_branch
        %493 = sbr.rel (%p491) target = $region64
      $region63: #{tpu_custom_call.1} parent=5 // pred_region
        // Predicated region
        $region65: #{tpu_custom_call.1} parent=63 // pred_check
          %p494 = pneg %p51
        $region66: #{tpu_custom_call.1} parent=63 // pred_check_branch
          %496 = sbr.rel (%p494) target = $region68
        $region67: #{tpu_custom_call.1} parent=63 // pred_region
          %s497 = sand.u32 %s41, 1
          %s498 = scalar_lea.sflag [#allocation3], %s497
          %s499 = sand.u32 %s41, 1
          %s500 = smul.addr %s499, 8
          %s501 = scalar_lea.vmem [#allocation2], %s500
          %s503 = ssub.s32 128, 128
          %504 = vsyncadd %s498, %s503
          %s505 = smul.addr %s31, 128
          %s506 = scalar_lea.hbm %s0, %s505
          %s508 = sshll.u32 %s501, 4
          %s509 = int_to_ptr.vmem [resolvable:$true] %s508
          %511 = dma.hbm_to_vmem [thread:$0]  %s506, 128, %s509, %s498
        $region68: #{tpu_custom_call.1} parent=63 // pred_fallthru
          _
      $region64: #{tpu_custom_call.1} parent=5 // pred_fallthru
        _
      %p512 = scmp.le.s32.totalorder 1, %s31
      %p513 = scmp.lt.s32.totalorder %s31, 3
      %p514 = pnand %p512, %p513
      %p515 = pneg %p514
      // Predicated region
      $region69: #{tpu_custom_call.1} parent=5 // pred_check
        _
      $region70: #{tpu_custom_call.1} parent=5 // pred_check_branch
        %517 = sbr.rel (%p514) target = $region72
      $region71: #{tpu_custom_call.1} parent=5 // pred_region
        %s518 = ssub.s32 %s31, 1
        %s519 = sand.u32 %s44, 1
        %s520 = scalar_lea.sflag [#allocation3], %s519
        %s521 = sand.u32 %s44, 1
        %s522 = smul.addr %s521, 8
        %s523 = scalar_lea.vmem [#allocation2], %s522
        // Predicated region
        $region73: #{tpu_custom_call.1} parent=71 // pred_check
          %p524 = pneg %p57
        $region74: #{tpu_custom_call.1} parent=71 // pred_check_branch
          %526 = sbr.rel (%p524) target = $region76
        $region75: #{tpu_custom_call.1} parent=71 // pred_region
          %527 = dma.done %s520, 128
        $region76: #{tpu_custom_call.1} parent=71 // pred_fallthru
          _
        // Predicated region
        $region77: #{tpu_custom_call.1} parent=71 // pred_check
          %p528 = pneg %p78
        $region78: #{tpu_custom_call.1} parent=71 // pred_check_branch
          %530 = sbr.rel (%p528) target = $region80
        $region79: #{tpu_custom_call.1} parent=71 // pred_region
          %531 = dma.done [#allocation6], 16
        $region80: #{tpu_custom_call.1} parent=71 // pred_fallthru
          _
        // Predicated region
        $region81: #{tpu_custom_call.1} parent=71 // pred_check
          %p532 = pneg %p99
        $region82: #{tpu_custom_call.1} parent=71 // pred_check_branch
          %534 = sbr.rel (%p532) target = $region84
        $region83: #{tpu_custom_call.1} parent=71 // pred_region
          %535 = dma.done [#allocation6], 16
        $region84: #{tpu_custom_call.1} parent=71 // pred_fallthru
          _
        // Predicated region
        $region85: #{tpu_custom_call.1} parent=71 // pred_check
          %p536 = pneg %p120
        $region86: #{tpu_custom_call.1} parent=71 // pred_check_branch
          %538 = sbr.rel (%p536) target = $region88
        $region87: #{tpu_custom_call.1} parent=71 // pred_region
          %539 = dma.done [#allocation9], 256
        $region88: #{tpu_custom_call.1} parent=71 // pred_fallthru
          _
        // Predicated region
        $region89: #{tpu_custom_call.1} parent=71 // pred_check
          %p540 = pneg %p141
        $region90: #{tpu_custom_call.1} parent=71 // pred_check_branch
          %542 = sbr.rel (%p540) target = $region92
        $region91: #{tpu_custom_call.1} parent=71 // pred_region
          %543 = dma.done [#allocation9], 16
        $region92: #{tpu_custom_call.1} parent=71 // pred_fallthru
          _
        // Predicated region
        $region93: #{tpu_custom_call.1} parent=71 // pred_check
          %p544 = pneg %p162
        $region94: #{tpu_custom_call.1} parent=71 // pred_check_branch
          %546 = sbr.rel (%p544) target = $region96
        $region95: #{tpu_custom_call.1} parent=71 // pred_region
          %547 = dma.done [#allocation12], 256
        $region96: #{tpu_custom_call.1} parent=71 // pred_fallthru
          _
        // Predicated region
        $region97: #{tpu_custom_call.1} parent=71 // pred_check
          %p548 = pneg %p183
        $region98: #{tpu_custom_call.1} parent=71 // pred_check_branch
          %550 = sbr.rel (%p548) target = $region100
        $region99: #{tpu_custom_call.1} parent=71 // pred_region
          %551 = dma.done [#allocation12], 16
        $region100: #{tpu_custom_call.1} parent=71 // pred_fallthru
          _
        // Predicated region
        $region101: #{tpu_custom_call.1} parent=71 // pred_check
          %p552 = pneg %p204
        $region102: #{tpu_custom_call.1} parent=71 // pred_check_branch
          %554 = sbr.rel (%p552) target = $region104
        $region103: #{tpu_custom_call.1} parent=71 // pred_region
          %555 = dma.done [#allocation15], 16
        $region104: #{tpu_custom_call.1} parent=71 // pred_fallthru
          _
        // Predicated region
        $region105: #{tpu_custom_call.1} parent=71 // pred_check
          %p556 = pneg %p225
        $region106: #{tpu_custom_call.1} parent=71 // pred_check_branch
          %558 = sbr.rel (%p556) target = $region108
        $region107: #{tpu_custom_call.1} parent=71 // pred_region
          %559 = dma.done [#allocation15], 16
        $region108: #{tpu_custom_call.1} parent=71 // pred_fallthru
          _
        // Predicated region
        $region109: #{tpu_custom_call.1} parent=71 // pred_check
          %p560 = pneg %p246
        $region110: #{tpu_custom_call.1} parent=71 // pred_check_branch
          %562 = sbr.rel (%p560) target = $region112
        $region111: #{tpu_custom_call.1} parent=71 // pred_region
          %563 = dma.done [#allocation18], 256
        $region112: #{tpu_custom_call.1} parent=71 // pred_fallthru
          _
        // Predicated region
        $region113: #{tpu_custom_call.1} parent=71 // pred_check
          %p564 = pneg %p267
        $region114: #{tpu_custom_call.1} parent=71 // pred_check_branch
          %566 = sbr.rel (%p564) target = $region116
        $region115: #{tpu_custom_call.1} parent=71 // pred_region
          %567 = dma.done [#allocation18], 16
        $region116: #{tpu_custom_call.1} parent=71 // pred_fallthru
          _
        // Predicated region
        $region117: #{tpu_custom_call.1} parent=71 // pred_check
          %p568 = pneg %p288
        $region118: #{tpu_custom_call.1} parent=71 // pred_check_branch
          %570 = sbr.rel (%p568) target = $region120
        $region119: #{tpu_custom_call.1} parent=71 // pred_region
          %571 = dma.done [#allocation21], 1024
        $region120: #{tpu_custom_call.1} parent=71 // pred_fallthru
          _
        // Predicated region
        $region121: #{tpu_custom_call.1} parent=71 // pred_check
          %p572 = pneg %p309
        $region122: #{tpu_custom_call.1} parent=71 // pred_check_branch
          %574 = sbr.rel (%p572) target = $region124
        $region123: #{tpu_custom_call.1} parent=71 // pred_region
          %575 = dma.done [#allocation21], 16
        $region124: #{tpu_custom_call.1} parent=71 // pred_fallthru
          _
        %s576 = sand.u32 %s44, 1
        %s577 = scalar_lea.sflag [#allocation3], %s576
        %s578 = sand.u32 %s44, 1
        %s579 = smul.addr %s578, 8
        %s580 = scalar_lea.vmem [#allocation2], %s579
        %p581 = pneg %p57
        %p582 = pneg %p54
        %p583 = pneg %p78
        %p584 = pneg %p75
        %p585 = pneg %p99
        %p586 = pneg %p96
        %p587 = pneg %p120
        %p588 = pneg %p117
        %p589 = pneg %p141
        %p590 = pneg %p138
        %p591 = pneg %p162
        %p592 = pneg %p159
        %p593 = pneg %p183
        %p594 = pneg %p180
        %p595 = pneg %p204
        %p596 = pneg %p201
        %p597 = pneg %p225
        %p598 = pneg %p222
        %p599 = pneg %p246
        %p600 = pneg %p243
        %p601 = pneg %p267
        %p602 = pneg %p264
        %p603 = pneg %p288
        %p604 = pneg %p285
        %p605 = pneg %p309
        %p606 = pneg %p306
        %p607 = pneg %p335
        %p608 = pneg %p332
        %s609 = sand.u32 %s322, 1
        %s610 = scalar_lea.sflag [#allocation4], %s609
        %s611 = sand.u32 %s322, 1
        %s612 = smul.addr %s611, 8
        %s613 = scalar_lea.vmem [#allocation23], %s612
        %v615 = vld [vmem:[%s523] sm:$0xff]
        %v616 = vld [vmem:[#allocation5] sm:$0x1]
        %v617 = vld [vmem:[#allocation7] sm:$0x1]
        %vm618 = vcmask 261120
        %v619 = vsel %vm618, %v615, 0.0
        %620 = vadd.xlane.f32.xlu0 %v619
        %v621 = vpop.xlane.xlu0 %620
        %v622 = vrcp.pop 32.0
        %v623 = vmul.f32 %v621, %v622
        %v624 = vsub.f32 %v615, %v623
        %v625 = vmul.f32 %v624, %v624
        %v626 = vsel %vm618, %v625, 0.0
        %627 = vadd.xlane.f32.xlu0 %v626
        %v628 = vpop.xlane.xlu0 %627
        %v629 = vmul.f32 %v628, %v622
        %v630 = vadd.f32 %v629, 1e-05
        %v631 = vrsqrt.pop %v630
        %v632 = vmul.f32 %v624, %v631
        %v634 = vlaneseq
        %v635 = vshrl.u32 %v634, 7
        %v636 = vsub.s32 0, %v635
        %v637 = vrot.slane %v616, %v636
        %v639 = vmul.f32 %v632, %v637
        %v641 = vlaneseq
        %v642 = vshrl.u32 %v641, 7
        %v643 = vsub.s32 0, %v642
        %v644 = vrot.slane %v617, %v643
        %v646 = vadd.f32 %v639, %v644
        %v647 = vpack.c.bf16 %v646, %v646
        %v648 = vld [vmem:[#allocation8] sm:$0xf]
        %v649 = vld [vmem:[#allocation8 + $0x4] sm:$0xf]
        %v650 = vld [vmem:[#allocation8 + $0x8] sm:$0xf]
        %v651 = vld [vmem:[#allocation8 + $0xc] sm:$0xf]
        %v652 = vld [vmem:[#allocation10] sm:$0x1]
        %v654 = vlaneseq
        %v655 = vshrl.u32 %v654, 7
        %v656 = vsub.s32 0, %v655
        %v657 = vrot.slane %v652, %v656
        %v663 = vunpack.c.l.b16 %v648
        %v664 = vunpack.c.l.b16 %v649
        %v665 = vunpack.c.l.b16 %v650
        %v666 = vunpack.c.l.b16 %v651
        %v667 = vpack.c.b16 %v664, %v663
        %v668 = vpack.c.b16 %v666, %v665
        %v672 = vsel %vm618, %v647, 0
        %674 = vmatprep.subr.bf16.mxu0 0
        %675 = vmatpush1.bf16.msra.mxu0 %v667
        %676 = vmatprep.subr.bf16.mxu0 0
        %677 = vmatpush1.bf16.msra.mxu0 %v668
        %678 = vmatprep.subr.bf16.mxu0 0
        %679 = vmatpush1.bf16.msra.mxu0 0
        %680 = vmatprep.subr.bf16.mxu0 0
        %681 = vmatpush1.bf16.msra.mxu0 0
        %682 = vmatprep.subr.bf16.mxu0 0
        %683 = vmatpush1.bf16.msra.mxu0 0
        %684 = vmatprep.subr.bf16.mxu0 0
        %685 = vmatpush1.bf16.msra.mxu0 0
        %686 = vmatprep.subr.bf16.mxu0 0
        %687 = vmatpush1.bf16.msra.mxu0 0
        %688 = vmatprep.subr.bf16.mxu0 0
        %689 = vmatpush1.bf16.msra.mxu0 0
        %690 = vmatprep.subr.bf16.mxu0 0
        %691 = vmatpush1.bf16.msra.mxu0 0
        %692 = vmatprep.subr.bf16.mxu0 0
        %693 = vmatpush1.bf16.msra.mxu0 0
        %694 = vmatprep.subr.bf16.mxu0 0
        %695 = vmatpush1.bf16.msra.mxu0 0
        %696 = vmatprep.subr.bf16.mxu0 0
        %697 = vmatpush1.bf16.msra.mxu0 0
        %698 = vmatprep.subr.bf16.mxu0 0
        %699 = vmatpush1.bf16.msra.mxu0 0
        %700 = vmatprep.subr.bf16.mxu0 0
        %701 = vmatpush1.bf16.msra.mxu0 0
        %702 = vmatprep.subr.bf16.mxu0 0
        %703 = vmatpush1.bf16.msra.mxu0 0
        %704 = vmatprep.subr.bf16.mxu0 0
        %705 = vmatpush1.bf16.msra.mxu0 0
        %706 = vmatprep.mubr.bf16.mxu0 0
        %707 = vmatmul.mubr.bf16.gmra.mrb[0].mxu0 %v672
        %v708 = vpop.f32.mrb[0].mxu0
        %v709 = vadd.f32 %v657, %v708
        %v710 = vpop.f32.mrb[0].mxu0
        %v711 = vpop.f32.mrb[0].mxu0
        %v712 = vpop.f32.mrb[0].mxu0
        %713 = vdwg.mxu0
        %v714 = vmul.f32 %v709, 0.35355338
        %v715 = vpack.c.bf16 %v714, %v714
        %v716 = vpack.c.bf16 %v709, %v709
        %718 = vrot.lane.b32.xlu0 %v716, 96
        %v719 = vpop.permute.xlu0 %718
        %vm720 = vcmask 64512
        %v722 = vsel %vm720, %v715, 0
        %v725 = vsel %vm720, %v719, 0
        %727 = vmatprep.subr.bf16.mxu0 0
        %728 = vmatpush1.bf16.xpose.msra.mxu0 %v725
        %729 = vmatprep.subr.bf16.mxu0 0
        %730 = vmatpush1.bf16.xpose.msra.mxu0 0
        %731 = vmatprep.subr.bf16.mxu0 0
        %732 = vmatpush1.bf16.xpose.msra.mxu0 0
        %733 = vmatprep.subr.bf16.mxu0 0
        %734 = vmatpush1.bf16.xpose.msra.mxu0 0
        %735 = vmatprep.subr.bf16.mxu0 0
        %736 = vmatpush1.bf16.xpose.msra.mxu0 0
        %737 = vmatprep.subr.bf16.mxu0 0
        %738 = vmatpush1.bf16.xpose.msra.mxu0 0
        %739 = vmatprep.subr.bf16.mxu0 0
        %740 = vmatpush1.bf16.xpose.msra.mxu0 0
        %741 = vmatprep.subr.bf16.mxu0 0
        %742 = vmatpush1.bf16.xpose.msra.mxu0 0
        %743 = vmatprep.subr.bf16.mxu0 0
        %744 = vmatpush1.bf16.xpose.msra.mxu0 0
        %745 = vmatprep.subr.bf16.mxu0 0
        %746 = vmatpush1.bf16.xpose.msra.mxu0 0
        %747 = vmatprep.subr.bf16.mxu0 0
        %748 = vmatpush1.bf16.xpose.msra.mxu0 0
        %749 = vmatprep.subr.bf16.mxu0 0
        %750 = vmatpush1.bf16.xpose.msra.mxu0 0
        %751 = vmatprep.subr.bf16.mxu0 0
        %752 = vmatpush1.bf16.xpose.msra.mxu0 0
        %753 = vmatprep.subr.bf16.mxu0 0
        %754 = vmatpush1.bf16.xpose.msra.mxu0 0
        %755 = vmatprep.subr.bf16.mxu0 0
        %756 = vmatpush1.bf16.xpose.msra.mxu0 0
        %757 = vmatprep.subr.bf16.mxu0 0
        %758 = vmatpush1.bf16.xpose.msra.mxu0 0
        %759 = vmatprep.mubr.bf16.mxu0 0
        %760 = vmatmul.mubr.bf16.gmra.mrb[0].mxu0 %v722
        %v761 = vpop.f32.mrb[0].mxu0
        %v762 = vadd.f32 0.0, %v761
        %v763 = vpop.f32.mrb[0].mxu0
        %v764 = vpop.f32.mrb[0].mxu0
        %v765 = vpop.f32.mrb[0].mxu0
        %766 = vdwg.mxu0
        %v767 = vsel %vm720, %v762, -inf
        %768 = vmax.xlane.f32.xlu0 %v767
        %v769 = vpop.xlane.xlu0 %768
        %v770 = vsub.f32 %v762, %v769
        %v771 = vmul.f32 %v770, 1.442695
        %v772 = vpow.pop %v771
        %v773 = vsel %vm720, %v772, 0.0
        %774 = vadd.xlane.f32.xlu0 %v773
        %v775 = vpop.xlane.xlu0 %774
        %v776 = vrcp.pop %v775
        %v777 = vmul.f32 %v772, %v776
        %v778 = vpack.c.bf16 %v777, %v777
        %779 = vrot.lane.b32.xlu0 %v716, 64
        %v780 = vpop.permute.xlu0 %779
        %v782 = vsel %vm720, %v778, 0
        %vm784 = vcmask 1043456
        %v786 = vsel %vm784, %v780, 0
        %788 = vmatprep.subr.bf16.mxu0 0
        %789 = vmatpush1.bf16.msra.mxu0 %v786
        %790 = vmatprep.subr.bf16.mxu0 0
        %791 = vmatpush1.bf16.msra.mxu0 0
        %792 = vmatprep.subr.bf16.mxu0 0
        %793 = vmatpush1.bf16.msra.mxu0 0
        %794 = vmatprep.subr.bf16.mxu0 0
        %795 = vmatpush1.bf16.msra.mxu0 0
        %796 = vmatprep.subr.bf16.mxu0 0
        %797 = vmatpush1.bf16.msra.mxu0 0
        %798 = vmatprep.subr.bf16.mxu0 0
        %799 = vmatpush1.bf16.msra.mxu0 0
        %800 = vmatprep.subr.bf16.mxu0 0
        %801 = vmatpush1.bf16.msra.mxu0 0
        %802 = vmatprep.subr.bf16.mxu0 0
        %803 = vmatpush1.bf16.msra.mxu0 0
        %804 = vmatprep.subr.bf16.mxu0 0
        %805 = vmatpush1.bf16.msra.mxu0 0
        %806 = vmatprep.subr.bf16.mxu0 0
        %807 = vmatpush1.bf16.msra.mxu0 0
        %808 = vmatprep.subr.bf16.mxu0 0
        %809 = vmatpush1.bf16.msra.mxu0 0
        %810 = vmatprep.subr.bf16.mxu0 0
        %811 = vmatpush1.bf16.msra.mxu0 0
        %812 = vmatprep.subr.bf16.mxu0 0
        %813 = vmatpush1.bf16.msra.mxu0 0
        %814 = vmatprep.subr.bf16.mxu0 0
        %815 = vmatpush1.bf16.msra.mxu0 0
        %816 = vmatprep.subr.bf16.mxu0 0
        %817 = vmatpush1.bf16.msra.mxu0 0
        %818 = vmatprep.subr.bf16.mxu0 0
        %819 = vmatpush1.bf16.msra.mxu0 0
        %820 = vmatprep.mubr.bf16.mxu0 0
        %821 = vmatmul.mubr.bf16.gmra.mrb[0].mxu0 %v782
        %v822 = vpop.f32.mrb[0].mxu0
        %v823 = vadd.f32 0.0, %v822
        %v824 = vpop.f32.mrb[0].mxu0
        %v825 = vpop.f32.mrb[0].mxu0
        %v826 = vpop.f32.mrb[0].mxu0
        %827 = vdwg.mxu0
        %829 = vrot.lane.b32.xlu0 %v715, 120
        %v830 = vpop.permute.xlu0 %829
        %831 = vrot.lane.b32.xlu0 %v716, 88
        %v832 = vpop.permute.xlu0 %831
        %v834 = vsel %vm720, %v830, 0
        %v837 = vsel %vm720, %v832, 0
        %839 = vmatprep.subr.bf16.mxu0 0
        %840 = vmatpush1.bf16.xpose.msra.mxu0 %v837
        %841 = vmatprep.subr.bf16.mxu0 0
        %842 = vmatpush1.bf16.xpose.msra.mxu0 0
        %843 = vmatprep.subr.bf16.mxu0 0
        %844 = vmatpush1.bf16.xpose.msra.mxu0 0
        %845 = vmatprep.subr.bf16.mxu0 0
        %846 = vmatpush1.bf16.xpose.msra.mxu0 0
        %847 = vmatprep.subr.bf16.mxu0 0
        %848 = vmatpush1.bf16.xpose.msra.mxu0 0
        %849 = vmatprep.subr.bf16.mxu0 0
        %850 = vmatpush1.bf16.xpose.msra.mxu0 0
        %851 = vmatprep.subr.bf16.mxu0 0
        %852 = vmatpush1.bf16.xpose.msra.mxu0 0
        %853 = vmatprep.subr.bf16.mxu0 0
        %854 = vmatpush1.bf16.xpose.msra.mxu0 0
        %855 = vmatprep.subr.bf16.mxu0 0
        %856 = vmatpush1.bf16.xpose.msra.mxu0 0
        %857 = vmatprep.subr.bf16.mxu0 0
        %858 = vmatpush1.bf16.xpose.msra.mxu0 0
        %859 = vmatprep.subr.bf16.mxu0 0
        %860 = vmatpush1.bf16.xpose.msra.mxu0 0
        %861 = vmatprep.subr.bf16.mxu0 0
        %862 = vmatpush1.bf16.xpose.msra.mxu0 0
        %863 = vmatprep.subr.bf16.mxu0 0
        %864 = vmatpush1.bf16.xpose.msra.mxu0 0
        %865 = vmatprep.subr.bf16.mxu0 0
        %866 = vmatpush1.bf16.xpose.msra.mxu0 0
        %867 = vmatprep.subr.bf16.mxu0 0
        %868 = vmatpush1.bf16.xpose.msra.mxu0 0
        %869 = vmatprep.subr.bf16.mxu0 0
        %870 = vmatpush1.bf16.xpose.msra.mxu0 0
        %871 = vmatprep.mubr.bf16.mxu0 0
        %872 = vmatmul.mubr.bf16.gmra.mrb[0].mxu0 %v834
        %v873 = vpop.f32.mrb[0].mxu0
        %v874 = vadd.f32 0.0, %v873
        %v875 = vpop.f32.mrb[0].mxu0
        %v876 = vpop.f32.mrb[0].mxu0
        %v877 = vpop.f32.mrb[0].mxu0
        %878 = vdwg.mxu0
        %v879 = vsel %vm720, %v874, -inf
        %880 = vmax.xlane.f32.xlu0 %v879
        %v881 = vpop.xlane.xlu0 %880
        %v882 = vsub.f32 %v874, %v881
        %v883 = vmul.f32 %v882, 1.442695
        %v884 = vpow.pop %v883
        %v885 = vsel %vm720, %v884, 0.0
        %886 = vadd.xlane.f32.xlu0 %v885
        %v887 = vpop.xlane.xlu0 %886
        %v888 = vrcp.pop %v887
        %v889 = vmul.f32 %v884, %v888
        %v890 = vpack.c.bf16 %v889, %v889
        %891 = vrot.lane.b32.xlu0 %v716, 56
        %v892 = vpop.permute.xlu0 %891
        %v894 = vsel %vm720, %v890, 0
        %v897 = vsel %vm784, %v892, 0
        %899 = vmatprep.subr.bf16.mxu0 0
        %900 = vmatpush1.bf16.msra.mxu0 %v897
        %901 = vmatprep.subr.bf16.mxu0 0
        %902 = vmatpush1.bf16.msra.mxu0 0
        %903 = vmatprep.subr.bf16.mxu0 0
        %904 = vmatpush1.bf16.msra.mxu0 0
        %905 = vmatprep.subr.bf16.mxu0 0
        %906 = vmatpush1.bf16.msra.mxu0 0
        %907 = vmatprep.subr.bf16.mxu0 0
        %908 = vmatpush1.bf16.msra.mxu0 0
        %909 = vmatprep.subr.bf16.mxu0 0
        %910 = vmatpush1.bf16.msra.mxu0 0
        %911 = vmatprep.subr.bf16.mxu0 0
        %912 = vmatpush1.bf16.msra.mxu0 0
        %913 = vmatprep.subr.bf16.mxu0 0
        %914 = vmatpush1.bf16.msra.mxu0 0
        %915 = vmatprep.subr.bf16.mxu0 0
        %916 = vmatpush1.bf16.msra.mxu0 0
        %917 = vmatprep.subr.bf16.mxu0 0
        %918 = vmatpush1.bf16.msra.mxu0 0
        %919 = vmatprep.subr.bf16.mxu0 0
        %920 = vmatpush1.bf16.msra.mxu0 0
        %921 = vmatprep.subr.bf16.mxu0 0
        %922 = vmatpush1.bf16.msra.mxu0 0
        %923 = vmatprep.subr.bf16.mxu0 0
        %924 = vmatpush1.bf16.msra.mxu0 0
        %925 = vmatprep.subr.bf16.mxu0 0
        %926 = vmatpush1.bf16.msra.mxu0 0
        %927 = vmatprep.subr.bf16.mxu0 0
        %928 = vmatpush1.bf16.msra.mxu0 0
        %929 = vmatprep.subr.bf16.mxu0 0
        %930 = vmatpush1.bf16.msra.mxu0 0
        %931 = vmatprep.mubr.bf16.mxu0 0
        %932 = vmatmul.mubr.bf16.gmra.mrb[0].mxu0 %v894
        %v933 = vpop.f32.mrb[0].mxu0
        %v934 = vadd.f32 0.0, %v933
        %v935 = vpop.f32.mrb[0].mxu0
        %v936 = vpop.f32.mrb[0].mxu0
        %v937 = vpop.f32.mrb[0].mxu0
        %938 = vdwg.mxu0
        %939 = vrot.lane.b32.xlu0 %v715, 112
        %v940 = vpop.permute.xlu0 %939
        %941 = vrot.lane.b32.xlu0 %v716, 80
        %v942 = vpop.permute.xlu0 %941
        %v944 = vsel %vm720, %v940, 0
        %v947 = vsel %vm720, %v942, 0
        %949 = vmatprep.subr.bf16.mxu0 0
        %950 = vmatpush1.bf16.xpose.msra.mxu0 %v947
        %951 = vmatprep.subr.bf16.mxu0 0
        %952 = vmatpush1.bf16.xpose.msra.mxu0 0
        %953 = vmatprep.subr.bf16.mxu0 0
        %954 = vmatpush1.bf16.xpose.msra.mxu0 0
        %955 = vmatprep.subr.bf16.mxu0 0
        %956 = vmatpush1.bf16.xpose.msra.mxu0 0
        %957 = vmatprep.subr.bf16.mxu0 0
        %958 = vmatpush1.bf16.xpose.msra.mxu0 0
        %959 = vmatprep.subr.bf16.mxu0 0
        %960 = vmatpush1.bf16.xpose.msra.mxu0 0
        %961 = vmatprep.subr.bf16.mxu0 0
        %962 = vmatpush1.bf16.xpose.msra.mxu0 0
        %963 = vmatprep.subr.bf16.mxu0 0
        %964 = vmatpush1.bf16.xpose.msra.mxu0 0
        %965 = vmatprep.subr.bf16.mxu0 0
        %966 = vmatpush1.bf16.xpose.msra.mxu0 0
        %967 = vmatprep.subr.bf16.mxu0 0
        %968 = vmatpush1.bf16.xpose.msra.mxu0 0
        %969 = vmatprep.subr.bf16.mxu0 0
        %970 = vmatpush1.bf16.xpose.msra.mxu0 0
        %971 = vmatprep.subr.bf16.mxu0 0
        %972 = vmatpush1.bf16.xpose.msra.mxu0 0
        %973 = vmatprep.subr.bf16.mxu0 0
        %974 = vmatpush1.bf16.xpose.msra.mxu0 0
        %975 = vmatprep.subr.bf16.mxu0 0
        %976 = vmatpush1.bf16.xpose.msra.mxu0 0
        %977 = vmatprep.subr.bf16.mxu0 0
        %978 = vmatpush1.bf16.xpose.msra.mxu0 0
        %979 = vmatprep.subr.bf16.mxu0 0
        %980 = vmatpush1.bf16.xpose.msra.mxu0 0
        %981 = vmatprep.mubr.bf16.mxu0 0
        %982 = vmatmul.mubr.bf16.gmra.mrb[0].mxu0 %v944
        %v983 = vpop.f32.mrb[0].mxu0
        %v984 = vadd.f32 0.0, %v983
        %v985 = vpop.f32.mrb[0].mxu0
        %v986 = vpop.f32.mrb[0].mxu0
        %v987 = vpop.f32.mrb[0].mxu0
        %988 = vdwg.mxu0
        %v989 = vsel %vm720, %v984, -inf
        %990 = vmax.xlane.f32.xlu0 %v989
        %v991 = vpop.xlane.xlu0 %990
        %v992 = vsub.f32 %v984, %v991
        %v993 = vmul.f32 %v992, 1.442695
        %v994 = vpow.pop %v993
        %v995 = vsel %vm720, %v994, 0.0
        %996 = vadd.xlane.f32.xlu0 %v995
        %v997 = vpop.xlane.xlu0 %996
        %v998 = vrcp.pop %v997
        %v999 = vmul.f32 %v994, %v998
        %v1000 = vpack.c.bf16 %v999, %v999
        %1001 = vrot.lane.b32.xlu0 %v716, 48
        %v1002 = vpop.permute.xlu0 %1001
        %v1004 = vsel %vm720, %v1000, 0
        %v1007 = vsel %vm784, %v1002, 0
        %1009 = vmatprep.subr.bf16.mxu0 0
        %1010 = vmatpush1.bf16.msra.mxu0 %v1007
        %1011 = vmatprep.subr.bf16.mxu0 0
        %1012 = vmatpush1.bf16.msra.mxu0 0
        %1013 = vmatprep.subr.bf16.mxu0 0
        %1014 = vmatpush1.bf16.msra.mxu0 0
        %1015 = vmatprep.subr.bf16.mxu0 0
        %1016 = vmatpush1.bf16.msra.mxu0 0
        %1017 = vmatprep.subr.bf16.mxu0 0
        %1018 = vmatpush1.bf16.msra.mxu0 0
        %1019 = vmatprep.subr.bf16.mxu0 0
        %1020 = vmatpush1.bf16.msra.mxu0 0
        %1021 = vmatprep.subr.bf16.mxu0 0
        %1022 = vmatpush1.bf16.msra.mxu0 0
        %1023 = vmatprep.subr.bf16.mxu0 0
        %1024 = vmatpush1.bf16.msra.mxu0 0
        %1025 = vmatprep.subr.bf16.mxu0 0
        %1026 = vmatpush1.bf16.msra.mxu0 0
        %1027 = vmatprep.subr.bf16.mxu0 0
        %1028 = vmatpush1.bf16.msra.mxu0 0
        %1029 = vmatprep.subr.bf16.mxu0 0
        %1030 = vmatpush1.bf16.msra.mxu0 0
        %1031 = vmatprep.subr.bf16.mxu0 0
        %1032 = vmatpush1.bf16.msra.mxu0 0
        %1033 = vmatprep.subr.bf16.mxu0 0
        %1034 = vmatpush1.bf16.msra.mxu0 0
        %1035 = vmatprep.subr.bf16.mxu0 0
        %1036 = vmatpush1.bf16.msra.mxu0 0
        %1037 = vmatprep.subr.bf16.mxu0 0
        %1038 = vmatpush1.bf16.msra.mxu0 0
        %1039 = vmatprep.subr.bf16.mxu0 0
        %1040 = vmatpush1.bf16.msra.mxu0 0
        %1041 = vmatprep.mubr.bf16.mxu0 0
        %1042 = vmatmul.mubr.bf16.gmra.mrb[0].mxu0 %v1004
        %v1043 = vpop.f32.mrb[0].mxu0
        %v1044 = vadd.f32 0.0, %v1043
        %v1045 = vpop.f32.mrb[0].mxu0
        %v1046 = vpop.f32.mrb[0].mxu0
        %v1047 = vpop.f32.mrb[0].mxu0
        %1048 = vdwg.mxu0
        %1049 = vrot.lane.b32.xlu0 %v715, 104
        %v1050 = vpop.permute.xlu0 %1049
        %1051 = vrot.lane.b32.xlu0 %v716, 72
        %v1052 = vpop.permute.xlu0 %1051
        %v1054 = vsel %vm720, %v1050, 0
        %v1057 = vsel %vm720, %v1052, 0
        %1059 = vmatprep.subr.bf16.mxu0 0
        %1060 = vmatpush1.bf16.xpose.msra.mxu0 %v1057
        %1061 = vmatprep.subr.bf16.mxu0 0
        %1062 = vmatpush1.bf16.xpose.msra.mxu0 0
        %1063 = vmatprep.subr.bf16.mxu0 0
        %1064 = vmatpush1.bf16.xpose.msra.mxu0 0
        %1065 = vmatprep.subr.bf16.mxu0 0
        %1066 = vmatpush1.bf16.xpose.msra.mxu0 0
        %1067 = vmatprep.subr.bf16.mxu0 0
        %1068 = vmatpush1.bf16.xpose.msra.mxu0 0
        %1069 = vmatprep.subr.bf16.mxu0 0
        %1070 = vmatpush1.bf16.xpose.msra.mxu0 0
        %1071 = vmatprep.subr.bf16.mxu0 0
        %1072 = vmatpush1.bf16.xpose.msra.mxu0 0
        %1073 = vmatprep.subr.bf16.mxu0 0
        %1074 = vmatpush1.bf16.xpose.msra.mxu0 0
        %1075 = vmatprep.subr.bf16.mxu0 0
        %1076 = vmatpush1.bf16.xpose.msra.mxu0 0
        %1077 = vmatprep.subr.bf16.mxu0 0
        %1078 = vmatpush1.bf16.xpose.msra.mxu0 0
        %1079 = vmatprep.subr.bf16.mxu0 0
        %1080 = vmatpush1.bf16.xpose.msra.mxu0 0
        %1081 = vmatprep.subr.bf16.mxu0 0
        %1082 = vmatpush1.bf16.xpose.msra.mxu0 0
        %1083 = vmatprep.subr.bf16.mxu0 0
        %1084 = vmatpush1.bf16.xpose.msra.mxu0 0
        %1085 = vmatprep.subr.bf16.mxu0 0
        %1086 = vmatpush1.bf16.xpose.msra.mxu0 0
        %1087 = vmatprep.subr.bf16.mxu0 0
        %1088 = vmatpush1.bf16.xpose.msra.mxu0 0
        %1089 = vmatprep.subr.bf16.mxu0 0
        %1090 = vmatpush1.bf16.xpose.msra.mxu0 0
        %1091 = vmatprep.mubr.bf16.mxu0 0
        %1092 = vmatmul.mubr.bf16.gmra.mrb[0].mxu0 %v1054
        %v1093 = vpop.f32.mrb[0].mxu0
        %v1094 = vadd.f32 0.0, %v1093
        %v1095 = vpop.f32.mrb[0].mxu0
        %v1096 = vpop.f32.mrb[0].mxu0
        %v1097 = vpop.f32.mrb[0].mxu0
        %1098 = vdwg.mxu0
        %v1099 = vsel %vm720, %v1094, -inf
        %1100 = vmax.xlane.f32.xlu0 %v1099
        %v1101 = vpop.xlane.xlu0 %1100
        %v1102 = vsub.f32 %v1094, %v1101
        %v1103 = vmul.f32 %v1102, 1.442695
        %v1104 = vpow.pop %v1103
        %v1105 = vsel %vm720, %v1104, 0.0
        %1106 = vadd.xlane.f32.xlu0 %v1105
        %v1107 = vpop.xlane.xlu0 %1106
        %v1108 = vrcp.pop %v1107
        %v1109 = vmul.f32 %v1104, %v1108
        %v1110 = vpack.c.bf16 %v1109, %v1109
        %1111 = vrot.lane.b32.xlu0 %v716, 40
        %v1112 = vpop.permute.xlu0 %1111
        %v1114 = vsel %vm720, %v1110, 0
        %v1117 = vsel %vm784, %v1112, 0
        %1119 = vmatprep.subr.bf16.mxu0 0
        %1120 = vmatpush1.bf16.msra.mxu0 %v1117
        %1121 = vmatprep.subr.bf16.mxu0 0
        %1122 = vmatpush1.bf16.msra.mxu0 0
        %1123 = vmatprep.subr.bf16.mxu0 0
        %1124 = vmatpush1.bf16.msra.mxu0 0
        %1125 = vmatprep.subr.bf16.mxu0 0
        %1126 = vmatpush1.bf16.msra.mxu0 0
        %1127 = vmatprep.subr.bf16.mxu0 0
        %1128 = vmatpush1.bf16.msra.mxu0 0
        %1129 = vmatprep.subr.bf16.mxu0 0
        %1130 = vmatpush1.bf16.msra.mxu0 0
        %1131 = vmatprep.subr.bf16.mxu0 0
        %1132 = vmatpush1.bf16.msra.mxu0 0
        %1133 = vmatprep.subr.bf16.mxu0 0
        %1134 = vmatpush1.bf16.msra.mxu0 0
        %1135 = vmatprep.subr.bf16.mxu0 0
        %1136 = vmatpush1.bf16.msra.mxu0 0
        %1137 = vmatprep.subr.bf16.mxu0 0
        %1138 = vmatpush1.bf16.msra.mxu0 0
        %1139 = vmatprep.subr.bf16.mxu0 0
        %1140 = vmatpush1.bf16.msra.mxu0 0
        %1141 = vmatprep.subr.bf16.mxu0 0
        %1142 = vmatpush1.bf16.msra.mxu0 0
        %1143 = vmatprep.subr.bf16.mxu0 0
        %1144 = vmatpush1.bf16.msra.mxu0 0
        %1145 = vmatprep.subr.bf16.mxu0 0
        %1146 = vmatpush1.bf16.msra.mxu0 0
        %1147 = vmatprep.subr.bf16.mxu0 0
        %1148 = vmatpush1.bf16.msra.mxu0 0
        %1149 = vmatprep.subr.bf16.mxu0 0
        %1150 = vmatpush1.bf16.msra.mxu0 0
        %1151 = vmatprep.mubr.bf16.mxu0 0
        %1152 = vmatmul.mubr.bf16.gmra.mrb[0].mxu0 %v1114
        %v1153 = vpop.f32.mrb[0].mxu0
        %v1154 = vadd.f32 0.0, %v1153
        %v1155 = vpop.f32.mrb[0].mxu0
        %v1156 = vpop.f32.mrb[0].mxu0
        %v1157 = vpop.f32.mrb[0].mxu0
        %1158 = vdwg.mxu0
        %1160 = vrot.lane.b32.xlu0 %v934, 8
        %v1161 = vpop.permute.xlu0 %1160
        %1164 = vrot.lane.b32.xlu0 %v1044, 16
        %v1165 = vpop.permute.xlu0 %1164
        %1168 = vrot.lane.b32.xlu0 %v1154, 24
        %v1169 = vpop.permute.xlu0 %1168
        %v1171 = vsel %vm720, %v823, %v1161
        %vm1172 = vcmask 130048
        %v1173 = vsel %vm1172, %v1171, %v1165
        %vm1174 = vcmask 195584
        %v1175 = vsel %vm1174, %v1173, %v1169
        %v1176 = vpack.c.bf16 %v1175, %v1175
        %v1177 = vld [vmem:[#allocation11] sm:$0xf]
        %v1178 = vld [vmem:[#allocation11 + $0x4] sm:$0xf]
        %v1179 = vld [vmem:[#allocation11 + $0x8] sm:$0xf]
        %v1180 = vld [vmem:[#allocation11 + $0xc] sm:$0xf]
        %v1181 = vld [vmem:[#allocation13] sm:$0x1]
        %v1183 = vlaneseq
        %v1184 = vshrl.u32 %v1183, 7
        %v1185 = vsub.s32 0, %v1184
        %v1186 = vrot.slane %v1181, %v1185
        %v1192 = vunpack.c.l.b16 %v1177
        %v1193 = vunpack.c.l.b16 %v1178
        %v1194 = vunpack.c.l.b16 %v1179
        %v1195 = vunpack.c.l.b16 %v1180
        %v1196 = vpack.c.b16 %v1193, %v1192
        %v1197 = vpack.c.b16 %v1195, %v1194
        %v1201 = vsel %vm618, %v1176, 0
        %1203 = vmatprep.subr.bf16.mxu0 0
        %1204 = vmatpush1.bf16.msra.mxu0 %v1196
        %1205 = vmatprep.subr.bf16.mxu0 0
        %1206 = vmatpush1.bf16.msra.mxu0 %v1197
        %1207 = vmatprep.subr.bf16.mxu0 0
        %1208 = vmatpush1.bf16.msra.mxu0 0
        %1209 = vmatprep.subr.bf16.mxu0 0
        %1210 = vmatpush1.bf16.msra.mxu0 0
        %1211 = vmatprep.subr.bf16.mxu0 0
        %1212 = vmatpush1.bf16.msra.mxu0 0
        %1213 = vmatprep.subr.bf16.mxu0 0
        %1214 = vmatpush1.bf16.msra.mxu0 0
        %1215 = vmatprep.subr.bf16.mxu0 0
        %1216 = vmatpush1.bf16.msra.mxu0 0
        %1217 = vmatprep.subr.bf16.mxu0 0
        %1218 = vmatpush1.bf16.msra.mxu0 0
        %1219 = vmatprep.subr.bf16.mxu0 0
        %1220 = vmatpush1.bf16.msra.mxu0 0
        %1221 = vmatprep.subr.bf16.mxu0 0
        %1222 = vmatpush1.bf16.msra.mxu0 0
        %1223 = vmatprep.subr.bf16.mxu0 0
        %1224 = vmatpush1.bf16.msra.mxu0 0
        %1225 = vmatprep.subr.bf16.mxu0 0
        %1226 = vmatpush1.bf16.msra.mxu0 0
        %1227 = vmatprep.subr.bf16.mxu0 0
        %1228 = vmatpush1.bf16.msra.mxu0 0
        %1229 = vmatprep.subr.bf16.mxu0 0
        %1230 = vmatpush1.bf16.msra.mxu0 0
        %1231 = vmatprep.subr.bf16.mxu0 0
        %1232 = vmatpush1.bf16.msra.mxu0 0
        %1233 = vmatprep.subr.bf16.mxu0 0
        %1234 = vmatpush1.bf16.msra.mxu0 0
        %1235 = vmatprep.mubr.bf16.mxu0 0
        %1236 = vmatmul.mubr.bf16.gmra.mrb[0].mxu0 %v1201
        %v1237 = vpop.f32.mrb[0].mxu0
        %v1238 = vadd.f32 %v1186, %v1237
        %v1239 = vpop.f32.mrb[0].mxu0
        %v1240 = vpop.f32.mrb[0].mxu0
        %v1241 = vpop.f32.mrb[0].mxu0
        %1242 = vdwg.mxu0
        %v1243 = vadd.f32 %v615, %v1238
        %v1244 = vld [vmem:[#allocation14] sm:$0x1]
        %v1245 = vld [vmem:[#allocation16] sm:$0x1]
        %v1246 = vsel %vm618, %v1243, 0.0
        %1247 = vadd.xlane.f32.xlu0 %v1246
        %v1248 = vpop.xlane.xlu0 %1247
        %v1249 = vmul.f32 %v1248, %v622
        %v1250 = vsub.f32 %v1243, %v1249
        %v1251 = vmul.f32 %v1250, %v1250
        %v1252 = vsel %vm618, %v1251, 0.0
        %1253 = vadd.xlane.f32.xlu0 %v1252
        %v1254 = vpop.xlane.xlu0 %1253
        %v1255 = vmul.f32 %v1254, %v622
        %v1256 = vadd.f32 %v1255, 1e-05
        %v1257 = vrsqrt.pop %v1256
        %v1258 = vmul.f32 %v1250, %v1257
        %v1260 = vlaneseq
        %v1261 = vshrl.u32 %v1260, 7
        %v1262 = vsub.s32 0, %v1261
        %v1263 = vrot.slane %v1244, %v1262
        %v1265 = vmul.f32 %v1258, %v1263
        %v1267 = vlaneseq
        %v1268 = vshrl.u32 %v1267, 7
        %v1269 = vsub.s32 0, %v1268
        %v1270 = vrot.slane %v1245, %v1269
        %v1272 = vadd.f32 %v1265, %v1270
        %v1273 = vpack.c.bf16 %v1272, %v1272
        %v1274 = vld [vmem:[#allocation17] sm:$0xf]
        %v1275 = vld [vmem:[#allocation17 + $0x4] sm:$0xf]
        %v1276 = vld [vmem:[#allocation17 + $0x8] sm:$0xf]
        %v1277 = vld [vmem:[#allocation17 + $0xc] sm:$0xf]
        %v1278 = vld [vmem:[#allocation19] sm:$0x1]
        %v1280 = vlaneseq
        %v1281 = vshrl.u32 %v1280, 7
        %v1282 = vsub.s32 0, %v1281
        %v1283 = vrot.slane %v1278, %v1282
        %v1289 = vunpack.c.l.b16 %v1274
        %v1290 = vunpack.c.l.b16 %v1275
        %v1291 = vunpack.c.l.b16 %v1276
        %v1292 = vunpack.c.l.b16 %v1277
        %v1293 = vpack.c.b16 %v1290, %v1289
        %v1294 = vpack.c.b16 %v1292, %v1291
        %v1298 = vsel %vm618, %v1273, 0
        %1300 = vmatprep.subr.bf16.mxu0 0
        %1301 = vmatpush1.bf16.msra.mxu0 %v1293
        %1302 = vmatprep.subr.bf16.mxu0 0
        %1303 = vmatpush1.bf16.msra.mxu0 %v1294
        %1304 = vmatprep.subr.bf16.mxu0 0
        %1305 = vmatpush1.bf16.msra.mxu0 0
        %1306 = vmatprep.subr.bf16.mxu0 0
        %1307 = vmatpush1.bf16.msra.mxu0 0
        %1308 = vmatprep.subr.bf16.mxu0 0
        %1309 = vmatpush1.bf16.msra.mxu0 0
        %1310 = vmatprep.subr.bf16.mxu0 0
        %1311 = vmatpush1.bf16.msra.mxu0 0
        %1312 = vmatprep.subr.bf16.mxu0 0
        %1313 = vmatpush1.bf16.msra.mxu0 0
        %1314 = vmatprep.subr.bf16.mxu0 0
        %1315 = vmatpush1.bf16.msra.mxu0 0
        %1316 = vmatprep.subr.bf16.mxu0 0
        %1317 = vmatpush1.bf16.msra.mxu0 0
        %1318 = vmatprep.subr.bf16.mxu0 0
        %1319 = vmatpush1.bf16.msra.mxu0 0
        %1320 = vmatprep.subr.bf16.mxu0 0
        %1321 = vmatpush1.bf16.msra.mxu0 0
        %1322 = vmatprep.subr.bf16.mxu0 0
        %1323 = vmatpush1.bf16.msra.mxu0 0
        %1324 = vmatprep.subr.bf16.mxu0 0
        %1325 = vmatpush1.bf16.msra.mxu0 0
        %1326 = vmatprep.subr.bf16.mxu0 0
        %1327 = vmatpush1.bf16.msra.mxu0 0
        %1328 = vmatprep.subr.bf16.mxu0 0
        %1329 = vmatpush1.bf16.msra.mxu0 0
        %1330 = vmatprep.subr.bf16.mxu0 0
        %1331 = vmatpush1.bf16.msra.mxu0 0
        %1332 = vmatprep.mubr.bf16.mxu0 0
        %1333 = vmatmul.mubr.bf16.gmra.mrb[0].mxu0 %v1298
        %v1334 = vpop.f32.mrb[0].mxu0
        %v1335 = vadd.f32 %v1283, %v1334
        %v1336 = vpop.f32.mrb[0].mxu0
        %v1337 = vpop.f32.mrb[0].mxu0
        %v1338 = vpop.f32.mrb[0].mxu0
        %1339 = vdwg.mxu0
        %v1340 = vmul.f32 %v1335, 1.702
        %v1341 = vxor.u32 %v1340, 2147483648
        %v1342 = vmul.f32 %v1341, 1.442695
        %v1343 = vpow.pop %v1342
        %v1344 = vadd.f32 %v1343, 1.0
        %v1345 = vrcp.pop %v1344
        %v1346 = vmul.f32 1.0, %v1345
        %v1347 = vmul.f32 %v1335, %v1346
        %v1348 = vpack.c.bf16 %v1347, %v1347
        %v1349 = vld [vmem:[#allocation20] sm:$0xf]
        %v1350 = vld [vmem:[#allocation20 + $0x4] sm:$0xf]
        %v1351 = vld [vmem:[#allocation20 + $0x8] sm:$0xf]
        %v1352 = vld [vmem:[#allocation20 + $0xc] sm:$0xf]
        %v1353 = vld [vmem:[#allocation20 + $0x10] sm:$0xf]
        %v1354 = vld [vmem:[#allocation20 + $0x14] sm:$0xf]
        %v1355 = vld [vmem:[#allocation20 + $0x18] sm:$0xf]
        %v1356 = vld [vmem:[#allocation20 + $0x1c] sm:$0xf]
        %v1357 = vld [vmem:[#allocation20 + $0x20] sm:$0xf]
        %v1358 = vld [vmem:[#allocation20 + $0x24] sm:$0xf]
        %v1359 = vld [vmem:[#allocation20 + $0x28] sm:$0xf]
        %v1360 = vld [vmem:[#allocation20 + $0x2c] sm:$0xf]
        %v1361 = vld [vmem:[#allocation20 + $0x30] sm:$0xf]
        %v1362 = vld [vmem:[#allocation20 + $0x34] sm:$0xf]
        %v1363 = vld [vmem:[#allocation20 + $0x38] sm:$0xf]
        %v1364 = vld [vmem:[#allocation20 + $0x3c] sm:$0xf]
        %v1365 = vld [vmem:[#allocation22] sm:$0x1]
        %v1367 = vlaneseq
        %v1368 = vshrl.u32 %v1367, 7
        %v1369 = vsub.s32 0, %v1368
        %v1370 = vrot.slane %v1365, %v1369
        %v1388 = vunpack.c.l.b16 %v1349
        %v1389 = vunpack.c.l.b16 %v1350
        %v1390 = vunpack.c.l.b16 %v1351
        %v1391 = vunpack.c.l.b16 %v1352
        %v1392 = vunpack.c.l.b16 %v1353
        %v1393 = vunpack.c.l.b16 %v1354
        %v1394 = vunpack.c.l.b16 %v1355
        %v1395 = vunpack.c.l.b16 %v1356
        %v1396 = vunpack.c.l.b16 %v1357
        %v1397 = vunpack.c.l.b16 %v1358
        %v1398 = vunpack.c.l.b16 %v1359
        %v1399 = vunpack.c.l.b16 %v1360
        %v1400 = vunpack.c.l.b16 %v1361
        %v1401 = vunpack.c.l.b16 %v1362
        %v1402 = vunpack.c.l.b16 %v1363
        %v1403 = vunpack.c.l.b16 %v1364
        %v1404 = vpack.c.b16 %v1389, %v1388
        %v1405 = vpack.c.b16 %v1391, %v1390
        %v1406 = vpack.c.b16 %v1393, %v1392
        %v1407 = vpack.c.b16 %v1395, %v1394
        %v1408 = vpack.c.b16 %v1397, %v1396
        %v1409 = vpack.c.b16 %v1399, %v1398
        %v1410 = vpack.c.b16 %v1401, %v1400
        %v1411 = vpack.c.b16 %v1403, %v1402
        %1420 = vmatprep.subr.bf16.mxu0 0
        %1421 = vmatpush1.bf16.msra.mxu0 %v1404
        %1422 = vmatprep.subr.bf16.mxu0 0
        %1423 = vmatpush1.bf16.msra.mxu0 %v1405
        %1424 = vmatprep.subr.bf16.mxu0 0
        %1425 = vmatpush1.bf16.msra.mxu0 %v1406
        %1426 = vmatprep.subr.bf16.mxu0 0
        %1427 = vmatpush1.bf16.msra.mxu0 %v1407
        %1428 = vmatprep.subr.bf16.mxu0 0
        %1429 = vmatpush1.bf16.msra.mxu0 %v1408
        %1430 = vmatprep.subr.bf16.mxu0 0
        %1431 = vmatpush1.bf16.msra.mxu0 %v1409
        %1432 = vmatprep.subr.bf16.mxu0 0
        %1433 = vmatpush1.bf16.msra.mxu0 %v1410
        %1434 = vmatprep.subr.bf16.mxu0 0
        %1435 = vmatpush1.bf16.msra.mxu0 %v1411
        %1436 = vmatprep.subr.bf16.mxu0 0
        %1437 = vmatpush1.bf16.msra.mxu0 0
        %1438 = vmatprep.subr.bf16.mxu0 0
        %1439 = vmatpush1.bf16.msra.mxu0 0
        %1440 = vmatprep.subr.bf16.mxu0 0
        %1441 = vmatpush1.bf16.msra.mxu0 0
        %1442 = vmatprep.subr.bf16.mxu0 0
        %1443 = vmatpush1.bf16.msra.mxu0 0
        %1444 = vmatprep.subr.bf16.mxu0 0
        %1445 = vmatpush1.bf16.msra.mxu0 0
        %1446 = vmatprep.subr.bf16.mxu0 0
        %1447 = vmatpush1.bf16.msra.mxu0 0
        %1448 = vmatprep.subr.bf16.mxu0 0
        %1449 = vmatpush1.bf16.msra.mxu0 0
        %1450 = vmatprep.subr.bf16.mxu0 0
        %1451 = vmatpush1.bf16.msra.mxu0 0
        %1452 = vmatprep.mubr.bf16.mxu0 0
        %1453 = vmatmul.mubr.bf16.gmra.mrb[0].mxu0 %v1348
        %v1454 = vpop.f32.mrb[0].mxu0
        %v1455 = vadd.f32 %v1370, %v1454
        %v1456 = vpop.f32.mrb[0].mxu0
        %v1457 = vpop.f32.mrb[0].mxu0
        %v1458 = vpop.f32.mrb[0].mxu0
        %1459 = vdwg.mxu0
        %v1460 = vadd.f32 %v1243, %v1455
        %1461 = vst.msk [vmem:[%s613] sm:$0xff] %vm618, %v1460
        %s1462 = sand.u32 %s322, 1
        %s1463 = scalar_lea.sflag [#allocation4], %s1462
        %s1464 = sand.u32 %s322, 1
        %s1465 = smul.addr %s1464, 8
        %s1466 = scalar_lea.vmem [#allocation23], %s1465
        // Predicated region
        $region125: #{tpu_custom_call.1} parent=71 // pred_check
          %p1467 = pneg %p332
        $region126: #{tpu_custom_call.1} parent=71 // pred_check_branch
          %1469 = sbr.rel (%p1467) target = $region128
        $region127: #{tpu_custom_call.1} parent=71 // pred_region
          %s1471 = ssub.s32 128, 128
          %1472 = vsyncadd %s1463, %s1471
          %s1473 = smul.addr %s36, 128
          %s1474 = scalar_lea.hbm %s13, %s1473
          %s1476 = sshll.u32 %s1466, 4
          %s1477 = int_to_ptr.vmem [resolvable:$true] %s1476
          %1479 = dma.vmem_to_hbm [thread:$0]  %s1477, 128, %s1474, %s1463
        $region128: #{tpu_custom_call.1} parent=71 // pred_fallthru
          _
      $region72: #{tpu_custom_call.1} parent=5 // pred_fallthru
        _
      %p1480 = scmp.le.s32.totalorder 2, %s31
      // Predicated region
      $region129: #{tpu_custom_call.1} parent=5 // pred_check
        %p1481 = pneg %p1480
      $region130: #{tpu_custom_call.1} parent=5 // pred_check_branch
        %1483 = sbr.rel (%p1481) target = $region132
      $region131: #{tpu_custom_call.1} parent=5 // pred_region
        %s1484 = ssub.s32 %s31, 2
        // Predicated region
        $region133: #{tpu_custom_call.1} parent=131 // pred_check
          %p1485 = pneg %p338
        $region134: #{tpu_custom_call.1} parent=131 // pred_check_branch
          %1487 = sbr.rel (%p1485) target = $region136
        $region135: #{tpu_custom_call.1} parent=131 // pred_region
          %s1488 = sand.u32 %s323, 1
          %s1489 = scalar_lea.sflag [#allocation4], %s1488
          %s1490 = sand.u32 %s323, 1
          %s1491 = smul.addr %s1490, 8
          %s1492 = scalar_lea.vmem [#allocation23], %s1491
          %1493 = dma.done %s1489, 128
        $region136: #{tpu_custom_call.1} parent=131 // pred_fallthru
          _
      $region132: #{tpu_custom_call.1} parent=5 // pred_fallthru
        _
    $region6: #{tpu_custom_call.1} parent=1 // loop_footer
      %s35 = sadd.s32 1, %s31
    $region7: #{tpu_custom_call.1} parent=1 // loop_footer_branch
      %30 = sbr.rel target = $region3
    $region8: #{tpu_custom_call.1} parent=1 // loop_exit
      _
    %1494 = vsyncpa [#allocation3], 1
    %s1495 = scalar_lea.sflag [#allocation3], 1
    %1496 = vsyncpa %s1495, 1
    %1497 = vsyncpa [#allocation6], 1
    %1498 = vsyncpa [#allocation9], 1
    %1499 = vsyncpa [#allocation12], 1
    %1500 = vsyncpa [#allocation15], 1
    %1501 = vsyncpa [#allocation18], 1
    %1502 = vsyncpa [#allocation21], 1
    %1503 = vsyncpa [#allocation4], 1
    %s1504 = scalar_lea.sflag [#allocation4], 1
    %1505 = vsyncpa %s1504, 1

</llo_original>
